<compile_context>
chip_gen: v7x
topology: tpu7x:2x2x1
jax: 0.10.0
libtpu: 0.0.40
codegen_flags: <defaults>
</compile_context>

<pallas_src>
import functools

import jax
import jax.numpy as jnp
from jax import lax
from jax.experimental import pallas as pl
from jax.experimental.pallas import tpu as pltpu

EPS = 1e-5  # nn.LayerNorm default eps


# ----------------------------- in-kernel helpers -----------------------------

def _layernorm(x, g, b):
    # per-row LayerNorm over the channel (last) axis, f32 math.
    mu = jnp.mean(x, axis=-1, keepdims=True)
    xc = x - mu
    var = jnp.mean(xc * xc, axis=-1, keepdims=True)
    return xc * lax.rsqrt(var + EPS) * g + b


def _erf(z):
    # Abramowitz & Stegun 7.1.26 polynomial erf, |err| <= 1.5e-7.
    # (Avoids relying on an erf lowering inside Mosaic; uses only exp + VPU ops.)
    a1, a2, a3, a4, a5 = 0.254829592, -0.284496736, 1.421413741, -1.453152027, 1.061405429
    pcoef = 0.3275911
    sgn = jnp.where(z >= 0.0, 1.0, -1.0)
    za = jnp.abs(z)
    t = 1.0 / (1.0 + pcoef * za)
    poly = t * (a1 + t * (a2 + t * (a3 + t * (a4 + t * a5))))
    return sgn * (1.0 - poly * jnp.exp(-za * za))


def _gelu_exact(x):
    # exact (erf-based) GELU, matching nn.GELU() default.
    return 0.5 * x * (1.0 + _erf(x * 0.7071067811865475))


# --------------------------------- kernels -----------------------------------

def ln_matmul_kernel(x_ref, g_ref, b_ref, w_ref, wb_ref, o_ref):
    """LayerNorm (f32) -> bf16 matmul (f32 acc) -> + bias."""
    xn = _layernorm(x_ref[...], g_ref[...], b_ref[...])
    acc = jnp.dot(xn.astype(jnp.bfloat16), w_ref[...],
                  preferred_element_type=jnp.float32)
    o_ref[...] = (acc + wb_ref[...]).astype(o_ref.dtype)


def matmul_bias_res_kernel(a_ref, w_ref, b_ref, r_ref, o_ref):
    """out = a @ w + bias + residual (f32 accumulation, residual aliased to out)."""
    acc = jnp.dot(a_ref[...], w_ref[...], preferred_element_type=jnp.float32)
    o_ref[...] = (acc + b_ref[...] + r_ref[...]).astype(o_ref.dtype)


def attention_kernel(q_ref, k_ref, v_ref, o_ref, *, scale):
    """One (batch, head): softmax(q k^T * scale) @ v with f32 softmax math."""
    q = q_ref[0].astype(jnp.bfloat16)          # (N, hd)
    k = k_ref[0].astype(jnp.bfloat16)
    v = v_ref[0].astype(jnp.bfloat16)
    s = jnp.dot(q, k.T, preferred_element_type=jnp.float32) * scale   # (N, N)
    m = jnp.max(s, axis=-1, keepdims=True)
    p = jnp.exp(s - m)
    denom = jnp.sum(p, axis=-1, keepdims=True)
    p = p * pl.reciprocal(denom, approx=True)
    ctx = jnp.dot(p.astype(jnp.bfloat16), v, preferred_element_type=jnp.float32)
    o_ref[0] = ctx.astype(o_ref.dtype)
    # TODO(synk): for long sequences switch to a flash-style KV-tiled online
    # softmax so the (N, N) score matrix never materializes in VMEM.


def dwconv_gelu_kernel(hp_ref, w_ref, b_ref, o_ref, *, H, W):
    """Depthwise 3x3 conv (bias=True) + exact GELU on one batch image.

    Input is spatially pre-padded by 1 pixel; the conv is 9 shifted
    elementwise taps accumulated in f32 (no im2col expansion)."""
    xp = hp_ref[0].astype(jnp.float32)                       # (H+2, W+2, Dh)
    acc = jnp.zeros((H, W, xp.shape[-1]), jnp.float32) + b_ref[...]
    for kh in range(3):
        for kw in range(3):
            acc = acc + w_ref[kh, kw] * xp[kh:kh + H, kw:kw + W, :]
    o_ref[0] = _gelu_exact(acc).astype(o_ref.dtype)


# --------------------------------- wrapper -----------------------------------

def _row_tile(m, target=512):
    """Largest multiple-of-8 row tile <= target that divides M with >= 2 steps."""
    for t in (target, 256, 128, 64, 32, 16, 8):
        if m % t == 0 and m // t >= 2:
            return t
    return m


def _const_spec(shape):
    n = len(shape)
    return pl.BlockSpec(shape, lambda i: (0,) * n)


def block_forward(x, p, *, H, W, num_heads):
    """Forward pass of the PVT Block. Returns (x_out, q, k) like the module."""
    B, N, C = x.shape
    hd = C // num_heads
    scale = hd ** -0.5
    Dh = p["wfc1"].shape[1]
    M = B * N

    tm = _row_tile(M)
    grid_m = M // tm
    parallel = pltpu.CompilerParams(dimension_semantics=("parallel",))

    def row_spec(cols):
        return pl.BlockSpec((tm, cols), lambda i: (i, 0))

    xf = x.reshape(M, C).astype(jnp.float32)

    # bf16 weights for the MXU (cast once, outside the kernels).
    wqkv = jnp.concatenate([p["wq"], p["wkv"]], axis=1).astype(jnp.bfloat16)  # (C, 3C)
    bqkv = jnp.zeros((1, 3 * C), jnp.float32)                                 # qkv_bias=False
    wproj = p["wproj"].astype(jnp.bfloat16)
    wfc1 = p["wfc1"].astype(jnp.bfloat16)
    wfc2 = p["wfc2"].astype(jnp.bfloat16)
    bdw2d = p["bdw"].reshape(1, Dh)

    # ---- stage 1: LayerNorm(norm1) + fused q/kv projection -------------------
    qkv = pl.pallas_call(
        ln_matmul_kernel,
        out_shape=jax.ShapeDtypeStruct((M, 3 * C), jnp.float32),
        grid=(grid_m,),
        in_specs=[row_spec(C), _const_spec((1, C)), _const_spec((1, C)),
                  _const_spec((C, 3 * C)), _const_spec((1, 3 * C))],
        out_specs=pl.BlockSpec((tm, 3 * C), lambda i: (i, 0)),
        compiler_params=parallel,
        cost_estimate=pl.CostEstimate(
            flops=2 * M * C * 3 * C, transcendentals=M,
            bytes_accessed=4 * M * C + 2 * C * 3 * C + 4 * M * 3 * C),
    )(xf, p["g1"], p["b1"], wqkv, bqkv)

    q = qkv[:, :C].reshape(B, N, num_heads, hd).transpose(0, 2, 1, 3)      # (B, h, N, hd)
    k = qkv[:, C:2 * C].reshape(B, N, num_heads, hd).transpose(0, 2, 1, 3)
    v = qkv[:, 2 * C:].reshape(B, N, num_heads, hd).transpose(0, 2, 1, 3)

    # ---- stage 2: attention per (batch, head) --------------------------------
    BH = B * num_heads
    ctx = pl.pallas_call(
        functools.partial(attention_kernel, scale=scale),
        out_shape=jax.ShapeDtypeStruct((BH, N, hd), jnp.bfloat16),
        grid=(BH,),
        in_specs=[pl.BlockSpec((1, N, hd), lambda i: (i, 0, 0))] * 3,
        out_specs=pl.BlockSpec((1, N, hd), lambda i: (i, 0, 0)),
        compiler_params=parallel,
    )(q.reshape(BH, N, hd), k.reshape(BH, N, hd), v.reshape(BH, N, hd))
    ctx_f = ctx.reshape(B, num_heads, N, hd).transpose(0, 2, 1, 3).reshape(M, C)

    # ---- stage 3: output projection + residual (aliased into xf) -------------
    x1 = pl.pallas_call(
        matmul_bias_res_kernel,
        out_shape=jax.ShapeDtypeStruct((M, C), jnp.float32),
        grid=(grid_m,),
        in_specs=[row_spec(C), _const_spec((C, C)), _const_spec((1, C)), row_spec(C)],
        out_specs=pl.BlockSpec((tm, C), lambda i: (i, 0)),
        input_output_aliases={3: 0},
        compiler_params=parallel,
        cost_estimate=pl.CostEstimate(
            flops=2 * M * C * C, transcendentals=0,
            bytes_accessed=2 * M * C + 2 * C * C + 8 * M * C),
    )(ctx_f, wproj, p["bproj"], xf)

    # ---- stage 4: LayerNorm(norm2) + fc1 (bias), output stored bf16 ----------
    h = pl.pallas_call(
        ln_matmul_kernel,
        out_shape=jax.ShapeDtypeStruct((M, Dh), jnp.bfloat16),
        grid=(grid_m,),
        in_specs=[row_spec(C), _const_spec((1, C)), _const_spec((1, C)),
                  _const_spec((C, Dh)), _const_spec((1, Dh))],
        out_specs=pl.BlockSpec((tm, Dh), lambda i: (i, 0)),
        compiler_params=parallel,
        cost_estimate=pl.CostEstimate(
            flops=2 * M * C * Dh, transcendentals=M,
            bytes_accessed=4 * M * C + 2 * C * Dh + 2 * M * Dh),
    )(x1, p["g2"], p["b2"], wfc1, p["bfc1"])

    # ---- stage 5: depthwise 3x3 conv + GELU -----------------------------------
    # 1-pixel spatial zero-pad (cheap halo; no 9x im2col expansion).
    # TODO(synk): fold the halo into the BlockSpec index_map to skip this pad.
    hpad = jnp.pad(h.reshape(B, H, W, Dh), ((0, 0), (1, 1), (1, 1), (0, 0)))
    act = pl.pallas_call(
        functools.partial(dwconv_gelu_kernel, H=H, W=W),
        out_shape=jax.ShapeDtypeStruct((B, H, W, Dh), jnp.bfloat16),
        grid=(B,),
        in_specs=[pl.BlockSpec((1, H + 2, W + 2, Dh), lambda b: (b, 0, 0, 0)),
                  pl.BlockSpec((3, 3, Dh), lambda b: (0, 0, 0)),
                  pl.BlockSpec((1, Dh), lambda b: (0, 0))],
        out_specs=pl.BlockSpec((1, H, W, Dh), lambda b: (b, 0, 0, 0)),
        compiler_params=parallel,
    )(hpad, p["wdw"], bdw2d)
    act_f = act.reshape(M, Dh)

    # ---- stage 6: fc2 (bias) + residual (aliased into x1) --------------------
    out = pl.pallas_call(
        matmul_bias_res_kernel,
        out_shape=jax.ShapeDtypeStruct((M, C), jnp.float32),
        grid=(grid_m,),
        in_specs=[row_spec(Dh), _const_spec((Dh, C)), _const_spec((1, C)), row_spec(C)],
        out_specs=pl.BlockSpec((tm, C), lambda i: (i, 0)),
        input_output_aliases={3: 0},
        compiler_params=parallel,
        cost_estimate=pl.CostEstimate(
            flops=2 * M * Dh * C, transcendentals=0,
            bytes_accessed=2 * M * Dh + 2 * Dh * C + 8 * M * C),
    )(act_f, wfc2, p["bfc2"], x1)

    return out.reshape(B, N, C), q, k


# ----------------------- pure-JAX reference (correctness) --------------------

def block_reference(x, p, H, W, num_heads):
    B, N, C = x.shape
    hd = C // num_heads
    scale = hd ** -0.5

    def ln(t, g, b):
        mu = jnp.mean(t, -1, keepdims=True)
        var = jnp.mean((t - mu) ** 2, -1, keepdims=True)
        return (t - mu) * lax.rsqrt(var + EPS) * g + b

    xn = ln(x, p["g1"], p["b1"])
    q = (xn @ p["wq"]).reshape(B, N, num_heads, hd).transpose(0, 2, 1, 3)
    kv = (xn @ p["wkv"]).reshape(B, N, 2, num_heads, hd).transpose(2, 0, 3, 1, 4)
    k, v = kv[0], kv[1]
    attn = jax.nn.softmax((q @ jnp.swapaxes(k, -2, -1)) * scale, axis=-1)
    ctx = (attn @ v).transpose(0, 2, 1, 3).reshape(B, N, C)
    x = x + ctx @ p["wproj"] + p["bproj"]

    xn2 = ln(x, p["g2"], p["b2"])
    h = (xn2 @ p["wfc1"] + p["bfc1"]).reshape(B, H, W, -1)
    hp = jnp.pad(h, ((0, 0), (1, 1), (1, 1), (0, 0)))
    dw = sum(p["wdw"][kh, kw] * hp[:, kh:kh + H, kw:kw + W, :]
             for kh in range(3) for kw in range(3)) + p["bdw"]
    a = jax.nn.gelu(dw, approximate=False)
    x = x + a.reshape(B, N, -1) @ p["wfc2"] + p["bfc2"]
    return x, q, k


# ----------------------- deterministic parameter init ------------------------

def make_params(key, dim, mlp_ratio=4.0):
    Dh = int(dim * mlp_ratio)
    ks = jax.random.split(key, 14)

    def rnd(k, shape, s=0.1):
        return (s * jax.random.normal(k, shape)).astype(jnp.float32)

    return {
        "g1": (1.0 + rnd(ks[0], (dim,))).reshape(1, dim),
        "b1": rnd(ks[1], (dim,)).reshape(1, dim),
        "wq": rnd(ks[2], (dim, dim)),
        "wkv": rnd(ks[3], (dim, 2 * dim)),          # columns [0:dim]->k, [dim:2dim]->v
        "wproj": rnd(ks[4], (dim, dim)),
        "bproj": rnd(ks[5], (dim,)).reshape(1, dim),
        "g2": (1.0 + rnd(ks[6], (dim,))).reshape(1, dim),
        "b2": rnd(ks[7], (dim,)).reshape(1, dim),
        "wfc1": rnd(ks[8], (dim, Dh)),
        "bfc1": rnd(ks[9], (Dh,)).reshape(1, Dh),
        "wdw": rnd(ks[10], (3, 3, Dh)),             # depthwise 3x3 taps per channel
        "bdw": rnd(ks[11], (Dh,)),
        "wfc2": rnd(ks[12], (Dh, dim)),
        "bfc2": rnd(ks[13], (dim,)).reshape(1, dim),
    }


if __name__ == "__main__":
    key = jax.random.PRNGKey(0)
    k_x, k_p = jax.random.split(key)

    B, H, W = 2, 8, 8
    dim, num_heads, mlp_ratio = 32, 2, 4.0
    N = H * W

    x = jax.random.normal(k_x, (B, N, dim), dtype=jnp.float32)
    params = make_params(k_p, dim, mlp_ratio)

    fwd = jax.jit(functools.partial(block_forward, H=H, W=W, num_heads=num_heads))
    out, q, k = fwd(x, params)
    out, q, k = jax.block_until_ready((out, q, k))

    ref_out, ref_q, ref_k = block_reference(x, params, H, W, num_heads)

    for name, a, b in (("x", out, ref_out), ("q", q, ref_q), ("k", k, ref_k)):
        if not jnp.allclose(a, b, rtol=3e-2, atol=3e-2):
            max_err = jnp.max(jnp.abs(a - b))
            raise AssertionError(f"{name} mismatch, max abs err = {max_err}")

    assert out.shape == (B, N, dim)
    assert q.shape == (B, num_heads, N, dim // num_heads)
    print("KERNEL_OK")
</pallas_src>

<mosaic_0001>
module attributes {stable_mosaic.version = 11 : i64} {
  func.func @ln_matmul_kernel(%arg0: i32, %arg1: memref<64x32xf32, #tpu.memory_space<vmem>>, %arg2: memref<1x32xf32, #tpu.memory_space<vmem>>, %arg3: memref<1x32xf32, #tpu.memory_space<vmem>>, %arg4: memref<32x96xbf16, #tpu.memory_space<vmem>>, %arg5: memref<1x96xf32, #tpu.memory_space<vmem>>, %arg6: memref<64x96xf32, #tpu.memory_space<vmem>>) attributes {dimension_semantics = [#tpu.dimension_semantics<parallel>], iteration_bounds = array<i64: 2>, scalar_prefetch = 0 : i64, scratch_operands = 0 : i64, tpu.core_type = #tpu.core_type<tc>, window_params = [{transform_indices = @transform_0, window_bounds = array<i64: 64, 32>}, {pipeline_mode = #tpu.pipeline_mode<synchronous>, transform_indices = @transform_1, window_bounds = array<i64: 1, 32>}, {pipeline_mode = #tpu.pipeline_mode<synchronous>, transform_indices = @transform_2, window_bounds = array<i64: 1, 32>}, {pipeline_mode = #tpu.pipeline_mode<synchronous>, transform_indices = @transform_3, window_bounds = array<i64: 32, 96>}, {pipeline_mode = #tpu.pipeline_mode<synchronous>, transform_indices = @transform_4, window_bounds = array<i64: 1, 96>}, {transform_indices = @transform_5, window_bounds = array<i64: 64, 96>}]} {
    %c0 = arith.constant 0 : index
    %c0_0 = arith.constant 0 : index
    %0 = vector.load %arg1[%c0, %c0_0] : memref<64x32xf32, #tpu.memory_space<vmem>>, vector<64x32xf32>
    %c0_1 = arith.constant 0 : index
    %c0_2 = arith.constant 0 : index
    %1 = vector.load %arg2[%c0_1, %c0_2] : memref<1x32xf32, #tpu.memory_space<vmem>>, vector<1x32xf32>
    %c0_3 = arith.constant 0 : index
    %c0_4 = arith.constant 0 : index
    %2 = vector.load %arg3[%c0_3, %c0_4] : memref<1x32xf32, #tpu.memory_space<vmem>>, vector<1x32xf32>
    %cst = arith.constant dense<0.000000e+00> : vector<64xf32>
    %3 = vector.multi_reduction <add>, %0, %cst [1] : vector<64x32xf32> to vector<64xf32>
    %4 = vector.shape_cast %3 : vector<64xf32> to vector<64x1xf32>
    %cst_5 = arith.constant 3.200000e+01 : f32
    %5 = vector.broadcast %cst_5 : f32 to vector<64x1xf32>
    %6 = arith.divf %4, %5 : vector<64x1xf32>
    %7 = vector.broadcast %6 : vector<64x1xf32> to vector<64x32xf32>
    %8 = arith.subf %0, %7 : vector<64x32xf32>
    %9 = arith.mulf %8, %8 : vector<64x32xf32>
    %cst_6 = arith.constant dense<0.000000e+00> : vector<64xf32>
    %10 = vector.multi_reduction <add>, %9, %cst_6 [1] : vector<64x32xf32> to vector<64xf32>
    %11 = vector.shape_cast %10 : vector<64xf32> to vector<64x1xf32>
    %cst_7 = arith.constant 3.200000e+01 : f32
    %12 = vector.broadcast %cst_7 : f32 to vector<64x1xf32>
    %13 = arith.divf %11, %12 : vector<64x1xf32>
    %cst_8 = arith.constant 9.99999974E-6 : f32
    %14 = vector.broadcast %cst_8 : f32 to vector<64x1xf32>
    %15 = arith.addf %13, %14 : vector<64x1xf32>
    %16 = math.rsqrt %15 : vector<64x1xf32>
    %17 = vector.broadcast %16 : vector<64x1xf32> to vector<64x32xf32>
    %18 = arith.mulf %8, %17 : vector<64x32xf32>
    %19 = vector.broadcast %1 : vector<1x32xf32> to vector<64x32xf32>
    %20 = arith.mulf %18, %19 : vector<64x32xf32>
    %21 = vector.broadcast %2 : vector<1x32xf32> to vector<64x32xf32>
    %22 = arith.addf %20, %21 : vector<64x32xf32>
    %23 = arith.truncf %22 : vector<64x32xf32> to vector<64x32xbf16>
    %c0_9 = arith.constant 0 : index
    %c0_10 = arith.constant 0 : index
    %24 = vector.load %arg4[%c0_9, %c0_10] : memref<32x96xbf16, #tpu.memory_space<vmem>>, vector<32x96xbf16>
    %cst_11 = arith.constant dense<0.000000e+00> : vector<64x96xf32>
    %25 = tpu.matmul %23, %24, %cst_11 {dimension_numbers = #tpu.dot_dimension_numbers<[1], [0], [0], [1], [0, 0, 1, 1], [], []>} : vector<64x32xbf16>, vector<32x96xbf16>, vector<64x96xf32> -> vector<64x96xf32>
    %c0_12 = arith.constant 0 : index
    %c0_13 = arith.constant 0 : index
    %26 = vector.load %arg5[%c0_12, %c0_13] : memref<1x96xf32, #tpu.memory_space<vmem>>, vector<1x96xf32>
    %27 = vector.broadcast %26 : vector<1x96xf32> to vector<64x96xf32>
    %28 = arith.addf %25, %27 : vector<64x96xf32>
    %c0_14 = arith.constant 0 : index
    %c0_15 = arith.constant 0 : index
    %29 = vector.load %arg6[%c0_14, %c0_15] : memref<64x96xf32, #tpu.memory_space<vmem>>, vector<64x96xf32>
    tpu.vector_store %arg6[%c0_14, %c0_15], %28 {strides = array<i32>} : memref<64x96xf32, #tpu.memory_space<vmem>>, vector<64x96xf32>,
    return
  }
  func.func @transform_0(%arg0: i32) -> (i32, i32) {
    %c0_i32 = arith.constant 0 : i32
    %c0_i32_0 = arith.constant 0 : i32
    return %arg0, %c0_i32 : i32, i32
  }
  func.func @transform_1(%arg0: i32) -> (i32, i32) {
    %c0_i32 = arith.constant 0 : i32
    %c0_i32_0 = arith.constant 0 : i32
    %c0_i32_1 = arith.constant 0 : i32
    return %c0_i32, %c0_i32_0 : i32, i32
  }
  func.func @transform_2(%arg0: i32) -> (i32, i32) {
    %c0_i32 = arith.constant 0 : i32
    %c0_i32_0 = arith.constant 0 : i32
    %c0_i32_1 = arith.constant 0 : i32
    return %c0_i32, %c0_i32_0 : i32, i32
  }
  func.func @transform_3(%arg0: i32) -> (i32, i32) {
    %c0_i32 = arith.constant 0 : i32
    %c0_i32_0 = arith.constant 0 : i32
    %c0_i32_1 = arith.constant 0 : i32
    return %c0_i32, %c0_i32_0 : i32, i32
  }
  func.func @transform_4(%arg0: i32) -> (i32, i32) {
    %c0_i32 = arith.constant 0 : i32
    %c0_i32_0 = arith.constant 0 : i32
    %c0_i32_1 = arith.constant 0 : i32
    return %c0_i32, %c0_i32_0 : i32, i32
  }
  func.func @transform_5(%arg0: i32) -> (i32, i32) {
    %c0_i32 = arith.constant 0 : i32
    %c0_i32_0 = arith.constant 0 : i32
    return %arg0, %c0_i32 : i32, i32
  }
}

module attributes {stable_mosaic.version = 11 : i64} {
  func.func @attention_kernel(%arg0: i32, %arg1: memref<1x64x16xf32, #tpu.memory_space<vmem>>, %arg2: memref<1x64x16xf32, #tpu.memory_space<vmem>>, %arg3: memref<1x64x16xf32, #tpu.memory_space<vmem>>, %arg4: memref<1x64x16xbf16, #tpu.memory_space<vmem>>) attributes {dimension_semantics = [#tpu.dimension_semantics<parallel>], iteration_bounds = array<i64: 4>, scalar_prefetch = 0 : i64, scratch_operands = 0 : i64, tpu.core_type = #tpu.core_type<tc>, window_params = [{transform_indices = @transform_0, window_bounds = array<i64: 1, 64, 16>}, {transform_indices = @transform_1, window_bounds = array<i64: 1, 64, 16>}, {transform_indices = @transform_2, window_bounds = array<i64: 1, 64, 16>}, {transform_indices = @transform_3, window_bounds = array<i64: 1, 64, 16>}]} {
    %c0 = arith.constant 0 : index
    %c0_0 = arith.constant 0 : index
    %c0_1 = arith.constant 0 : index
    %0 = vector.load %arg1[%c0, %c0_0, %c0_1] : memref<1x64x16xf32, #tpu.memory_space<vmem>>, vector<1x64x16xf32>
    %1 = vector.shape_cast %0 : vector<1x64x16xf32> to vector<64x16xf32>
    %2 = arith.truncf %1 : vector<64x16xf32> to vector<64x16xbf16>
    %c0_2 = arith.constant 0 : index
    %c0_3 = arith.constant 0 : index
    %c0_4 = arith.constant 0 : index
    %3 = vector.load %arg2[%c0_2, %c0_3, %c0_4] : memref<1x64x16xf32, #tpu.memory_space<vmem>>, vector<1x64x16xf32>
    %4 = vector.shape_cast %3 : vector<1x64x16xf32> to vector<64x16xf32>
    %5 = arith.truncf %4 : vector<64x16xf32> to vector<64x16xbf16>
    %c0_5 = arith.constant 0 : index
    %c0_6 = arith.constant 0 : index
    %c0_7 = arith.constant 0 : index
    %6 = vector.load %arg3[%c0_5, %c0_6, %c0_7] : memref<1x64x16xf32, #tpu.memory_space<vmem>>, vector<1x64x16xf32>
    %7 = vector.shape_cast %6 : vector<1x64x16xf32> to vector<64x16xf32>
    %8 = arith.truncf %7 : vector<64x16xf32> to vector<64x16xbf16>
    %9 = tpu.transpose %5, [1, 0] : vector<64x16xbf16> -> vector<16x64xbf16>
    %cst = arith.constant dense<0.000000e+00> : vector<64x64xf32>
    %10 = tpu.matmul %2, %9, %cst {dimension_numbers = #tpu.dot_dimension_numbers<[1], [0], [0], [1], [0, 0, 1, 1], [], []>} : vector<64x16xbf16>, vector<16x64xbf16>, vector<64x64xf32> -> vector<64x64xf32>
    %cst_8 = arith.constant 2.500000e-01 : f32
    %11 = vector.broadcast %cst_8 : f32 to vector<64x64xf32>
    %12 = arith.mulf %10, %11 : vector<64x64xf32>
    %cst_9 = arith.constant dense<0xFF800000> : vector<64xf32>
    %13 = vector.multi_reduction <maximumf>, %12, %cst_9 [1] : vector<64x64xf32> to vector<64xf32>
    %14 = vector.shape_cast %13 : vector<64xf32> to vector<64x1xf32>
    %15 = vector.broadcast %14 : vector<64x1xf32> to vector<64x64xf32>
    %16 = arith.subf %12, %15 : vector<64x64xf32>
    %17 = math.exp %16 : vector<64x64xf32>
    %cst_10 = arith.constant dense<0.000000e+00> : vector<64xf32>
    %18 = vector.multi_reduction <add>, %17, %cst_10 [1] : vector<64x64xf32> to vector<64xf32>
    %19 = vector.shape_cast %18 : vector<64xf32> to vector<64x1xf32>
    %20 = tpu.reciprocal %19 {approx = true} : vector<64x1xf32> -> vector<64x1xf32>
    %21 = vector.broadcast %20 : vector<64x1xf32> to vector<64x64xf32>
    %22 = arith.mulf %17, %21 : vector<64x64xf32>
    %23 = arith.truncf %22 : vector<64x64xf32> to vector<64x64xbf16>
    %cst_11 = arith.constant dense<0.000000e+00> : vector<64x16xf32>
    %24 = tpu.matmul %23, %8, %cst_11 {dimension_numbers = #tpu.dot_dimension_numbers<[1], [0], [0], [1], [0, 0, 1, 1], [], []>} : vector<64x64xbf16>, vector<64x16xbf16>, vector<64x16xf32> -> vector<64x16xf32>
    %25 = arith.truncf %24 : vector<64x16xf32> to vector<64x16xbf16>
    %c0_12 = arith.constant 0 : index
    %c0_13 = arith.constant 0 : index
    %c0_14 = arith.constant 0 : index
    %26 = vector.load %arg4[%c0_12, %c0_13, %c0_14] : memref<1x64x16xbf16, #tpu.memory_space<vmem>>, vector<1x64x16xbf16>
    %27 = vector.shape_cast %26 : vector<1x64x16xbf16> to vector<64x16xbf16>
    %28 = vector.shape_cast %25 : vector<64x16xbf16> to vector<1x64x16xbf16>
    tpu.vector_store %arg4[%c0_12, %c0_13, %c0_14], %28 {strides = array<i32>} : memref<1x64x16xbf16, #tpu.memory_space<vmem>>, vector<1x64x16xbf16>,
    return
  }
  func.func @transform_0(%arg0: i32) -> (i32, i32, i32) {
    %c0_i32 = arith.constant 0 : i32
    %c0_i32_0 = arith.constant 0 : i32
    %c0_i32_1 = arith.constant 0 : i32
    return %arg0, %c0_i32, %c0_i32_0 : i32, i32, i32
  }
  func.func @transform_1(%arg0: i32) -> (i32, i32, i32) {
    %c0_i32 = arith.constant 0 : i32
    %c0_i32_0 = arith.constant 0 : i32
    %c0_i32_1 = arith.constant 0 : i32
    return %arg0, %c0_i32, %c0_i32_0 : i32, i32, i32
  }
  func.func @transform_2(%arg0: i32) -> (i32, i32, i32) {
    %c0_i32 = arith.constant 0 : i32
    %c0_i32_0 = arith.constant 0 : i32
    %c0_i32_1 = arith.constant 0 : i32
    return %arg0, %c0_i32, %c0_i32_0 : i32, i32, i32
  }
  func.func @transform_3(%arg0: i32) -> (i32, i32, i32) {
    %c0_i32 = arith.constant 0 : i32
    %c0_i32_0 = arith.constant 0 : i32
    %c0_i32_1 = arith.constant 0 : i32
    return %arg0, %c0_i32, %c0_i32_0 : i32, i32, i32
  }
}

module attributes {stable_mosaic.version = 11 : i64} {
  func.func @matmul_bias_res_kernel(%arg0: i32, %arg1: memref<64x32xbf16, #tpu.memory_space<vmem>>, %arg2: memref<32x32xbf16, #tpu.memory_space<vmem>>, %arg3: memref<1x32xf32, #tpu.memory_space<vmem>>, %arg4: memref<64x32xf32, #tpu.memory_space<vmem>>, %arg5: memref<64x32xf32, #tpu.memory_space<vmem>>) attributes {dimension_semantics = [#tpu.dimension_semantics<parallel>], iteration_bounds = array<i64: 2>, scalar_prefetch = 0 : i64, scratch_operands = 0 : i64, tpu.core_type = #tpu.core_type<tc>, window_params = [{transform_indices = @transform_0, window_bounds = array<i64: 64, 32>}, {pipeline_mode = #tpu.pipeline_mode<synchronous>, transform_indices = @transform_1, window_bounds = array<i64: 32, 32>}, {pipeline_mode = #tpu.pipeline_mode<synchronous>, transform_indices = @transform_2, window_bounds = array<i64: 1, 32>}, {transform_indices = @transform_3, window_bounds = array<i64: 64, 32>}, {transform_indices = @transform_4, window_bounds = array<i64: 64, 32>}]} {
    %c0 = arith.constant 0 : index
    %c0_0 = arith.constant 0 : index
    %0 = vector.load %arg1[%c0, %c0_0] : memref<64x32xbf16, #tpu.memory_space<vmem>>, vector<64x32xbf16>
    %c0_1 = arith.constant 0 : index
    %c0_2 = arith.constant 0 : index
    %1 = vector.load %arg2[%c0_1, %c0_2] : memref<32x32xbf16, #tpu.memory_space<vmem>>, vector<32x32xbf16>
    %cst = arith.constant dense<0.000000e+00> : vector<64x32xf32>
    %2 = tpu.matmul %0, %1, %cst {dimension_numbers = #tpu.dot_dimension_numbers<[1], [0], [0], [1], [0, 0, 1, 1], [], []>} : vector<64x32xbf16>, vector<32x32xbf16>, vector<64x32xf32> -> vector<64x32xf32>
    %c0_3 = arith.constant 0 : index
    %c0_4 = arith.constant 0 : index
    %3 = vector.load %arg3[%c0_3, %c0_4] : memref<1x32xf32, #tpu.memory_space<vmem>>, vector<1x32xf32>
    %4 = vector.broadcast %3 : vector<1x32xf32> to vector<64x32xf32>
    %5 = arith.addf %2, %4 : vector<64x32xf32>
    %c0_5 = arith.constant 0 : index
    %c0_6 = arith.constant 0 : index
    %6 = vector.load %arg4[%c0_5, %c0_6] : memref<64x32xf32, #tpu.memory_space<vmem>>, vector<64x32xf32>
    %7 = arith.addf %5, %6 : vector<64x32xf32>
    %c0_7 = arith.constant 0 : index
    %c0_8 = arith.constant 0 : index
    %8 = vector.load %arg5[%c0_7, %c0_8] : memref<64x32xf32, #tpu.memory_space<vmem>>, vector<64x32xf32>
    tpu.vector_store %arg5[%c0_7, %c0_8], %7 {strides = array<i32>} : memref<64x32xf32, #tpu.memory_space<vmem>>, vector<64x32xf32>,
    return
  }
  func.func @transform_0(%arg0: i32) -> (i32, i32) {
    %c0_i32 = arith.constant 0 : i32
    %c0_i32_0 = arith.constant 0 : i32
    return %arg0, %c0_i32 : i32, i32
  }
  func.func @transform_1(%arg0: i32) -> (i32, i32) {
    %c0_i32 = arith.constant 0 : i32
    %c0_i32_0 = arith.constant 0 : i32
    %c0_i32_1 = arith.constant 0 : i32
    return %c0_i32, %c0_i32_0 : i32, i32
  }
  func.func @transform_2(%arg0: i32) -> (i32, i32) {
    %c0_i32 = arith.constant 0 : i32
    %c0_i32_0 = arith.constant 0 : i32
    %c0_i32_1 = arith.constant 0 : i32
    return %c0_i32, %c0_i32_0 : i32, i32
  }
  func.func @transform_3(%arg0: i32) -> (i32, i32) {
    %c0_i32 = arith.constant 0 : i32
    %c0_i32_0 = arith.constant 0 : i32
    return %arg0, %c0_i32 : i32, i32
  }
  func.func @transform_4(%arg0: i32) -> (i32, i32) {
    %c0_i32 = arith.constant 0 : i32
    %c0_i32_0 = arith.constant 0 : i32
    return %arg0, %c0_i32 : i32, i32
  }
}

module attributes {stable_mosaic.version = 11 : i64} {
  func.func @ln_matmul_kernel(%arg0: i32, %arg1: memref<64x32xf32, #tpu.memory_space<vmem>>, %arg2: memref<1x32xf32, #tpu.memory_space<vmem>>, %arg3: memref<1x32xf32, #tpu.memory_space<vmem>>, %arg4: memref<32x128xbf16, #tpu.memory_space<vmem>>, %arg5: memref<1x128xf32, #tpu.memory_space<vmem>>, %arg6: memref<64x128xbf16, #tpu.memory_space<vmem>>) attributes {dimension_semantics = [#tpu.dimension_semantics<parallel>], iteration_bounds = array<i64: 2>, scalar_prefetch = 0 : i64, scratch_operands = 0 : i64, tpu.core_type = #tpu.core_type<tc>, window_params = [{transform_indices = @transform_0, window_bounds = array<i64: 64, 32>}, {pipeline_mode = #tpu.pipeline_mode<synchronous>, transform_indices = @transform_1, window_bounds = array<i64: 1, 32>}, {pipeline_mode = #tpu.pipeline_mode<synchronous>, transform_indices = @transform_2, window_bounds = array<i64: 1, 32>}, {pipeline_mode = #tpu.pipeline_mode<synchronous>, transform_indices = @transform_3, window_bounds = array<i64: 32, 128>}, {pipeline_mode = #tpu.pipeline_mode<synchronous>, transform_indices = @transform_4, window_bounds = array<i64: 1, 128>}, {transform_indices = @transform_5, window_bounds = array<i64: 64, 128>}]} {
    %c0 = arith.constant 0 : index
    %c0_0 = arith.constant 0 : index
    %0 = vector.load %arg1[%c0, %c0_0] : memref<64x32xf32, #tpu.memory_space<vmem>>, vector<64x32xf32>
    %c0_1 = arith.constant 0 : index
    %c0_2 = arith.constant 0 : index
    %1 = vector.load %arg2[%c0_1, %c0_2] : memref<1x32xf32, #tpu.memory_space<vmem>>, vector<1x32xf32>
    %c0_3 = arith.constant 0 : index
    %c0_4 = arith.constant 0 : index
    %2 = vector.load %arg3[%c0_3, %c0_4] : memref<1x32xf32, #tpu.memory_space<vmem>>, vector<1x32xf32>
    %cst = arith.constant dense<0.000000e+00> : vector<64xf32>
    %3 = vector.multi_reduction <add>, %0, %cst [1] : vector<64x32xf32> to vector<64xf32>
    %4 = vector.shape_cast %3 : vector<64xf32> to vector<64x1xf32>
    %cst_5 = arith.constant 3.200000e+01 : f32
    %5 = vector.broadcast %cst_5 : f32 to vector<64x1xf32>
    %6 = arith.divf %4, %5 : vector<64x1xf32>
    %7 = vector.broadcast %6 : vector<64x1xf32> to vector<64x32xf32>
    %8 = arith.subf %0, %7 : vector<64x32xf32>
    %9 = arith.mulf %8, %8 : vector<64x32xf32>
    %cst_6 = arith.constant dense<0.000000e+00> : vector<64xf32>
    %10 = vector.multi_reduction <add>, %9, %cst_6 [1] : vector<64x32xf32> to vector<64xf32>
    %11 = vector.shape_cast %10 : vector<64xf32> to vector<64x1xf32>
    %cst_7 = arith.constant 3.200000e+01 : f32
    %12 = vector.broadcast %cst_7 : f32 to vector<64x1xf32>
    %13 = arith.divf %11, %12 : vector<64x1xf32>
    %cst_8 = arith.constant 9.99999974E-6 : f32
    %14 = vector.broadcast %cst_8 : f32 to vector<64x1xf32>
    %15 = arith.addf %13, %14 : vector<64x1xf32>
    %16 = math.rsqrt %15 : vector<64x1xf32>
    %17 = vector.broadcast %16 : vector<64x1xf32> to vector<64x32xf32>
    %18 = arith.mulf %8, %17 : vector<64x32xf32>
    %19 = vector.broadcast %1 : vector<1x32xf32> to vector<64x32xf32>
    %20 = arith.mulf %18, %19 : vector<64x32xf32>
    %21 = vector.broadcast %2 : vector<1x32xf32> to vector<64x32xf32>
    %22 = arith.addf %20, %21 : vector<64x32xf32>
    %23 = arith.truncf %22 : vector<64x32xf32> to vector<64x32xbf16>
    %c0_9 = arith.constant 0 : index
    %c0_10 = arith.constant 0 : index
    %24 = vector.load %arg4[%c0_9, %c0_10] : memref<32x128xbf16, #tpu.memory_space<vmem>>, vector<32x128xbf16>
    %cst_11 = arith.constant dense<0.000000e+00> : vector<64x128xf32>
    %25 = tpu.matmul %23, %24, %cst_11 {dimension_numbers = #tpu.dot_dimension_numbers<[1], [0], [0], [1], [0, 0, 1, 1], [], []>} : vector<64x32xbf16>, vector<32x128xbf16>, vector<64x128xf32> -> vector<64x128xf32>
    %c0_12 = arith.constant 0 : index
    %c0_13 = arith.constant 0 : index
    %26 = vector.load %arg5[%c0_12, %c0_13] : memref<1x128xf32, #tpu.memory_space<vmem>>, vector<1x128xf32>
    %27 = vector.broadcast %26 : vector<1x128xf32> to vector<64x128xf32>
    %28 = arith.addf %25, %27 : vector<64x128xf32>
    %29 = arith.truncf %28 : vector<64x128xf32> to vector<64x128xbf16>
    %c0_14 = arith.constant 0 : index
    %c0_15 = arith.constant 0 : index
    %30 = vector.load %arg6[%c0_14, %c0_15] : memref<64x128xbf16, #tpu.memory_space<vmem>>, vector<64x128xbf16>
    tpu.vector_store %arg6[%c0_14, %c0_15], %29 {strides = array<i32>} : memref<64x128xbf16, #tpu.memory_space<vmem>>, vector<64x128xbf16>,
    return
  }
  func.func @transform_0(%arg0: i32) -> (i32, i32) {
    %c0_i32 = arith.constant 0 : i32
    %c0_i32_0 = arith.constant 0 : i32
    return %arg0, %c0_i32 : i32, i32
  }
  func.func @transform_1(%arg0: i32) -> (i32, i32) {
    %c0_i32 = arith.constant 0 : i32
    %c0_i32_0 = arith.constant 0 : i32
    %c0_i32_1 = arith.constant 0 : i32
    return %c0_i32, %c0_i32_0 : i32, i32
  }
  func.func @transform_2(%arg0: i32) -> (i32, i32) {
    %c0_i32 = arith.constant 0 : i32
    %c0_i32_0 = arith.constant 0 : i32
    %c0_i32_1 = arith.constant 0 : i32
    return %c0_i32, %c0_i32_0 : i32, i32
  }
  func.func @transform_3(%arg0: i32) -> (i32, i32) {
    %c0_i32 = arith.constant 0 : i32
    %c0_i32_0 = arith.constant 0 : i32
    %c0_i32_1 = arith.constant 0 : i32
    return %c0_i32, %c0_i32_0 : i32, i32
  }
  func.func @transform_4(%arg0: i32) -> (i32, i32) {
    %c0_i32 = arith.constant 0 : i32
    %c0_i32_0 = arith.constant 0 : i32
    %c0_i32_1 = arith.constant 0 : i32
    return %c0_i32, %c0_i32_0 : i32, i32
  }
  func.func @transform_5(%arg0: i32) -> (i32, i32) {
    %c0_i32 = arith.constant 0 : i32
    %c0_i32_0 = arith.constant 0 : i32
    return %arg0, %c0_i32 : i32, i32
  }
}

module attributes {stable_mosaic.version = 11 : i64} {
  func.func @dwconv_gelu_kernel(%arg0: i32, %arg1: memref<1x10x10x128xbf16, #tpu.memory_space<vmem>>, %arg2: memref<3x3x128xf32, #tpu.memory_space<vmem>>, %arg3: memref<1x128xf32, #tpu.memory_space<vmem>>, %arg4: memref<1x8x8x128xbf16, #tpu.memory_space<vmem>>) attributes {dimension_semantics = [#tpu.dimension_semantics<parallel>], iteration_bounds = array<i64: 2>, scalar_prefetch = 0 : i64, scratch_operands = 0 : i64, tpu.core_type = #tpu.core_type<tc>, window_params = [{transform_indices = @transform_0, window_bounds = array<i64: 1, 10, 10, 128>}, {pipeline_mode = #tpu.pipeline_mode<synchronous>, transform_indices = @transform_1, window_bounds = array<i64: 3, 3, 128>}, {pipeline_mode = #tpu.pipeline_mode<synchronous>, transform_indices = @transform_2, window_bounds = array<i64: 1, 128>}, {transform_indices = @transform_3, window_bounds = array<i64: 1, 8, 8, 128>}]} {
    %c0 = arith.constant 0 : index
    %c0_0 = arith.constant 0 : index
    %c0_1 = arith.constant 0 : index
    %c0_2 = arith.constant 0 : index
    %0 = vector.load %arg1[%c0, %c0_0, %c0_1, %c0_2] : memref<1x10x10x128xbf16, #tpu.memory_space<vmem>>, vector<1x10x10x128xbf16>
    %1 = vector.shape_cast %0 : vector<1x10x10x128xbf16> to vector<10x10x128xbf16>
    %2 = arith.extf %1 : vector<10x10x128xbf16> to vector<10x10x128xf32>
    %cst = arith.constant 0.000000e+00 : f32
    %3 = vector.broadcast %cst : f32 to vector<8x8x128xf32>
    %c0_3 = arith.constant 0 : index
    %c0_4 = arith.constant 0 : index
    %4 = vector.load %arg3[%c0_3, %c0_4] : memref<1x128xf32, #tpu.memory_space<vmem>>, vector<1x128xf32>
    %5 = vector.shape_cast %4 : vector<1x128xf32> to vector<1x1x128xf32>
    %6 = vector.broadcast %5 : vector<1x1x128xf32> to vector<8x8x128xf32>
    %7 = arith.addf %3, %6 : vector<8x8x128xf32>
    %c0_5 = arith.constant 0 : index
    %c0_6 = arith.constant 0 : index
    %c0_7 = arith.constant 0 : index
    %8 = vector.load %arg2[%c0_5, %c0_6, %c0_7] : memref<3x3x128xf32, #tpu.memory_space<vmem>>, vector<1x1x128xf32>
    %9 = vector.shape_cast %8 : vector<1x1x128xf32> to vector<128xf32>
    %10 = vector.extract_strided_slice %2 {offsets = [0, 0, 0], sizes = [8, 8, 128], strides = [1, 1, 1]} : vector<10x10x128xf32> to vector<8x8x128xf32>
    %11 = vector.shape_cast %9 : vector<128xf32> to vector<1x1x128xf32>
    %12 = vector.broadcast %11 : vector<1x1x128xf32> to vector<8x8x128xf32>
    %13 = arith.mulf %12, %10 : vector<8x8x128xf32>
    %14 = arith.addf %7, %13 : vector<8x8x128xf32>
    %c0_8 = arith.constant 0 : index
    %c1 = arith.constant 1 : index
    %c0_9 = arith.constant 0 : index
    %15 = vector.load %arg2[%c0_8, %c1, %c0_9] : memref<3x3x128xf32, #tpu.memory_space<vmem>>, vector<1x1x128xf32>
    %16 = vector.shape_cast %15 : vector<1x1x128xf32> to vector<128xf32>
    %17 = vector.extract_strided_slice %2 {offsets = [0, 1, 0], sizes = [8, 8, 128], strides = [1, 1, 1]} : vector<10x10x128xf32> to vector<8x8x128xf32>
    %18 = vector.shape_cast %16 : vector<128xf32> to vector<1x1x128xf32>
    %19 = vector.broadcast %18 : vector<1x1x128xf32> to vector<8x8x128xf32>
    %20 = arith.mulf %19, %17 : vector<8x8x128xf32>
    %21 = arith.addf %14, %20 : vector<8x8x128xf32>
    %c0_10 = arith.constant 0 : index
    %c2 = arith.constant 2 : index
    %c0_11 = arith.constant 0 : index
    %22 = vector.load %arg2[%c0_10, %c2, %c0_11] : memref<3x3x128xf32, #tpu.memory_space<vmem>>, vector<1x1x128xf32>
    %23 = vector.shape_cast %22 : vector<1x1x128xf32> to vector<128xf32>
    %24 = vector.extract_strided_slice %2 {offsets = [0, 2, 0], sizes = [8, 8, 128], strides = [1, 1, 1]} : vector<10x10x128xf32> to vector<8x8x128xf32>
    %25 = vector.shape_cast %23 : vector<128xf32> to vector<1x1x128xf32>
    %26 = vector.broadcast %25 : vector<1x1x128xf32> to vector<8x8x128xf32>
    %27 = arith.mulf %26, %24 : vector<8x8x128xf32>
    %28 = arith.addf %21, %27 : vector<8x8x128xf32>
    %c1_12 = arith.constant 1 : index
    %c0_13 = arith.constant 0 : index
    %c0_14 = arith.constant 0 : index
    %29 = vector.load %arg2[%c1_12, %c0_13, %c0_14] : memref<3x3x128xf32, #tpu.memory_space<vmem>>, vector<1x1x128xf32>
    %30 = vector.shape_cast %29 : vector<1x1x128xf32> to vector<128xf32>
    %31 = vector.extract_strided_slice %2 {offsets = [1, 0, 0], sizes = [8, 8, 128], strides = [1, 1, 1]} : vector<10x10x128xf32> to vector<8x8x128xf32>
    %32 = vector.shape_cast %30 : vector<128xf32> to vector<1x1x128xf32>
    %33 = vector.broadcast %32 : vector<1x1x128xf32> to vector<8x8x128xf32>
    %34 = arith.mulf %33, %31 : vector<8x8x128xf32>
    %35 = arith.addf %28, %34 : vector<8x8x128xf32>
    %c1_15 = arith.constant 1 : index
    %c1_16 = arith.constant 1 : index
    %c0_17 = arith.constant 0 : index
    %36 = vector.load %arg2[%c1_15, %c1_16, %c0_17] : memref<3x3x128xf32, #tpu.memory_space<vmem>>, vector<1x1x128xf32>
    %37 = vector.shape_cast %36 : vector<1x1x128xf32> to vector<128xf32>
    %38 = vector.extract_strided_slice %2 {offsets = [1, 1, 0], sizes = [8, 8, 128], strides = [1, 1, 1]} : vector<10x10x128xf32> to vector<8x8x128xf32>
    %39 = vector.shape_cast %37 : vector<128xf32> to vector<1x1x128xf32>
    %40 = vector.broadcast %39 : vector<1x1x128xf32> to vector<8x8x128xf32>
    %41 = arith.mulf %40, %38 : vector<8x8x128xf32>
    %42 = arith.addf %35, %41 : vector<8x8x128xf32>
    %c1_18 = arith.constant 1 : index
    %c2_19 = arith.constant 2 : index
    %c0_20 = arith.constant 0 : index
    %43 = vector.load %arg2[%c1_18, %c2_19, %c0_20] : memref<3x3x128xf32, #tpu.memory_space<vmem>>, vector<1x1x128xf32>
    %44 = vector.shape_cast %43 : vector<1x1x128xf32> to vector<128xf32>
    %45 = vector.extract_strided_slice %2 {offsets = [1, 2, 0], sizes = [8, 8, 128], strides = [1, 1, 1]} : vector<10x10x128xf32> to vector<8x8x128xf32>
    %46 = vector.shape_cast %44 : vector<128xf32> to vector<1x1x128xf32>
    %47 = vector.broadcast %46 : vector<1x1x128xf32> to vector<8x8x128xf32>
    %48 = arith.mulf %47, %45 : vector<8x8x128xf32>
    %49 = arith.addf %42, %48 : vector<8x8x128xf32>
    %c2_21 = arith.constant 2 : index
    %c0_22 = arith.constant 0 : index
    %c0_23 = arith.constant 0 : index
    %50 = vector.load %arg2[%c2_21, %c0_22, %c0_23] : memref<3x3x128xf32, #tpu.memory_space<vmem>>, vector<1x1x128xf32>
    %51 = vector.shape_cast %50 : vector<1x1x128xf32> to vector<128xf32>
    %52 = vector.extract_strided_slice %2 {offsets = [2, 0, 0], sizes = [8, 8, 128], strides = [1, 1, 1]} : vector<10x10x128xf32> to vector<8x8x128xf32>
    %53 = vector.shape_cast %51 : vector<128xf32> to vector<1x1x128xf32>
    %54 = vector.broadcast %53 : vector<1x1x128xf32> to vector<8x8x128xf32>
    %55 = arith.mulf %54, %52 : vector<8x8x128xf32>
    %56 = arith.addf %49, %55 : vector<8x8x128xf32>
    %c2_24 = arith.constant 2 : index
    %c1_25 = arith.constant 1 : index
    %c0_26 = arith.constant 0 : index
    %57 = vector.load %arg2[%c2_24, %c1_25, %c0_26] : memref<3x3x128xf32, #tpu.memory_space<vmem>>, vector<1x1x128xf32>
    %58 = vector.shape_cast %57 : vector<1x1x128xf32> to vector<128xf32>
    %59 = vector.extract_strided_slice %2 {offsets = [2, 1, 0], sizes = [8, 8, 128], strides = [1, 1, 1]} : vector<10x10x128xf32> to vector<8x8x128xf32>
    %60 = vector.shape_cast %58 : vector<128xf32> to vector<1x1x128xf32>
    %61 = vector.broadcast %60 : vector<1x1x128xf32> to vector<8x8x128xf32>
    %62 = arith.mulf %61, %59 : vector<8x8x128xf32>
    %63 = arith.addf %56, %62 : vector<8x8x128xf32>
    %c2_27 = arith.constant 2 : index
    %c2_28 = arith.constant 2 : index
    %c0_29 = arith.constant 0 : index
    %64 = vector.load %arg2[%c2_27, %c2_28, %c0_29] : memref<3x3x128xf32, #tpu.memory_space<vmem>>, vector<1x1x128xf32>
    %65 = vector.shape_cast %64 : vector<1x1x128xf32> to vector<128xf32>
    %66 = vector.extract_strided_slice %2 {offsets = [2, 2, 0], sizes = [8, 8, 128], strides = [1, 1, 1]} : vector<10x10x128xf32> to vector<8x8x128xf32>
    %67 = vector.shape_cast %65 : vector<128xf32> to vector<1x1x128xf32>
    %68 = vector.broadcast %67 : vector<1x1x128xf32> to vector<8x8x128xf32>
    %69 = arith.mulf %68, %66 : vector<8x8x128xf32>
    %70 = arith.addf %63, %69 : vector<8x8x128xf32>
    %cst_30 = arith.constant 5.000000e-01 : f32
    %71 = vector.broadcast %cst_30 : f32 to vector<8x8x128xf32>
    %72 = arith.mulf %71, %70 : vector<8x8x128xf32>
    %cst_31 = arith.constant 0.707106769 : f32
    %73 = vector.broadcast %cst_31 : f32 to vector<8x8x128xf32>
    %74 = arith.mulf %70, %73 : vector<8x8x128xf32>
    %cst_32 = arith.constant 0.000000e+00 : f32
    %75 = vector.broadcast %cst_32 : f32 to vector<8x8x128xf32>
    %76 = arith.cmpf oge, %74, %75 : vector<8x8x128xf32>
    %cst_33 = arith.constant 1.000000e+00 : f32
    %cst_34 = arith.constant -1.000000e+00 : f32
    %77 = vector.broadcast %cst_33 : f32 to vector<8x8x128xf32>
    %78 = vector.broadcast %cst_34 : f32 to vector<8x8x128xf32>
    %79 = arith.select %76, %77, %78 : vector<8x8x128xi1>, vector<8x8x128xf32>
    %80 = math.absf %74 : vector<8x8x128xf32>
    %cst_35 = arith.constant 0.327591091 : f32
    %81 = vector.broadcast %cst_35 : f32 to vector<8x8x128xf32>
    %82 = arith.mulf %81, %80 : vector<8x8x128xf32>
    %cst_36 = arith.constant 1.000000e+00 : f32
    %83 = vector.broadcast %cst_36 : f32 to vector<8x8x128xf32>
    %84 = arith.addf %83, %82 : vector<8x8x128xf32>
    %cst_37 = arith.constant 1.000000e+00 : f32
    %85 = vector.broadcast %cst_37 : f32 to vector<8x8x128xf32>
    %86 = arith.divf %85, %84 : vector<8x8x128xf32>
    %cst_38 = arith.constant 1.06140542 : f32
    %87 = vector.broadcast %cst_38 : f32 to vector<8x8x128xf32>
    %88 = arith.mulf %86, %87 : vector<8x8x128xf32>
    %cst_39 = arith.constant -1.45315206 : f32
    %89 = vector.broadcast %cst_39 : f32 to vector<8x8x128xf32>
    %90 = arith.addf %89, %88 : vector<8x8x128xf32>
    %91 = arith.mulf %86, %90 : vector<8x8x128xf32>
    %cst_40 = arith.constant 1.42141378 : f32
    %92 = vector.broadcast %cst_40 : f32 to vector<8x8x128xf32>
    %93 = arith.addf %92, %91 : vector<8x8x128xf32>
    %94 = arith.mulf %86, %93 : vector<8x8x128xf32>
    %cst_41 = arith.constant -0.284496725 : f32
    %95 = vector.broadcast %cst_41 : f32 to vector<8x8x128xf32>
    %96 = arith.addf %95, %94 : vector<8x8x128xf32>
    %97 = arith.mulf %86, %96 : vector<8x8x128xf32>
    %cst_42 = arith.constant 0.254829586 : f32
    %98 = vector.broadcast %cst_42 : f32 to vector<8x8x128xf32>
    %99 = arith.addf %98, %97 : vector<8x8x128xf32>
    %100 = arith.mulf %86, %99 : vector<8x8x128xf32>
    %cst_43 = arith.constant 0.000000e+00 : f32
    %101 = vector.broadcast %cst_43 : f32 to vector<8x8x128xf32>
    %102 = arith.subf %101, %80 : vector<8x8x128xf32>
    %103 = arith.mulf %102, %80 : vector<8x8x128xf32>
    %104 = math.exp %103 : vector<8x8x128xf32>
    %105 = arith.mulf %100, %104 : vector<8x8x128xf32>
    %cst_44 = arith.constant 1.000000e+00 : f32
    %106 = vector.broadcast %cst_44 : f32 to vector<8x8x128xf32>
    %107 = arith.subf %106, %105 : vector<8x8x128xf32>
    %108 = arith.mulf %79, %107 : vector<8x8x128xf32>
    %cst_45 = arith.constant 1.000000e+00 : f32
    %109 = vector.broadcast %cst_45 : f32 to vector<8x8x128xf32>
    %110 = arith.addf %109, %108 : vector<8x8x128xf32>
    %111 = arith.mulf %72, %110 : vector<8x8x128xf32>
    %112 = arith.truncf %111 : vector<8x8x128xf32> to vector<8x8x128xbf16>
    %c0_46 = arith.constant 0 : index
    %c0_47 = arith.constant 0 : index
    %c0_48 = arith.constant 0 : index
    %c0_49 = arith.constant 0 : index
    %113 = vector.load %arg4[%c0_46, %c0_47, %c0_48, %c0_49] : memref<1x8x8x128xbf16, #tpu.memory_space<vmem>>, vector<1x8x8x128xbf16>
    %114 = vector.shape_cast %113 : vector<1x8x8x128xbf16> to vector<8x8x128xbf16>
    %115 = vector.shape_cast %112 : vector<8x8x128xbf16> to vector<1x8x8x128xbf16>
    tpu.vector_store %arg4[%c0_46, %c0_47, %c0_48, %c0_49], %115 {strides = array<i32>} : memref<1x8x8x128xbf16, #tpu.memory_space<vmem>>, vector<1x8x8x128xbf16>,
    return
  }
  func.func @transform_0(%arg0: i32) -> (i32, i32, i32, i32) {
    %c0_i32 = arith.constant 0 : i32
    %c0_i32_0 = arith.constant 0 : i32
    %c0_i32_1 = arith.constant 0 : i32
    %c0_i32_2 = arith.constant 0 : i32
    return %arg0, %c0_i32, %c0_i32_0, %c0_i32_1 : i32, i32, i32, i32
  }
  func.func @transform_1(%arg0: i32) -> (i32, i32, i32) {
    %c0_i32 = arith.constant 0 : i32
    %c0_i32_0 = arith.constant 0 : i32
    %c0_i32_1 = arith.constant 0 : i32
    %c0_i32_2 = arith.constant 0 : i32
    return %c0_i32, %c0_i32_0, %c0_i32_1 : i32, i32, i32
  }
  func.func @transform_2(%arg0: i32) -> (i32, i32) {
    %c0_i32 = arith.constant 0 : i32
    %c0_i32_0 = arith.constant 0 : i32
    %c0_i32_1 = arith.constant 0 : i32
    return %c0_i32, %c0_i32_0 : i32, i32
  }
  func.func @transform_3(%arg0: i32) -> (i32, i32, i32, i32) {
    %c0_i32 = arith.constant 0 : i32
    %c0_i32_0 = arith.constant 0 : i32
    %c0_i32_1 = arith.constant 0 : i32
    %c0_i32_2 = arith.constant 0 : i32
    return %arg0, %c0_i32, %c0_i32_0, %c0_i32_1 : i32, i32, i32, i32
  }
}

module attributes {stable_mosaic.version = 11 : i64} {
  func.func @matmul_bias_res_kernel(%arg0: i32, %arg1: memref<64x128xbf16, #tpu.memory_space<vmem>>, %arg2: memref<128x32xbf16, #tpu.memory_space<vmem>>, %arg3: memref<1x32xf32, #tpu.memory_space<vmem>>, %arg4: memref<64x32xf32, #tpu.memory_space<vmem>>, %arg5: memref<64x32xf32, #tpu.memory_space<vmem>>) attributes {dimension_semantics = [#tpu.dimension_semantics<parallel>], iteration_bounds = array<i64: 2>, scalar_prefetch = 0 : i64, scratch_operands = 0 : i64, tpu.core_type = #tpu.core_type<tc>, window_params = [{transform_indices = @transform_0, window_bounds = array<i64: 64, 128>}, {pipeline_mode = #tpu.pipeline_mode<synchronous>, transform_indices = @transform_1, window_bounds = array<i64: 128, 32>}, {pipeline_mode = #tpu.pipeline_mode<synchronous>, transform_indices = @transform_2, window_bounds = array<i64: 1, 32>}, {transform_indices = @transform_3, window_bounds = array<i64: 64, 32>}, {transform_indices = @transform_4, window_bounds = array<i64: 64, 32>}]} {
    %c0 = arith.constant 0 : index
    %c0_0 = arith.constant 0 : index
    %0 = vector.load %arg1[%c0, %c0_0] : memref<64x128xbf16, #tpu.memory_space<vmem>>, vector<64x128xbf16>
    %c0_1 = arith.constant 0 : index
    %c0_2 = arith.constant 0 : index
    %1 = vector.load %arg2[%c0_1, %c0_2] : memref<128x32xbf16, #tpu.memory_space<vmem>>, vector<128x32xbf16>
    %cst = arith.constant dense<0.000000e+00> : vector<64x32xf32>
    %2 = tpu.matmul %0, %1, %cst {dimension_numbers = #tpu.dot_dimension_numbers<[1], [0], [0], [1], [0, 0, 1, 1], [], []>} : vector<64x128xbf16>, vector<128x32xbf16>, vector<64x32xf32> -> vector<64x32xf32>
    %c0_3 = arith.constant 0 : index
    %c0_4 = arith.constant 0 : index
    %3 = vector.load %arg3[%c0_3, %c0_4] : memref<1x32xf32, #tpu.memory_space<vmem>>, vector<1x32xf32>
    %4 = vector.broadcast %3 : vector<1x32xf32> to vector<64x32xf32>
    %5 = arith.addf %2, %4 : vector<64x32xf32>
    %c0_5 = arith.constant 0 : index
    %c0_6 = arith.constant 0 : index
    %6 = vector.load %arg4[%c0_5, %c0_6] : memref<64x32xf32, #tpu.memory_space<vmem>>, vector<64x32xf32>
    %7 = arith.addf %5, %6 : vector<64x32xf32>
    %c0_7 = arith.constant 0 : index
    %c0_8 = arith.constant 0 : index
    %8 = vector.load %arg5[%c0_7, %c0_8] : memref<64x32xf32, #tpu.memory_space<vmem>>, vector<64x32xf32>
    tpu.vector_store %arg5[%c0_7, %c0_8], %7 {strides = array<i32>} : memref<64x32xf32, #tpu.memory_space<vmem>>, vector<64x32xf32>,
    return
  }
  func.func @transform_0(%arg0: i32) -> (i32, i32) {
    %c0_i32 = arith.constant 0 : i32
    %c0_i32_0 = arith.constant 0 : i32
    return %arg0, %c0_i32 : i32, i32
  }
  func.func @transform_1(%arg0: i32) -> (i32, i32) {
    %c0_i32 = arith.constant 0 : i32
    %c0_i32_0 = arith.constant 0 : i32
    %c0_i32_1 = arith.constant 0 : i32
    return %c0_i32, %c0_i32_0 : i32, i32
  }
  func.func @transform_2(%arg0: i32) -> (i32, i32) {
    %c0_i32 = arith.constant 0 : i32
    %c0_i32_0 = arith.constant 0 : i32
    %c0_i32_1 = arith.constant 0 : i32
    return %c0_i32, %c0_i32_0 : i32, i32
  }
  func.func @transform_3(%arg0: i32) -> (i32, i32) {
    %c0_i32 = arith.constant 0 : i32
    %c0_i32_0 = arith.constant 0 : i32
    return %arg0, %c0_i32 : i32, i32
  }
  func.func @transform_4(%arg0: i32) -> (i32, i32) {
    %c0_i32 = arith.constant 0 : i32
    %c0_i32_0 = arith.constant 0 : i32
    return %arg0, %c0_i32 : i32, i32
  }
}

</mosaic_0001>

<llo_original>
// kernel: block_forward.7
$region0: #{block_forward.7}
  #allocation0 [shape = 'u32[]', space=smem, size = 0x4, offset = 0x4, fixed_abs, tag = 'smem constant byte address 0x4 - core index']
  #allocation1 [shape = 'u32[144,128]{1,0:T(1,128)}', space=vmem, size = 0x12000, scoped, tag = 'internal scratch']
  %s0 = inlined_call_operand.vmem [shape: f32[4,64,16], index: 0, kind: input, shape index: {}]
  %s1 = inlined_call_operand.vmem [shape: f32[4,64,16], index: 1, kind: input, shape index: {}]
  %s2 = inlined_call_operand.vmem [shape: f32[4,64,16], index: 2, kind: input, shape index: {}]
  %s3 = inlined_call_operand.vmem [shape: bf16[4,64,16], index: 3, kind: output, shape index: {}]
  %s4 = sld [smem:[#allocation0]]
  $region45: #{block_forward.7} parent=0
    _
  %s6 = ssub.s32 1, %s4
  %s7 = scalar_select 0, %s6, %s4
  loop: start=0, step=1, limit=6
  $region2: #{block_forward.7} parent=0 // loop_pre_header
    _
  $region3: #{block_forward.7} parent=0 // loop_header
    %s9 = sphi 0, %s13
    %p10 = scmp.ge.s32.totalorder %s9, 6
    %s19 = sphi 0, %s21
    %s22 = sphi 0, %s19
    %s23 = sphi 0, %s22
    %s39 = sphi 0, %s23
    %s45 = sphi 0, %s47
    %s48 = sphi 0, %s45
    %s49 = sphi 0, %s48
    %s65 = sphi 0, %s49
    %s71 = sphi 0, %s73
    %s74 = sphi 0, %s71
    %s75 = sphi 0, %s74
    %s91 = sphi 0, %s75
    %s97 = sphi 0, %s99
    %s100 = sphi 0, %s97
    %s101 = sphi 0, %s100
    %s117 = sphi 0, %s101
  $region4: #{block_forward.7} parent=0 // loop_header_branch
    %12 = sbr.rel (%p10) target = $region8
  $region5: #{block_forward.7} parent=0 // loop_body
    %s14 = ssub.s32 %s9, 1
    %s15 = ssub.s32 %s9, 2
    %s16 = sadd.s32 %s9, 1
    %s17 = ssub.s32 %s9, %s16
    %p18 = scmp.eq.s32.totalorder %s17, 0
    %s20 = sadd.s32 %s19, 1
    %s21 = scalar_select %p18, %s19, %s20
    %p24 = pneg %p18
    %p25 = scmp.eq.s32.totalorder %s9, 3
    %p26 = por %p24, %p25
    %p27 = scmp.ne.s32.totalorder %s19, %s22
    %p28 = scmp.eq.s32.totalorder %s9, 0
    %p29 = por %p27, %p28
    %p30 = scmp.ne.s32.totalorder %s19, %s22
    %p31 = scmp.eq.s32.totalorder %s14, 3
    %p32 = por %p30, %p31
    %p33 = scmp.ne.s32.totalorder %s22, %s23
    %p34 = scmp.eq.s32.totalorder %s14, 0
    %p35 = por %p33, %p34
    %p36 = scmp.ne.s32.totalorder %s22, %s23
    %p37 = scmp.eq.s32.totalorder %s15, 3
    %p38 = por %p36, %p37
    %p40 = scmp.ne.s32.totalorder %s23, %s39
    %p41 = scmp.eq.s32.totalorder %s15, 0
    %p42 = por %p40, %p41
    %s43 = ssub.s32 %s9, %s16
    %p44 = scmp.eq.s32.totalorder %s43, 0
    %s46 = sadd.s32 %s45, 1
    %s47 = scalar_select %p44, %s45, %s46
    %p50 = pneg %p44
    %p51 = scmp.eq.s32.totalorder %s9, 3
    %p52 = por %p50, %p51
    %p53 = scmp.ne.s32.totalorder %s45, %s48
    %p54 = scmp.eq.s32.totalorder %s9, 0
    %p55 = por %p53, %p54
    %p56 = scmp.ne.s32.totalorder %s45, %s48
    %p57 = scmp.eq.s32.totalorder %s14, 3
    %p58 = por %p56, %p57
    %p59 = scmp.ne.s32.totalorder %s48, %s49
    %p60 = scmp.eq.s32.totalorder %s14, 0
    %p61 = por %p59, %p60
    %p62 = scmp.ne.s32.totalorder %s48, %s49
    %p63 = scmp.eq.s32.totalorder %s15, 3
    %p64 = por %p62, %p63
    %p66 = scmp.ne.s32.totalorder %s49, %s65
    %p67 = scmp.eq.s32.totalorder %s15, 0
    %p68 = por %p66, %p67
    %s69 = ssub.s32 %s9, %s16
    %p70 = scmp.eq.s32.totalorder %s69, 0
    %s72 = sadd.s32 %s71, 1
    %s73 = scalar_select %p70, %s71, %s72
    %p76 = pneg %p70
    %p77 = scmp.eq.s32.totalorder %s9, 3
    %p78 = por %p76, %p77
    %p79 = scmp.ne.s32.totalorder %s71, %s74
    %p80 = scmp.eq.s32.totalorder %s9, 0
    %p81 = por %p79, %p80
    %p82 = scmp.ne.s32.totalorder %s71, %s74
    %p83 = scmp.eq.s32.totalorder %s14, 3
    %p84 = por %p82, %p83
    %p85 = scmp.ne.s32.totalorder %s74, %s75
    %p86 = scmp.eq.s32.totalorder %s14, 0
    %p87 = por %p85, %p86
    %p88 = scmp.ne.s32.totalorder %s74, %s75
    %p89 = scmp.eq.s32.totalorder %s15, 3
    %p90 = por %p88, %p89
    %p92 = scmp.ne.s32.totalorder %s75, %s91
    %p93 = scmp.eq.s32.totalorder %s15, 0
    %p94 = por %p92, %p93
    %s95 = ssub.s32 %s9, %s16
    %p96 = scmp.eq.s32.totalorder %s95, 0
    %s98 = sadd.s32 %s97, 1
    %s99 = scalar_select %p96, %s97, %s98
    %p102 = pneg %p96
    %p103 = scmp.eq.s32.totalorder %s9, 3
    %p104 = por %p102, %p103
    %p105 = scmp.ne.s32.totalorder %s97, %s100
    %p106 = scmp.eq.s32.totalorder %s9, 0
    %p107 = por %p105, %p106
    %p108 = scmp.ne.s32.totalorder %s97, %s100
    %p109 = scmp.eq.s32.totalorder %s14, 3
    %p110 = por %p108, %p109
    %p111 = scmp.ne.s32.totalorder %s100, %s101
    %p112 = scmp.eq.s32.totalorder %s14, 0
    %p113 = por %p111, %p112
    %p114 = scmp.ne.s32.totalorder %s100, %s101
    %p115 = scmp.eq.s32.totalorder %s15, 3
    %p116 = por %p114, %p115
    %p118 = scmp.ne.s32.totalorder %s101, %s117
    %p119 = scmp.eq.s32.totalorder %s15, 0
    %p120 = por %p118, %p119
    %p121 = scmp.le.s32.totalorder 1, %s9
    %p122 = scmp.lt.s32.totalorder %s9, 5
    %p123 = pnand %p121, %p122
    %p124 = pneg %p123
    // Predicated region
    $region9: #{block_forward.7} parent=5 // pred_check
      _
    $region10: #{block_forward.7} parent=5 // pred_check_branch
      %126 = sbr.rel (%p123) target = $region12
    $region11: #{block_forward.7} parent=5 // pred_region
      %s127 = ssub.s32 %s9, 1
    $region12: #{block_forward.7} parent=5 // pred_fallthru
      _
    %p128 = scmp.lt.s32.totalorder %s9, 4
    // Predicated region
    $region13: #{block_forward.7} parent=5 // pred_check
      %p129 = pneg %p128
    $region14: #{block_forward.7} parent=5 // pred_check_branch
      %131 = sbr.rel (%p129) target = $region16
    $region15: #{block_forward.7} parent=5 // pred_region
      // Predicated region
      $region17: #{block_forward.7} parent=15 // pred_check
        %p132 = pneg %p29
      $region18: #{block_forward.7} parent=15 // pred_check_branch
        %134 = sbr.rel (%p132) target = $region20
      $region19: #{block_forward.7} parent=15 // pred_region
        %p135 = scmp.lt.s32.totalorder %s9, 3
        %s136 = scalar_select %p135, %s9, 3
        %s137 = smul.addr %s136, 8
        %s138 = smul.addr %s137, 8
        %s139 = scalar_lea.vmem %s0, %s138
      $region20: #{block_forward.7} parent=15 // pred_fallthru
        _
      // Predicated region
      $region21: #{block_forward.7} parent=15 // pred_check
        %p140 = pneg %p55
      $region22: #{block_forward.7} parent=15 // pred_check_branch
        %142 = sbr.rel (%p140) target = $region24
      $region23: #{block_forward.7} parent=15 // pred_region
        %p143 = scmp.lt.s32.totalorder %s9, 3
        %s144 = scalar_select %p143, %s9, 3
        %s145 = smul.addr %s144, 8
        %s146 = smul.addr %s145, 8
        %s147 = scalar_lea.vmem %s1, %s146
      $region24: #{block_forward.7} parent=15 // pred_fallthru
        _
      // Predicated region
      $region25: #{block_forward.7} parent=15 // pred_check
        %p148 = pneg %p81
      $region26: #{block_forward.7} parent=15 // pred_check_branch
        %150 = sbr.rel (%p148) target = $region28
      $region27: #{block_forward.7} parent=15 // pred_region
        %p151 = scmp.lt.s32.totalorder %s9, 3
        %s152 = scalar_select %p151, %s9, 3
        %s153 = smul.addr %s152, 8
        %s154 = smul.addr %s153, 8
        %s155 = scalar_lea.vmem %s2, %s154
      $region28: #{block_forward.7} parent=15 // pred_fallthru
        _
    $region16: #{block_forward.7} parent=5 // pred_fallthru
      _
    %p156 = scmp.le.s32.totalorder 1, %s9
    %p157 = scmp.lt.s32.totalorder %s9, 5
    %p158 = pnand %p156, %p157
    %p159 = pneg %p158
    // Predicated region
    $region29: #{block_forward.7} parent=5 // pred_check
      _
    $region30: #{block_forward.7} parent=5 // pred_check_branch
      %161 = sbr.rel (%p158) target = $region32
    $region31: #{block_forward.7} parent=5 // pred_region
      %s162 = ssub.s32 %s9, 1
      %p163 = scmp.lt.s32.totalorder %s14, 3
      %s164 = scalar_select %p163, %s14, 3
      %s165 = smul.addr %s164, 8
      %s166 = smul.addr %s165, 8
      %s167 = scalar_lea.vmem %s0, %s166
      %p168 = pneg %p35
      %p169 = pneg %p32
      %p170 = scmp.lt.s32.totalorder %s14, 3
      %s171 = scalar_select %p170, %s14, 3
      %s172 = smul.addr %s171, 8
      %s173 = smul.addr %s172, 8
      %s174 = scalar_lea.vmem %s1, %s173
      %p175 = pneg %p61
      %p176 = pneg %p58
      %p177 = scmp.lt.s32.totalorder %s14, 3
      %s178 = scalar_select %p177, %s14, 3
      %s179 = smul.addr %s178, 8
      %s180 = smul.addr %s179, 8
      %s181 = scalar_lea.vmem %s2, %s180
      %p182 = pneg %p87
      %p183 = pneg %p84
      %p184 = pneg %p113
      %p185 = pneg %p110
      %p186 = scmp.lt.s32.totalorder %s14, 3
      %s187 = scalar_select %p186, %s14, 3
      %s188 = smul.addr %s187, 8
      %s189 = smul.addr %s188, 4
      %s190 = scalar_lea.vmem %s3, %s189
      %p191 = scmp.lt.s32.totalorder %s14, 3
      %s192 = scalar_select %p191, %s14, 3
      %s193 = smul.addr %s192, 8
      %s194 = smul.addr %s193, 8
      %s195 = scalar_lea.vmem %s0, %s194
      %p196 = scmp.lt.s32.totalorder %s14, 3
      %s197 = scalar_select %p196, %s14, 3
      %s198 = smul.addr %s197, 8
      %s199 = smul.addr %s198, 8
      %s200 = scalar_lea.vmem %s1, %s199
      %p201 = scmp.lt.s32.totalorder %s14, 3
      %s202 = scalar_select %p201, %s14, 3
      %s203 = smul.addr %s202, 8
      %s204 = smul.addr %s203, 8
      %s205 = scalar_lea.vmem %s2, %s204
      %p206 = scmp.lt.s32.totalorder %s14, 3
      %s207 = scalar_select %p206, %s14, 3
      %s208 = smul.addr %s207, 8
      %s209 = smul.addr %s208, 4
      %s210 = scalar_lea.vmem %s3, %s209
      %v212 = vld [vmem:[%s195] sm:$0xff]
      %v213 = vld [vmem:[%s195 + $0x8] sm:$0xff]
      %v214 = vld [vmem:[%s195 + $0x10] sm:$0xff]
      %v215 = vld [vmem:[%s195 + $0x18] sm:$0xff]
      %v216 = vld [vmem:[%s195 + $0x20] sm:$0xff]
      %v217 = vld [vmem:[%s195 + $0x28] sm:$0xff]
      %v218 = vld [vmem:[%s195 + $0x30] sm:$0xff]
      %v219 = vld [vmem:[%s195 + $0x38] sm:$0xff]
      %v220 = vpack.c.bf16 %v213, %v212
      %v221 = vpack.c.bf16 %v215, %v214
      %v222 = vpack.c.bf16 %v217, %v216
      %v223 = vpack.c.bf16 %v219, %v218
      %v224 = vld [vmem:[%s200] sm:$0xff]
      %v225 = vld [vmem:[%s200 + $0x8] sm:$0xff]
      %v226 = vld [vmem:[%s200 + $0x10] sm:$0xff]
      %v227 = vld [vmem:[%s200 + $0x18] sm:$0xff]
      %v228 = vld [vmem:[%s200 + $0x20] sm:$0xff]
      %v229 = vld [vmem:[%s200 + $0x28] sm:$0xff]
      %v230 = vld [vmem:[%s200 + $0x30] sm:$0xff]
      %v231 = vld [vmem:[%s200 + $0x38] sm:$0xff]
      %v232 = vpack.c.bf16 %v225, %v224
      %v233 = vpack.c.bf16 %v227, %v226
      %v234 = vpack.c.bf16 %v229, %v228
      %v235 = vpack.c.bf16 %v231, %v230
      %v236 = vld [vmem:[%s205] sm:$0xff]
      %v237 = vld [vmem:[%s205 + $0x8] sm:$0xff]
      %v238 = vld [vmem:[%s205 + $0x10] sm:$0xff]
      %v239 = vld [vmem:[%s205 + $0x18] sm:$0xff]
      %v240 = vld [vmem:[%s205 + $0x20] sm:$0xff]
      %v241 = vld [vmem:[%s205 + $0x28] sm:$0xff]
      %v242 = vld [vmem:[%s205 + $0x30] sm:$0xff]
      %v243 = vld [vmem:[%s205 + $0x38] sm:$0xff]
      %v244 = vpack.c.bf16 %v237, %v236
      %v245 = vpack.c.bf16 %v239, %v238
      %v246 = vpack.c.bf16 %v241, %v240
      %v247 = vpack.c.bf16 %v243, %v242
      %vm248 = vcmask 130048
      %v250 = vsel %vm248, %v220, 0
      %v253 = vsel %vm248, %v221, 0
      %v256 = vsel %vm248, %v222, 0
      %v259 = vsel %vm248, %v223, 0
      %v262 = vsel %vm248, %v232, 0
      %v265 = vsel %vm248, %v233, 0
      %v268 = vsel %vm248, %v234, 0
      %v271 = vsel %vm248, %v235, 0
      %273 = vmatprep.subr.bf16.mxu0 0
      %274 = vmatpush1.bf16.xpose.msra.mxu0 %v262
      %275 = vmatprep.subr.bf16.mxu0 0
      %276 = vmatpush1.bf16.xpose.msra.mxu0 %v265
      %277 = vmatprep.subr.bf16.mxu0 0
      %278 = vmatpush1.bf16.xpose.msra.mxu0 %v268
      %279 = vmatprep.subr.bf16.mxu0 0
      %280 = vmatpush1.bf16.xpose.msra.mxu0 %v271
      %281 = vmatprep.subr.bf16.mxu0 0
      %282 = vmatpush1.bf16.xpose.msra.mxu0 0
      %283 = vmatprep.subr.bf16.mxu0 0
      %284 = vmatpush1.bf16.xpose.msra.mxu0 0
      %285 = vmatprep.subr.bf16.mxu0 0
      %286 = vmatpush1.bf16.xpose.msra.mxu0 0
      %287 = vmatprep.subr.bf16.mxu0 0
      %288 = vmatpush1.bf16.xpose.msra.mxu0 0
      %289 = vmatprep.subr.bf16.mxu0 0
      %290 = vmatpush1.bf16.xpose.msra.mxu0 0
      %291 = vmatprep.subr.bf16.mxu0 0
      %292 = vmatpush1.bf16.xpose.msra.mxu0 0
      %293 = vmatprep.subr.bf16.mxu0 0
      %294 = vmatpush1.bf16.xpose.msra.mxu0 0
      %295 = vmatprep.subr.bf16.mxu0 0
      %296 = vmatpush1.bf16.xpose.msra.mxu0 0
      %297 = vmatprep.subr.bf16.mxu0 0
      %298 = vmatpush1.bf16.xpose.msra.mxu0 0
      %299 = vmatprep.subr.bf16.mxu0 0
      %300 = vmatpush1.bf16.xpose.msra.mxu0 0
      %301 = vmatprep.subr.bf16.mxu0 0
      %302 = vmatpush1.bf16.xpose.msra.mxu0 0
      %303 = vmatprep.subr.bf16.mxu0 0
      %304 = vmatpush1.bf16.xpose.msra.mxu0 0
      %305 = vmatprep.mubr.bf16.mxu0 0
      %306 = vmatmul.mubr.bf16.gmra.mrb[0].mxu0 %v250
      %v307 = vpop.f32.mrb[0].mxu0
      %v308 = vadd.f32 0.0, %v307
      %v309 = vpop.f32.mrb[0].mxu0
      %v310 = vpop.f32.mrb[0].mxu0
      %v311 = vadd.f32 0.0, %v310
      %v312 = vpop.f32.mrb[0].mxu0
      %313 = vmatprep.mubr.bf16.mxu0 0
      %314 = vmatmul.mubr.bf16.gmra.mrb[0].mxu0 %v253
      %v315 = vpop.f32.mrb[0].mxu0
      %v316 = vadd.f32 0.0, %v315
      %v317 = vpop.f32.mrb[0].mxu0
      %v318 = vpop.f32.mrb[0].mxu0
      %v319 = vadd.f32 0.0, %v318
      %v320 = vpop.f32.mrb[0].mxu0
      %321 = vmatprep.mubr.bf16.mxu0 0
      %322 = vmatmul.mubr.bf16.gmra.mrb[0].mxu0 %v256
      %v323 = vpop.f32.mrb[0].mxu0
      %v324 = vadd.f32 0.0, %v323
      %v325 = vpop.f32.mrb[0].mxu0
      %v326 = vpop.f32.mrb[0].mxu0
      %v327 = vadd.f32 0.0, %v326
      %v328 = vpop.f32.mrb[0].mxu0
      %329 = vmatprep.mubr.bf16.mxu0 0
      %330 = vmatmul.mubr.bf16.gmra.mrb[0].mxu0 %v259
      %v331 = vpop.f32.mrb[0].mxu0
      %v332 = vadd.f32 0.0, %v331
      %v333 = vpop.f32.mrb[0].mxu0
      %v334 = vpop.f32.mrb[0].mxu0
      %v335 = vadd.f32 0.0, %v334
      %v336 = vpop.f32.mrb[0].mxu0
      %337 = vdwg.mxu0
      %v338 = vmul.f32 %v308, 0.25
      %v339 = vmul.f32 %v311, 0.25
      %v340 = vmul.f32 %v316, 0.25
      %v341 = vmul.f32 %v319, 0.25
      %v342 = vmul.f32 %v324, 0.25
      %v343 = vmul.f32 %v327, 0.25
      %v344 = vmul.f32 %v332, 0.25
      %v345 = vmul.f32 %v335, 0.25
      %vm346 = vcmask 523264
      %v347 = vsel %vm346, %v338, -inf
      %348 = vmax.xlane.f32.xlu0 %v347
      %v349 = vpop.xlane.xlu0 %348
      %v350 = vsel %vm346, %v339, -inf
      %351 = vmax.xlane.f32.xlu0 %v350
      %v352 = vpop.xlane.xlu0 %351
      %v353 = vsel %vm346, %v340, -inf
      %354 = vmax.xlane.f32.xlu0 %v353
      %v355 = vpop.xlane.xlu0 %354
      %v356 = vsel %vm346, %v341, -inf
      %357 = vmax.xlane.f32.xlu0 %v356
      %v358 = vpop.xlane.xlu0 %357
      %v359 = vsel %vm346, %v342, -inf
      %360 = vmax.xlane.f32.xlu0 %v359
      %v361 = vpop.xlane.xlu0 %360
      %v362 = vsel %vm346, %v343, -inf
      %363 = vmax.xlane.f32.xlu0 %v362
      %v364 = vpop.xlane.xlu0 %363
      %v365 = vsel %vm346, %v344, -inf
      %366 = vmax.xlane.f32.xlu0 %v365
      %v367 = vpop.xlane.xlu0 %366
      %v368 = vsel %vm346, %v345, -inf
      %369 = vmax.xlane.f32.xlu0 %v368
      %v370 = vpop.xlane.xlu0 %369
      %v371 = vsub.f32 %v338, %v349
      %v372 = vsub.f32 %v339, %v352
      %v373 = vsub.f32 %v340, %v355
      %v374 = vsub.f32 %v341, %v358
      %v375 = vsub.f32 %v342, %v361
      %v376 = vsub.f32 %v343, %v364
      %v377 = vsub.f32 %v344, %v367
      %v378 = vsub.f32 %v345, %v370
      %v379 = vmul.f32 %v371, 1.442695
      %v380 = vpow.pop %v379
      %v381 = vmul.f32 %v372, 1.442695
      %v382 = vpow.pop %v381
      %v383 = vmul.f32 %v373, 1.442695
      %v384 = vpow.pop %v383
      %v385 = vmul.f32 %v374, 1.442695
      %v386 = vpow.pop %v385
      %v387 = vmul.f32 %v375, 1.442695
      %v388 = vpow.pop %v387
      %v389 = vmul.f32 %v376, 1.442695
      %v390 = vpow.pop %v389
      %v391 = vmul.f32 %v377, 1.442695
      %v392 = vpow.pop %v391
      %v393 = vmul.f32 %v378, 1.442695
      %v394 = vpow.pop %v393
      %v395 = vsel %vm346, %v380, 0.0
      %396 = vadd.xlane.f32.xlu0 %v395
      %v397 = vpop.xlane.xlu0 %396
      %v398 = vsel %vm346, %v382, 0.0
      %399 = vadd.xlane.f32.xlu0 %v398
      %v400 = vpop.xlane.xlu0 %399
      %v401 = vsel %vm346, %v384, 0.0
      %402 = vadd.xlane.f32.xlu0 %v401
      %v403 = vpop.xlane.xlu0 %402
      %v404 = vsel %vm346, %v386, 0.0
      %405 = vadd.xlane.f32.xlu0 %v404
      %v406 = vpop.xlane.xlu0 %405
      %v407 = vsel %vm346, %v388, 0.0
      %408 = vadd.xlane.f32.xlu0 %v407
      %v409 = vpop.xlane.xlu0 %408
      %v410 = vsel %vm346, %v390, 0.0
      %411 = vadd.xlane.f32.xlu0 %v410
      %v412 = vpop.xlane.xlu0 %411
      %v413 = vsel %vm346, %v392, 0.0
      %414 = vadd.xlane.f32.xlu0 %v413
      %v415 = vpop.xlane.xlu0 %414
      %v416 = vsel %vm346, %v394, 0.0
      %417 = vadd.xlane.f32.xlu0 %v416
      %v418 = vpop.xlane.xlu0 %417
      %v419 = vrcp.pop %v397
      %v420 = vrcp.pop %v400
      %v421 = vrcp.pop %v403
      %v422 = vrcp.pop %v406
      %v423 = vrcp.pop %v409
      %v424 = vrcp.pop %v412
      %v425 = vrcp.pop %v415
      %v426 = vrcp.pop %v418
      %v427 = vmul.f32 %v380, %v419
      %v428 = vmul.f32 %v382, %v420
      %v429 = vmul.f32 %v384, %v421
      %v430 = vmul.f32 %v386, %v422
      %v431 = vmul.f32 %v388, %v423
      %v432 = vmul.f32 %v390, %v424
      %v433 = vmul.f32 %v392, %v425
      %v434 = vmul.f32 %v394, %v426
      %v435 = vpack.c.bf16 %v428, %v427
      %v436 = vpack.c.bf16 %v430, %v429
      %v437 = vpack.c.bf16 %v432, %v431
      %v438 = vpack.c.bf16 %v434, %v433
      %v440 = vsel %vm346, %v435, 0
      %v443 = vsel %vm346, %v436, 0
      %v446 = vsel %vm346, %v437, 0
      %v449 = vsel %vm346, %v438, 0
      %451 = vmatprep.subr.bf16.mxu0 0
      %452 = vmatpush1.bf16.msra.mxu0 %v244
      %453 = vmatprep.subr.bf16.mxu0 0
      %454 = vmatpush1.bf16.msra.mxu0 %v245
      %455 = vmatprep.subr.bf16.mxu0 0
      %456 = vmatpush1.bf16.msra.mxu0 %v246
      %457 = vmatprep.subr.bf16.mxu0 0
      %458 = vmatpush1.bf16.msra.mxu0 %v247
      %459 = vmatprep.subr.bf16.mxu0 0
      %460 = vmatpush1.bf16.msra.mxu0 0
      %461 = vmatprep.subr.bf16.mxu0 0
      %462 = vmatpush1.bf16.msra.mxu0 0
      %463 = vmatprep.subr.bf16.mxu0 0
      %464 = vmatpush1.bf16.msra.mxu0 0
      %465 = vmatprep.subr.bf16.mxu0 0
      %466 = vmatpush1.bf16.msra.mxu0 0
      %467 = vmatprep.subr.bf16.mxu0 0
      %468 = vmatpush1.bf16.msra.mxu0 0
      %469 = vmatprep.subr.bf16.mxu0 0
      %470 = vmatpush1.bf16.msra.mxu0 0
      %471 = vmatprep.subr.bf16.mxu0 0
      %472 = vmatpush1.bf16.msra.mxu0 0
      %473 = vmatprep.subr.bf16.mxu0 0
      %474 = vmatpush1.bf16.msra.mxu0 0
      %475 = vmatprep.subr.bf16.mxu0 0
      %476 = vmatpush1.bf16.msra.mxu0 0
      %477 = vmatprep.subr.bf16.mxu0 0
      %478 = vmatpush1.bf16.msra.mxu0 0
      %479 = vmatprep.subr.bf16.mxu0 0
      %480 = vmatpush1.bf16.msra.mxu0 0
      %481 = vmatprep.subr.bf16.mxu0 0
      %482 = vmatpush1.bf16.msra.mxu0 0
      %483 = vmatprep.mubr.bf16.mxu0 0
      %484 = vmatmul.mubr.bf16.gmra.mrb[0].mxu0 %v440
      %v485 = vpop.f32.mrb[0].mxu0
      %v486 = vadd.f32 0.0, %v485
      %v487 = vpop.f32.mrb[0].mxu0
      %v488 = vpop.f32.mrb[0].mxu0
      %v489 = vadd.f32 0.0, %v488
      %v490 = vpop.f32.mrb[0].mxu0
      %491 = vmatprep.mubr.bf16.mxu0 0
      %492 = vmatmul.mubr.bf16.gmra.mrb[0].mxu0 %v443
      %v493 = vpop.f32.mrb[0].mxu0
      %v494 = vadd.f32 0.0, %v493
      %v495 = vpop.f32.mrb[0].mxu0
      %v496 = vpop.f32.mrb[0].mxu0
      %v497 = vadd.f32 0.0, %v496
      %v498 = vpop.f32.mrb[0].mxu0
      %499 = vmatprep.mubr.bf16.mxu0 0
      %500 = vmatmul.mubr.bf16.gmra.mrb[0].mxu0 %v446
      %v501 = vpop.f32.mrb[0].mxu0
      %v502 = vadd.f32 0.0, %v501
      %v503 = vpop.f32.mrb[0].mxu0
      %v504 = vpop.f32.mrb[0].mxu0
      %v505 = vadd.f32 0.0, %v504
      %v506 = vpop.f32.mrb[0].mxu0
      %507 = vmatprep.mubr.bf16.mxu0 0
      %508 = vmatmul.mubr.bf16.gmra.mrb[0].mxu0 %v449
      %v509 = vpop.f32.mrb[0].mxu0
      %v510 = vadd.f32 0.0, %v509
      %v511 = vpop.f32.mrb[0].mxu0
      %v512 = vpop.f32.mrb[0].mxu0
      %v513 = vadd.f32 0.0, %v512
      %v514 = vpop.f32.mrb[0].mxu0
      %515 = vdwg.mxu0
      %v516 = vpack.c.bf16 %v489, %v486
      %v517 = vpack.c.bf16 %v497, %v494
      %v518 = vpack.c.bf16 %v505, %v502
      %v519 = vpack.c.bf16 %v513, %v510
      %v524 = vunpack.c.l.b16 %v516
      %v525 = vunpack.c.h.b16 %v516
      %v526 = vunpack.c.l.b16 %v517
      %v527 = vunpack.c.h.b16 %v517
      %v528 = vunpack.c.l.b16 %v518
      %v529 = vunpack.c.h.b16 %v518
      %v530 = vunpack.c.l.b16 %v519
      %v531 = vunpack.c.h.b16 %v519
      %v532 = vpack.c.b16 %v524, %v524
      %v533 = vpack.c.b16 %v525, %v525
      %v534 = vpack.c.b16 %v526, %v526
      %v535 = vpack.c.b16 %v527, %v527
      %v536 = vpack.c.b16 %v528, %v528
      %v537 = vpack.c.b16 %v529, %v529
      %v538 = vpack.c.b16 %v530, %v530
      %v539 = vpack.c.b16 %v531, %v531
      %vm548 = vcmask 125952
      %549 = vst.msk [vmem:[%s210] sm:$0xf] %vm548, %v532
      %550 = vst.msk [vmem:[%s210 + $0x4] sm:$0xf] %vm548, %v533
      %551 = vst.msk [vmem:[%s210 + $0x8] sm:$0xf] %vm548, %v534
      %552 = vst.msk [vmem:[%s210 + $0xc] sm:$0xf] %vm548, %v535
      %553 = vst.msk [vmem:[%s210 + $0x10] sm:$0xf] %vm548, %v536
      %554 = vst.msk [vmem:[%s210 + $0x14] sm:$0xf] %vm548, %v537
      %555 = vst.msk [vmem:[%s210 + $0x18] sm:$0xf] %vm548, %v538
      %556 = vst.msk [vmem:[%s210 + $0x1c] sm:$0xf] %vm548, %v539
      %p557 = scmp.lt.s32.totalorder %s14, 3
      %s558 = scalar_select %p557, %s14, 3
      %s559 = smul.addr %s558, 8
      %s560 = smul.addr %s559, 4
      %s561 = scalar_lea.vmem %s3, %s560
      // Predicated region
      $region33: #{block_forward.7} parent=31 // pred_check
        %p562 = pneg %p110
      $region34: #{block_forward.7} parent=31 // pred_check_branch
        %564 = sbr.rel (%p562) target = $region36
      $region35: #{block_forward.7} parent=31 // pred_region
        _
      $region36: #{block_forward.7} parent=31 // pred_fallthru
        _
    $region32: #{block_forward.7} parent=5 // pred_fallthru
      _
    %p565 = scmp.le.s32.totalorder 2, %s9
    // Predicated region
    $region37: #{block_forward.7} parent=5 // pred_check
      %p566 = pneg %p565
    $region38: #{block_forward.7} parent=5 // pred_check_branch
      %568 = sbr.rel (%p566) target = $region40
    $region39: #{block_forward.7} parent=5 // pred_region
      %s569 = ssub.s32 %s9, 2
      // Predicated region
      $region41: #{block_forward.7} parent=39 // pred_check
        %p570 = pneg %p116
      $region42: #{block_forward.7} parent=39 // pred_check_branch
        %572 = sbr.rel (%p570) target = $region44
      $region43: #{block_forward.7} parent=39 // pred_region
        %p573 = scmp.lt.s32.totalorder %s15, 3
        %s574 = scalar_select %p573, %s15, 3
        %s575 = smul.addr %s574, 8
        %s576 = smul.addr %s575, 4
        %s577 = scalar_lea.vmem %s3, %s576
      $region44: #{block_forward.7} parent=39 // pred_fallthru
        _
    $region40: #{block_forward.7} parent=5 // pred_fallthru
      _
  $region6: #{block_forward.7} parent=0 // loop_footer
    %s13 = sadd.s32 1, %s9
  $region7: #{block_forward.7} parent=0 // loop_footer_branch
    %8 = sbr.rel target = $region3
  $region8: #{block_forward.7} parent=0 // loop_exit
    _

// kernel: block_forward.6
$region0: #{block_forward.6}
  #allocation0 [shape = 'u32[]', space=smem, size = 0x4, offset = 0x4, fixed_abs, tag = 'smem constant byte address 0x4 - core index']
  #allocation1 [shape = 'u32[144,128]{1,0:T(1,128)}', space=vmem, size = 0x12000, scoped, tag = 'internal scratch']
  %s0 = inlined_call_operand.vmem [shape: f32[128,32], index: 0, kind: input, shape index: {}]
  %s1 = inlined_call_operand.vmem [shape: f32[1,32], index: 1, kind: input, shape index: {}]
  %s2 = inlined_call_operand.vmem [shape: f32[1,32], index: 2, kind: input, shape index: {}]
  %s3 = inlined_call_operand.vmem [shape: bf16[32,96], index: 3, kind: input, shape index: {}]
  %s4 = inlined_call_operand.vmem [shape: f32[1,96], index: 4, kind: input, shape index: {}]
  %s5 = inlined_call_operand.vmem [shape: f32[128,96], index: 5, kind: output, shape index: {}]
  %s6 = sld [smem:[#allocation0]]
  $region53: #{block_forward.6} parent=0
    _
  %s8 = ssub.s32 1, %s6
  %s9 = scalar_select 0, %s8, %s6
  loop: start=0, step=1, limit=4
  $region2: #{block_forward.6} parent=0 // loop_pre_header
    _
  $region3: #{block_forward.6} parent=0 // loop_header
    %s11 = sphi 0, %s15
    %p12 = scmp.ge.s32.totalorder %s11, 4
    %s21 = sphi 0, %s23
    %s24 = sphi 0, %s21
    %s25 = sphi 0, %s24
    %s41 = sphi 0, %s25
    %s45 = sphi 0, %s45
    %s47 = sphi 0, %s45
    %s48 = sphi 0, %s47
    %s62 = sphi 0, %s48
    %s66 = sphi 0, %s66
    %s68 = sphi 0, %s66
    %s69 = sphi 0, %s68
    %s83 = sphi 0, %s69
    %s87 = sphi 0, %s87
    %s89 = sphi 0, %s87
    %s90 = sphi 0, %s89
    %s104 = sphi 0, %s90
    %s108 = sphi 0, %s108
    %s110 = sphi 0, %s108
    %s111 = sphi 0, %s110
    %s125 = sphi 0, %s111
    %s131 = sphi 0, %s133
    %s134 = sphi 0, %s131
    %s135 = sphi 0, %s134
    %s151 = sphi 0, %s135
  $region4: #{block_forward.6} parent=0 // loop_header_branch
    %14 = sbr.rel (%p12) target = $region8
  $region5: #{block_forward.6} parent=0 // loop_body
    %s16 = ssub.s32 %s11, 1
    %s17 = ssub.s32 %s11, 2
    %s18 = sadd.s32 %s11, 1
    %s19 = ssub.s32 %s11, %s18
    %p20 = scmp.eq.s32.totalorder %s19, 0
    %s22 = sadd.s32 %s21, 1
    %s23 = scalar_select %p20, %s21, %s22
    %p26 = pneg %p20
    %p27 = scmp.eq.s32.totalorder %s11, 1
    %p28 = por %p26, %p27
    %p29 = scmp.ne.s32.totalorder %s21, %s24
    %p30 = scmp.eq.s32.totalorder %s11, 0
    %p31 = por %p29, %p30
    %p32 = scmp.ne.s32.totalorder %s21, %s24
    %p33 = scmp.eq.s32.totalorder %s16, 1
    %p34 = por %p32, %p33
    %p35 = scmp.ne.s32.totalorder %s24, %s25
    %p36 = scmp.eq.s32.totalorder %s16, 0
    %p37 = por %p35, %p36
    %p38 = scmp.ne.s32.totalorder %s24, %s25
    %p39 = scmp.eq.s32.totalorder %s17, 1
    %p40 = por %p38, %p39
    %p42 = scmp.ne.s32.totalorder %s25, %s41
    %p43 = scmp.eq.s32.totalorder %s17, 0
    %p44 = por %p42, %p43
    %s46 = sadd.s32 %s45, 1
    %p49 = scmp.eq.s32.totalorder %s11, 1
    %p50 = scmp.ne.s32.totalorder %s45, %s47
    %p51 = scmp.eq.s32.totalorder %s11, 0
    %p52 = por %p50, %p51
    %p53 = scmp.ne.s32.totalorder %s45, %s47
    %p54 = scmp.eq.s32.totalorder %s16, 1
    %p55 = por %p53, %p54
    %p56 = scmp.ne.s32.totalorder %s47, %s48
    %p57 = scmp.eq.s32.totalorder %s16, 0
    %p58 = por %p56, %p57
    %p59 = scmp.ne.s32.totalorder %s47, %s48
    %p60 = scmp.eq.s32.totalorder %s17, 1
    %p61 = por %p59, %p60
    %p63 = scmp.ne.s32.totalorder %s48, %s62
    %p64 = scmp.eq.s32.totalorder %s17, 0
    %p65 = por %p63, %p64
    %s67 = sadd.s32 %s66, 1
    %p70 = scmp.eq.s32.totalorder %s11, 1
    %p71 = scmp.ne.s32.totalorder %s66, %s68
    %p72 = scmp.eq.s32.totalorder %s11, 0
    %p73 = por %p71, %p72
    %p74 = scmp.ne.s32.totalorder %s66, %s68
    %p75 = scmp.eq.s32.totalorder %s16, 1
    %p76 = por %p74, %p75
    %p77 = scmp.ne.s32.totalorder %s68, %s69
    %p78 = scmp.eq.s32.totalorder %s16, 0
    %p79 = por %p77, %p78
    %p80 = scmp.ne.s32.totalorder %s68, %s69
    %p81 = scmp.eq.s32.totalorder %s17, 1
    %p82 = por %p80, %p81
    %p84 = scmp.ne.s32.totalorder %s69, %s83
    %p85 = scmp.eq.s32.totalorder %s17, 0
    %p86 = por %p84, %p85
    %s88 = sadd.s32 %s87, 1
    %p91 = scmp.eq.s32.totalorder %s11, 1
    %p92 = scmp.ne.s32.totalorder %s87, %s89
    %p93 = scmp.eq.s32.totalorder %s11, 0
    %p94 = por %p92, %p93
    %p95 = scmp.ne.s32.totalorder %s87, %s89
    %p96 = scmp.eq.s32.totalorder %s16, 1
    %p97 = por %p95, %p96
    %p98 = scmp.ne.s32.totalorder %s89, %s90
    %p99 = scmp.eq.s32.totalorder %s16, 0
    %p100 = por %p98, %p99
    %p101 = scmp.ne.s32.totalorder %s89, %s90
    %p102 = scmp.eq.s32.totalorder %s17, 1
    %p103 = por %p101, %p102
    %p105 = scmp.ne.s32.totalorder %s90, %s104
    %p106 = scmp.eq.s32.totalorder %s17, 0
    %p107 = por %p105, %p106
    %s109 = sadd.s32 %s108, 1
    %p112 = scmp.eq.s32.totalorder %s11, 1
    %p113 = scmp.ne.s32.totalorder %s108, %s110
    %p114 = scmp.eq.s32.totalorder %s11, 0
    %p115 = por %p113, %p114
    %p116 = scmp.ne.s32.totalorder %s108, %s110
    %p117 = scmp.eq.s32.totalorder %s16, 1
    %p118 = por %p116, %p117
    %p119 = scmp.ne.s32.totalorder %s110, %s111
    %p120 = scmp.eq.s32.totalorder %s16, 0
    %p121 = por %p119, %p120
    %p122 = scmp.ne.s32.totalorder %s110, %s111
    %p123 = scmp.eq.s32.totalorder %s17, 1
    %p124 = por %p122, %p123
    %p126 = scmp.ne.s32.totalorder %s111, %s125
    %p127 = scmp.eq.s32.totalorder %s17, 0
    %p128 = por %p126, %p127
    %s129 = ssub.s32 %s11, %s18
    %p130 = scmp.eq.s32.totalorder %s129, 0
    %s132 = sadd.s32 %s131, 1
    %s133 = scalar_select %p130, %s131, %s132
    %p136 = pneg %p130
    %p137 = scmp.eq.s32.totalorder %s11, 1
    %p138 = por %p136, %p137
    %p139 = scmp.ne.s32.totalorder %s131, %s134
    %p140 = scmp.eq.s32.totalorder %s11, 0
    %p141 = por %p139, %p140
    %p142 = scmp.ne.s32.totalorder %s131, %s134
    %p143 = scmp.eq.s32.totalorder %s16, 1
    %p144 = por %p142, %p143
    %p145 = scmp.ne.s32.totalorder %s134, %s135
    %p146 = scmp.eq.s32.totalorder %s16, 0
    %p147 = por %p145, %p146
    %p148 = scmp.ne.s32.totalorder %s134, %s135
    %p149 = scmp.eq.s32.totalorder %s17, 1
    %p150 = por %p148, %p149
    %p152 = scmp.ne.s32.totalorder %s135, %s151
    %p153 = scmp.eq.s32.totalorder %s17, 0
    %p154 = por %p152, %p153
    %p155 = scmp.le.s32.totalorder 1, %s11
    %p156 = scmp.lt.s32.totalorder %s11, 3
    %p157 = pnand %p155, %p156
    %p158 = pneg %p157
    // Predicated region
    $region9: #{block_forward.6} parent=5 // pred_check
      _
    $region10: #{block_forward.6} parent=5 // pred_check_branch
      %160 = sbr.rel (%p157) target = $region12
    $region11: #{block_forward.6} parent=5 // pred_region
      %s161 = ssub.s32 %s11, 1
      // Predicated region
      $region13: #{block_forward.6} parent=11 // pred_check
        %p162 = pneg %p58
      $region14: #{block_forward.6} parent=11 // pred_check_branch
        %164 = sbr.rel (%p162) target = $region16
      $region15: #{block_forward.6} parent=11 // pred_region
        _
      $region16: #{block_forward.6} parent=11 // pred_fallthru
        _
      // Predicated region
      $region17: #{block_forward.6} parent=11 // pred_check
        %p165 = pneg %p79
      $region18: #{block_forward.6} parent=11 // pred_check_branch
        %167 = sbr.rel (%p165) target = $region20
      $region19: #{block_forward.6} parent=11 // pred_region
        _
      $region20: #{block_forward.6} parent=11 // pred_fallthru
        _
      // Predicated region
      $region21: #{block_forward.6} parent=11 // pred_check
        %p168 = pneg %p100
      $region22: #{block_forward.6} parent=11 // pred_check_branch
        %170 = sbr.rel (%p168) target = $region24
      $region23: #{block_forward.6} parent=11 // pred_region
        _
      $region24: #{block_forward.6} parent=11 // pred_fallthru
        _
      // Predicated region
      $region25: #{block_forward.6} parent=11 // pred_check
        %p171 = pneg %p121
      $region26: #{block_forward.6} parent=11 // pred_check_branch
        %173 = sbr.rel (%p171) target = $region28
      $region27: #{block_forward.6} parent=11 // pred_region
        _
      $region28: #{block_forward.6} parent=11 // pred_fallthru
        _
    $region12: #{block_forward.6} parent=5 // pred_fallthru
      _
    %p174 = scmp.lt.s32.totalorder %s11, 2
    // Predicated region
    $region29: #{block_forward.6} parent=5 // pred_check
      %p175 = pneg %p174
    $region30: #{block_forward.6} parent=5 // pred_check_branch
      %177 = sbr.rel (%p175) target = $region32
    $region31: #{block_forward.6} parent=5 // pred_region
      // Predicated region
      $region33: #{block_forward.6} parent=31 // pred_check
        %p178 = pneg %p31
      $region34: #{block_forward.6} parent=31 // pred_check_branch
        %180 = sbr.rel (%p178) target = $region36
      $region35: #{block_forward.6} parent=31 // pred_region
        %s181 = smul.u32 8, %s11
        %p182 = scmp.lt.s32.totalorder %s181, 15
        %s183 = scalar_select %p182, %s181, 15
        %s184 = smul.addr %s183, 8
        %s185 = scalar_lea.vmem %s0, %s184
        %s186 = smul.u32 8, %s11
      $region36: #{block_forward.6} parent=31 // pred_fallthru
        _
    $region32: #{block_forward.6} parent=5 // pred_fallthru
      _
    %p187 = scmp.le.s32.totalorder 1, %s11
    %p188 = scmp.lt.s32.totalorder %s11, 3
    %p189 = pnand %p187, %p188
    %p190 = pneg %p189
    // Predicated region
    $region37: #{block_forward.6} parent=5 // pred_check
      _
    $region38: #{block_forward.6} parent=5 // pred_check_branch
      %192 = sbr.rel (%p189) target = $region40
    $region39: #{block_forward.6} parent=5 // pred_region
      %s193 = ssub.s32 %s11, 1
      %s194 = smul.u32 8, %s16
      %p195 = scmp.lt.s32.totalorder %s194, 15
      %s196 = scalar_select %p195, %s194, 15
      %s197 = smul.addr %s196, 8
      %s198 = scalar_lea.vmem %s0, %s197
      %p199 = pneg %p37
      %p200 = pneg %p34
      %p201 = pneg %p58
      %p202 = pneg %p55
      %p203 = pneg %p79
      %p204 = pneg %p76
      %p205 = pneg %p100
      %p206 = pneg %p97
      %p207 = pneg %p121
      %p208 = pneg %p118
      %p209 = pneg %p147
      %p210 = pneg %p144
      %s211 = smul.u32 8, %s16
      %p212 = scmp.lt.s32.totalorder %s211, 15
      %s213 = scalar_select %p212, %s211, 15
      %s214 = smul.addr %s213, 8
      %s215 = scalar_lea.vmem %s5, %s214
      %s216 = smul.u32 8, %s16
      %p217 = scmp.lt.s32.totalorder %s216, 15
      %s218 = scalar_select %p217, %s216, 15
      %s219 = smul.addr %s218, 8
      %s220 = scalar_lea.vmem %s0, %s219
      %s221 = smul.u32 8, %s16
      %s222 = smul.u32 8, %s16
      %p223 = scmp.lt.s32.totalorder %s222, 15
      %s224 = scalar_select %p223, %s222, 15
      %s225 = smul.addr %s224, 8
      %s226 = scalar_lea.vmem %s5, %s225
      %s227 = smul.u32 8, %s16
      %v229 = vld [vmem:[%s220] sm:$0xff]
      %v230 = vld [vmem:[%s220 + $0x8] sm:$0xff]
      %v231 = vld [vmem:[%s220 + $0x10] sm:$0xff]
      %v232 = vld [vmem:[%s220 + $0x18] sm:$0xff]
      %v233 = vld [vmem:[%s220 + $0x20] sm:$0xff]
      %v234 = vld [vmem:[%s220 + $0x28] sm:$0xff]
      %v235 = vld [vmem:[%s220 + $0x30] sm:$0xff]
      %v236 = vld [vmem:[%s220 + $0x38] sm:$0xff]
      %v237 = vld [vmem:[%s1] sm:$0x1]
      %v238 = vld [vmem:[%s2] sm:$0x1]
      %vm239 = vcmask 261120
      %v240 = vsel %vm239, %v229, 0.0
      %241 = vadd.xlane.f32.xlu0 %v240
      %v242 = vpop.xlane.xlu0 %241
      %v243 = vsel %vm239, %v230, 0.0
      %244 = vadd.xlane.f32.xlu0 %v243
      %v245 = vpop.xlane.xlu0 %244
      %v246 = vsel %vm239, %v231, 0.0
      %247 = vadd.xlane.f32.xlu0 %v246
      %v248 = vpop.xlane.xlu0 %247
      %v249 = vsel %vm239, %v232, 0.0
      %250 = vadd.xlane.f32.xlu0 %v249
      %v251 = vpop.xlane.xlu0 %250
      %v252 = vsel %vm239, %v233, 0.0
      %253 = vadd.xlane.f32.xlu0 %v252
      %v254 = vpop.xlane.xlu0 %253
      %v255 = vsel %vm239, %v234, 0.0
      %256 = vadd.xlane.f32.xlu0 %v255
      %v257 = vpop.xlane.xlu0 %256
      %v258 = vsel %vm239, %v235, 0.0
      %259 = vadd.xlane.f32.xlu0 %v258
      %v260 = vpop.xlane.xlu0 %259
      %v261 = vsel %vm239, %v236, 0.0
      %262 = vadd.xlane.f32.xlu0 %v261
      %v263 = vpop.xlane.xlu0 %262
      %v264 = vrcp.pop 32.0
      %v265 = vmul.f32 %v242, %v264
      %v266 = vmul.f32 %v245, %v264
      %v267 = vmul.f32 %v248, %v264
      %v268 = vmul.f32 %v251, %v264
      %v269 = vmul.f32 %v254, %v264
      %v270 = vmul.f32 %v257, %v264
      %v271 = vmul.f32 %v260, %v264
      %v272 = vmul.f32 %v263, %v264
      %v273 = vsub.f32 %v229, %v265
      %v274 = vsub.f32 %v230, %v266
      %v275 = vsub.f32 %v231, %v267
      %v276 = vsub.f32 %v232, %v268
      %v277 = vsub.f32 %v233, %v269
      %v278 = vsub.f32 %v234, %v270
      %v279 = vsub.f32 %v235, %v271
      %v280 = vsub.f32 %v236, %v272
      %v281 = vmul.f32 %v273, %v273
      %v282 = vmul.f32 %v274, %v274
      %v283 = vmul.f32 %v275, %v275
      %v284 = vmul.f32 %v276, %v276
      %v285 = vmul.f32 %v277, %v277
      %v286 = vmul.f32 %v278, %v278
      %v287 = vmul.f32 %v279, %v279
      %v288 = vmul.f32 %v280, %v280
      %v289 = vsel %vm239, %v281, 0.0
      %290 = vadd.xlane.f32.xlu0 %v289
      %v291 = vpop.xlane.xlu0 %290
      %v292 = vsel %vm239, %v282, 0.0
      %293 = vadd.xlane.f32.xlu0 %v292
      %v294 = vpop.xlane.xlu0 %293
      %v295 = vsel %vm239, %v283, 0.0
      %296 = vadd.xlane.f32.xlu0 %v295
      %v297 = vpop.xlane.xlu0 %296
      %v298 = vsel %vm239, %v284, 0.0
      %299 = vadd.xlane.f32.xlu0 %v298
      %v300 = vpop.xlane.xlu0 %299
      %v301 = vsel %vm239, %v285, 0.0
      %302 = vadd.xlane.f32.xlu0 %v301
      %v303 = vpop.xlane.xlu0 %302
      %v304 = vsel %vm239, %v286, 0.0
      %305 = vadd.xlane.f32.xlu0 %v304
      %v306 = vpop.xlane.xlu0 %305
      %v307 = vsel %vm239, %v287, 0.0
      %308 = vadd.xlane.f32.xlu0 %v307
      %v309 = vpop.xlane.xlu0 %308
      %v310 = vsel %vm239, %v288, 0.0
      %311 = vadd.xlane.f32.xlu0 %v310
      %v312 = vpop.xlane.xlu0 %311
      %v313 = vmul.f32 %v291, %v264
      %v314 = vmul.f32 %v294, %v264
      %v315 = vmul.f32 %v297, %v264
      %v316 = vmul.f32 %v300, %v264
      %v317 = vmul.f32 %v303, %v264
      %v318 = vmul.f32 %v306, %v264
      %v319 = vmul.f32 %v309, %v264
      %v320 = vmul.f32 %v312, %v264
      %v321 = vadd.f32 %v313, 1e-05
      %v322 = vadd.f32 %v314, 1e-05
      %v323 = vadd.f32 %v315, 1e-05
      %v324 = vadd.f32 %v316, 1e-05
      %v325 = vadd.f32 %v317, 1e-05
      %v326 = vadd.f32 %v318, 1e-05
      %v327 = vadd.f32 %v319, 1e-05
      %v328 = vadd.f32 %v320, 1e-05
      %v329 = vrsqrt.pop %v321
      %v330 = vrsqrt.pop %v322
      %v331 = vrsqrt.pop %v323
      %v332 = vrsqrt.pop %v324
      %v333 = vrsqrt.pop %v325
      %v334 = vrsqrt.pop %v326
      %v335 = vrsqrt.pop %v327
      %v336 = vrsqrt.pop %v328
      %v337 = vmul.f32 %v273, %v329
      %v338 = vmul.f32 %v274, %v330
      %v339 = vmul.f32 %v275, %v331
      %v340 = vmul.f32 %v276, %v332
      %v341 = vmul.f32 %v277, %v333
      %v342 = vmul.f32 %v278, %v334
      %v343 = vmul.f32 %v279, %v335
      %v344 = vmul.f32 %v280, %v336
      %v346 = vlaneseq
      %v347 = vshrl.u32 %v346, 7
      %v348 = vsub.s32 0, %v347
      %v349 = vrot.slane %v237, %v348
      %v351 = vmul.f32 %v337, %v349
      %v352 = vmul.f32 %v338, %v349
      %v353 = vmul.f32 %v339, %v349
      %v354 = vmul.f32 %v340, %v349
      %v355 = vmul.f32 %v341, %v349
      %v356 = vmul.f32 %v342, %v349
      %v357 = vmul.f32 %v343, %v349
      %v358 = vmul.f32 %v344, %v349
      %v360 = vlaneseq
      %v361 = vshrl.u32 %v360, 7
      %v362 = vsub.s32 0, %v361
      %v363 = vrot.slane %v238, %v362
      %v365 = vadd.f32 %v351, %v363
      %v366 = vadd.f32 %v352, %v363
      %v367 = vadd.f32 %v353, %v363
      %v368 = vadd.f32 %v354, %v363
      %v369 = vadd.f32 %v355, %v363
      %v370 = vadd.f32 %v356, %v363
      %v371 = vadd.f32 %v357, %v363
      %v372 = vadd.f32 %v358, %v363
      %v373 = vpack.c.bf16 %v366, %v365
      %v374 = vpack.c.bf16 %v368, %v367
      %v375 = vpack.c.bf16 %v370, %v369
      %v376 = vpack.c.bf16 %v372, %v371
      %v377 = vld [vmem:[%s3] sm:$0xf]
      %v378 = vld [vmem:[%s3 + $0x4] sm:$0xf]
      %v379 = vld [vmem:[%s3 + $0x8] sm:$0xf]
      %v380 = vld [vmem:[%s3 + $0xc] sm:$0xf]
      %v381 = vld [vmem:[%s4] sm:$0x1]
      %v383 = vlaneseq
      %v384 = vshrl.u32 %v383, 7
      %v385 = vsub.s32 0, %v384
      %v386 = vrot.slane %v381, %v385
      %v392 = vunpack.c.l.b16 %v377
      %v393 = vunpack.c.l.b16 %v378
      %v394 = vunpack.c.l.b16 %v379
      %v395 = vunpack.c.l.b16 %v380
      %v396 = vpack.c.b16 %v393, %v392
      %v397 = vpack.c.b16 %v395, %v394
      %v401 = vsel %vm239, %v373, 0
      %v404 = vsel %vm239, %v374, 0
      %v407 = vsel %vm239, %v375, 0
      %v410 = vsel %vm239, %v376, 0
      %412 = vmatprep.subr.bf16.mxu0 0
      %413 = vmatpush1.bf16.msra.mxu0 %v396
      %414 = vmatprep.subr.bf16.mxu0 0
      %415 = vmatpush1.bf16.msra.mxu0 %v397
      %416 = vmatprep.subr.bf16.mxu0 0
      %417 = vmatpush1.bf16.msra.mxu0 0
      %418 = vmatprep.subr.bf16.mxu0 0
      %419 = vmatpush1.bf16.msra.mxu0 0
      %420 = vmatprep.subr.bf16.mxu0 0
      %421 = vmatpush1.bf16.msra.mxu0 0
      %422 = vmatprep.subr.bf16.mxu0 0
      %423 = vmatpush1.bf16.msra.mxu0 0
      %424 = vmatprep.subr.bf16.mxu0 0
      %425 = vmatpush1.bf16.msra.mxu0 0
      %426 = vmatprep.subr.bf16.mxu0 0
      %427 = vmatpush1.bf16.msra.mxu0 0
      %428 = vmatprep.subr.bf16.mxu0 0
      %429 = vmatpush1.bf16.msra.mxu0 0
      %430 = vmatprep.subr.bf16.mxu0 0
      %431 = vmatpush1.bf16.msra.mxu0 0
      %432 = vmatprep.subr.bf16.mxu0 0
      %433 = vmatpush1.bf16.msra.mxu0 0
      %434 = vmatprep.subr.bf16.mxu0 0
      %435 = vmatpush1.bf16.msra.mxu0 0
      %436 = vmatprep.subr.bf16.mxu0 0
      %437 = vmatpush1.bf16.msra.mxu0 0
      %438 = vmatprep.subr.bf16.mxu0 0
      %439 = vmatpush1.bf16.msra.mxu0 0
      %440 = vmatprep.subr.bf16.mxu0 0
      %441 = vmatpush1.bf16.msra.mxu0 0
      %442 = vmatprep.subr.bf16.mxu0 0
      %443 = vmatpush1.bf16.msra.mxu0 0
      %444 = vmatprep.mubr.bf16.mxu0 0
      %445 = vmatmul.mubr.bf16.gmra.mrb[0].mxu0 %v401
      %v446 = vpop.f32.mrb[0].mxu0
      %v447 = vadd.f32 %v386, %v446
      %v448 = vpop.f32.mrb[0].mxu0
      %v449 = vpop.f32.mrb[0].mxu0
      %v450 = vadd.f32 %v386, %v449
      %v451 = vpop.f32.mrb[0].mxu0
      %452 = vmatprep.mubr.bf16.mxu0 0
      %453 = vmatmul.mubr.bf16.gmra.mrb[0].mxu0 %v404
      %v454 = vpop.f32.mrb[0].mxu0
      %v455 = vadd.f32 %v386, %v454
      %v456 = vpop.f32.mrb[0].mxu0
      %v457 = vpop.f32.mrb[0].mxu0
      %v458 = vadd.f32 %v386, %v457
      %v459 = vpop.f32.mrb[0].mxu0
      %460 = vmatprep.mubr.bf16.mxu0 0
      %461 = vmatmul.mubr.bf16.gmra.mrb[0].mxu0 %v407
      %v462 = vpop.f32.mrb[0].mxu0
      %v463 = vadd.f32 %v386, %v462
      %v464 = vpop.f32.mrb[0].mxu0
      %v465 = vpop.f32.mrb[0].mxu0
      %v466 = vadd.f32 %v386, %v465
      %v467 = vpop.f32.mrb[0].mxu0
      %468 = vmatprep.mubr.bf16.mxu0 0
      %469 = vmatmul.mubr.bf16.gmra.mrb[0].mxu0 %v410
      %v470 = vpop.f32.mrb[0].mxu0
      %v471 = vadd.f32 %v386, %v470
      %v472 = vpop.f32.mrb[0].mxu0
      %v473 = vpop.f32.mrb[0].mxu0
      %v474 = vadd.f32 %v386, %v473
      %v475 = vpop.f32.mrb[0].mxu0
      %476 = vdwg.mxu0
      %vm477 = vcmask 785408
      %478 = vst.msk [vmem:[%s226] sm:$0xff] %vm477, %v447
      %479 = vst.msk [vmem:[%s226 + $0x8] sm:$0xff] %vm477, %v450
      %480 = vst.msk [vmem:[%s226 + $0x10] sm:$0xff] %vm477, %v455
      %481 = vst.msk [vmem:[%s226 + $0x18] sm:$0xff] %vm477, %v458
      %482 = vst.msk [vmem:[%s226 + $0x20] sm:$0xff] %vm477, %v463
      %483 = vst.msk [vmem:[%s226 + $0x28] sm:$0xff] %vm477, %v466
      %484 = vst.msk [vmem:[%s226 + $0x30] sm:$0xff] %vm477, %v471
      %485 = vst.msk [vmem:[%s226 + $0x38] sm:$0xff] %vm477, %v474
      %s486 = smul.u32 8, %s16
      %p487 = scmp.lt.s32.totalorder %s486, 15
      %s488 = scalar_select %p487, %s486, 15
      %s489 = smul.addr %s488, 8
      %s490 = scalar_lea.vmem %s5, %s489
      // Predicated region
      $region41: #{block_forward.6} parent=39 // pred_check
        %p491 = pneg %p144
      $region42: #{block_forward.6} parent=39 // pred_check_branch
        %493 = sbr.rel (%p491) target = $region44
      $region43: #{block_forward.6} parent=39 // pred_region
        %s494 = smul.u32 8, %s16
      $region44: #{block_forward.6} parent=39 // pred_fallthru
        _
    $region40: #{block_forward.6} parent=5 // pred_fallthru
      _
    %p495 = scmp.le.s32.totalorder 2, %s11
    // Predicated region
    $region45: #{block_forward.6} parent=5 // pred_check
      %p496 = pneg %p495
    $region46: #{block_forward.6} parent=5 // pred_check_branch
      %498 = sbr.rel (%p496) target = $region48
    $region47: #{block_forward.6} parent=5 // pred_region
      %s499 = ssub.s32 %s11, 2
      // Predicated region
      $region49: #{block_forward.6} parent=47 // pred_check
        %p500 = pneg %p150
      $region50: #{block_forward.6} parent=47 // pred_check_branch
        %502 = sbr.rel (%p500) target = $region52
      $region51: #{block_forward.6} parent=47 // pred_region
        %s503 = smul.u32 8, %s17
        %p504 = scmp.lt.s32.totalorder %s503, 15
        %s505 = scalar_select %p504, %s503, 15
        %s506 = smul.addr %s505, 8
        %s507 = scalar_lea.vmem %s5, %s506
      $region52: #{block_forward.6} parent=47 // pred_fallthru
        _
    $region48: #{block_forward.6} parent=5 // pred_fallthru
      _
  $region6: #{block_forward.6} parent=0 // loop_footer
    %s15 = sadd.s32 1, %s11
  $region7: #{block_forward.6} parent=0 // loop_footer_branch
    %10 = sbr.rel target = $region3
  $region8: #{block_forward.6} parent=0 // loop_exit
    _

// kernel: block_forward.8
$region0: #{block_forward.8}
  #allocation0 [shape = 'u32[]', space=smem, size = 0x4, offset = 0x4, fixed_abs, tag = 'smem constant byte address 0x4 - core index']
  #allocation1 [shape = 'u32[144,128]{1,0:T(1,128)}', space=vmem, size = 0x12000, scoped, tag = 'internal scratch']
  %s0 = inlined_call_operand.vmem [shape: bf16[128,32], index: 0, kind: input, shape index: {}]
  %s1 = inlined_call_operand.vmem [shape: bf16[32,32], index: 1, kind: input, shape index: {}]
  %s2 = inlined_call_operand.vmem [shape: f32[1,32], index: 2, kind: input, shape index: {}]
  %s3 = inlined_call_operand.vmem [shape: f32[128,32], index: 3, kind: input, shape index: {}, may-alias: {3,4}]
  %s4 = inlined_call_operand.vmem [shape: f32[128,32], index: 4, kind: output, shape index: {}, may-alias: {3,4}]
  %s5 = sld [smem:[#allocation0]]
  $region49: #{block_forward.8} parent=0
    _
  %s7 = ssub.s32 1, %s5
  %s8 = scalar_select 0, %s7, %s5
  loop: start=0, step=1, limit=4
  $region2: #{block_forward.8} parent=0 // loop_pre_header
    _
  $region3: #{block_forward.8} parent=0 // loop_header
    %s10 = sphi 0, %s14
    %p11 = scmp.ge.s32.totalorder %s10, 4
    %s20 = sphi 0, %s22
    %s23 = sphi 0, %s20
    %s24 = sphi 0, %s23
    %s40 = sphi 0, %s24
    %s44 = sphi 0, %s44
    %s46 = sphi 0, %s44
    %s47 = sphi 0, %s46
    %s61 = sphi 0, %s47
    %s65 = sphi 0, %s65
    %s67 = sphi 0, %s65
    %s68 = sphi 0, %s67
    %s82 = sphi 0, %s68
    %s88 = sphi 0, %s90
    %s91 = sphi 0, %s88
    %s92 = sphi 0, %s91
    %s108 = sphi 0, %s92
    %s114 = sphi 0, %s116
    %s117 = sphi 0, %s114
    %s118 = sphi 0, %s117
    %s134 = sphi 0, %s118
  $region4: #{block_forward.8} parent=0 // loop_header_branch
    %13 = sbr.rel (%p11) target = $region8
  $region5: #{block_forward.8} parent=0 // loop_body
    %s15 = ssub.s32 %s10, 1
    %s16 = ssub.s32 %s10, 2
    %s17 = sadd.s32 %s10, 1
    %s18 = ssub.s32 %s10, %s17
    %p19 = scmp.eq.s32.totalorder %s18, 0
    %s21 = sadd.s32 %s20, 1
    %s22 = scalar_select %p19, %s20, %s21
    %p25 = pneg %p19
    %p26 = scmp.eq.s32.totalorder %s10, 1
    %p27 = por %p25, %p26
    %p28 = scmp.ne.s32.totalorder %s20, %s23
    %p29 = scmp.eq.s32.totalorder %s10, 0
    %p30 = por %p28, %p29
    %p31 = scmp.ne.s32.totalorder %s20, %s23
    %p32 = scmp.eq.s32.totalorder %s15, 1
    %p33 = por %p31, %p32
    %p34 = scmp.ne.s32.totalorder %s23, %s24
    %p35 = scmp.eq.s32.totalorder %s15, 0
    %p36 = por %p34, %p35
    %p37 = scmp.ne.s32.totalorder %s23, %s24
    %p38 = scmp.eq.s32.totalorder %s16, 1
    %p39 = por %p37, %p38
    %p41 = scmp.ne.s32.totalorder %s24, %s40
    %p42 = scmp.eq.s32.totalorder %s16, 0
    %p43 = por %p41, %p42
    %s45 = sadd.s32 %s44, 1
    %p48 = scmp.eq.s32.totalorder %s10, 1
    %p49 = scmp.ne.s32.totalorder %s44, %s46
    %p50 = scmp.eq.s32.totalorder %s10, 0
    %p51 = por %p49, %p50
    %p52 = scmp.ne.s32.totalorder %s44, %s46
    %p53 = scmp.eq.s32.totalorder %s15, 1
    %p54 = por %p52, %p53
    %p55 = scmp.ne.s32.totalorder %s46, %s47
    %p56 = scmp.eq.s32.totalorder %s15, 0
    %p57 = por %p55, %p56
    %p58 = scmp.ne.s32.totalorder %s46, %s47
    %p59 = scmp.eq.s32.totalorder %s16, 1
    %p60 = por %p58, %p59
    %p62 = scmp.ne.s32.totalorder %s47, %s61
    %p63 = scmp.eq.s32.totalorder %s16, 0
    %p64 = por %p62, %p63
    %s66 = sadd.s32 %s65, 1
    %p69 = scmp.eq.s32.totalorder %s10, 1
    %p70 = scmp.ne.s32.totalorder %s65, %s67
    %p71 = scmp.eq.s32.totalorder %s10, 0
    %p72 = por %p70, %p71
    %p73 = scmp.ne.s32.totalorder %s65, %s67
    %p74 = scmp.eq.s32.totalorder %s15, 1
    %p75 = por %p73, %p74
    %p76 = scmp.ne.s32.totalorder %s67, %s68
    %p77 = scmp.eq.s32.totalorder %s15, 0
    %p78 = por %p76, %p77
    %p79 = scmp.ne.s32.totalorder %s67, %s68
    %p80 = scmp.eq.s32.totalorder %s16, 1
    %p81 = por %p79, %p80
    %p83 = scmp.ne.s32.totalorder %s68, %s82
    %p84 = scmp.eq.s32.totalorder %s16, 0
    %p85 = por %p83, %p84
    %s86 = ssub.s32 %s10, %s17
    %p87 = scmp.eq.s32.totalorder %s86, 0
    %s89 = sadd.s32 %s88, 1
    %s90 = scalar_select %p87, %s88, %s89
    %p93 = pneg %p87
    %p94 = scmp.eq.s32.totalorder %s10, 1
    %p95 = por %p93, %p94
    %p96 = scmp.ne.s32.totalorder %s88, %s91
    %p97 = scmp.eq.s32.totalorder %s10, 0
    %p98 = por %p96, %p97
    %p99 = scmp.ne.s32.totalorder %s88, %s91
    %p100 = scmp.eq.s32.totalorder %s15, 1
    %p101 = por %p99, %p100
    %p102 = scmp.ne.s32.totalorder %s91, %s92
    %p103 = scmp.eq.s32.totalorder %s15, 0
    %p104 = por %p102, %p103
    %p105 = scmp.ne.s32.totalorder %s91, %s92
    %p106 = scmp.eq.s32.totalorder %s16, 1
    %p107 = por %p105, %p106
    %p109 = scmp.ne.s32.totalorder %s92, %s108
    %p110 = scmp.eq.s32.totalorder %s16, 0
    %p111 = por %p109, %p110
    %s112 = ssub.s32 %s10, %s17
    %p113 = scmp.eq.s32.totalorder %s112, 0
    %s115 = sadd.s32 %s114, 1
    %s116 = scalar_select %p113, %s114, %s115
    %p119 = pneg %p113
    %p120 = scmp.eq.s32.totalorder %s10, 1
    %p121 = por %p119, %p120
    %p122 = scmp.ne.s32.totalorder %s114, %s117
    %p123 = scmp.eq.s32.totalorder %s10, 0
    %p124 = por %p122, %p123
    %p125 = scmp.ne.s32.totalorder %s114, %s117
    %p126 = scmp.eq.s32.totalorder %s15, 1
    %p127 = por %p125, %p126
    %p128 = scmp.ne.s32.totalorder %s117, %s118
    %p129 = scmp.eq.s32.totalorder %s15, 0
    %p130 = por %p128, %p129
    %p131 = scmp.ne.s32.totalorder %s117, %s118
    %p132 = scmp.eq.s32.totalorder %s16, 1
    %p133 = por %p131, %p132
    %p135 = scmp.ne.s32.totalorder %s118, %s134
    %p136 = scmp.eq.s32.totalorder %s16, 0
    %p137 = por %p135, %p136
    %p138 = scmp.le.s32.totalorder 1, %s10
    %p139 = scmp.lt.s32.totalorder %s10, 3
    %p140 = pnand %p138, %p139
    %p141 = pneg %p140
    // Predicated region
    $region9: #{block_forward.8} parent=5 // pred_check
      _
    $region10: #{block_forward.8} parent=5 // pred_check_branch
      %143 = sbr.rel (%p140) target = $region12
    $region11: #{block_forward.8} parent=5 // pred_region
      %s144 = ssub.s32 %s10, 1
      // Predicated region
      $region13: #{block_forward.8} parent=11 // pred_check
        %p145 = pneg %p57
      $region14: #{block_forward.8} parent=11 // pred_check_branch
        %147 = sbr.rel (%p145) target = $region16
      $region15: #{block_forward.8} parent=11 // pred_region
        _
      $region16: #{block_forward.8} parent=11 // pred_fallthru
        _
      // Predicated region
      $region17: #{block_forward.8} parent=11 // pred_check
        %p148 = pneg %p78
      $region18: #{block_forward.8} parent=11 // pred_check_branch
        %150 = sbr.rel (%p148) target = $region20
      $region19: #{block_forward.8} parent=11 // pred_region
        _
      $region20: #{block_forward.8} parent=11 // pred_fallthru
        _
    $region12: #{block_forward.8} parent=5 // pred_fallthru
      _
    %p151 = scmp.lt.s32.totalorder %s10, 2
    // Predicated region
    $region21: #{block_forward.8} parent=5 // pred_check
      %p152 = pneg %p151
    $region22: #{block_forward.8} parent=5 // pred_check_branch
      %154 = sbr.rel (%p152) target = $region24
    $region23: #{block_forward.8} parent=5 // pred_region
      // Predicated region
      $region25: #{block_forward.8} parent=23 // pred_check
        %p155 = pneg %p30
      $region26: #{block_forward.8} parent=23 // pred_check_branch
        %157 = sbr.rel (%p155) target = $region28
      $region27: #{block_forward.8} parent=23 // pred_region
        %s158 = smul.u32 8, %s10
        %p159 = scmp.lt.s32.totalorder %s158, 15
        %s160 = scalar_select %p159, %s158, 15
        %s161 = smul.addr %s160, 4
        %s162 = scalar_lea.vmem %s0, %s161
        %s163 = smul.u32 8, %s10
      $region28: #{block_forward.8} parent=23 // pred_fallthru
        _
      // Predicated region
      $region29: #{block_forward.8} parent=23 // pred_check
        %p164 = pneg %p98
      $region30: #{block_forward.8} parent=23 // pred_check_branch
        %166 = sbr.rel (%p164) target = $region32
      $region31: #{block_forward.8} parent=23 // pred_region
        %s167 = smul.u32 8, %s10
        %p168 = scmp.lt.s32.totalorder %s167, 15
        %s169 = scalar_select %p168, %s167, 15
        %s170 = smul.addr %s169, 8
        %s171 = scalar_lea.vmem %s3, %s170
        %s172 = smul.u32 8, %s10
      $region32: #{block_forward.8} parent=23 // pred_fallthru
        _
    $region24: #{block_forward.8} parent=5 // pred_fallthru
      _
    %p173 = scmp.le.s32.totalorder 1, %s10
    %p174 = scmp.lt.s32.totalorder %s10, 3
    %p175 = pnand %p173, %p174
    %p176 = pneg %p175
    // Predicated region
    $region33: #{block_forward.8} parent=5 // pred_check
      _
    $region34: #{block_forward.8} parent=5 // pred_check_branch
      %178 = sbr.rel (%p175) target = $region36
    $region35: #{block_forward.8} parent=5 // pred_region
      %s179 = ssub.s32 %s10, 1
      %s180 = smul.u32 8, %s15
      %p181 = scmp.lt.s32.totalorder %s180, 15
      %s182 = scalar_select %p181, %s180, 15
      %s183 = smul.addr %s182, 4
      %s184 = scalar_lea.vmem %s0, %s183
      %p185 = pneg %p36
      %p186 = pneg %p33
      %p187 = pneg %p57
      %p188 = pneg %p54
      %p189 = pneg %p78
      %p190 = pneg %p75
      %s191 = smul.u32 8, %s15
      %p192 = scmp.lt.s32.totalorder %s191, 15
      %s193 = scalar_select %p192, %s191, 15
      %s194 = smul.addr %s193, 8
      %s195 = scalar_lea.vmem %s3, %s194
      %p196 = pneg %p104
      %p197 = pneg %p101
      %p198 = pneg %p130
      %p199 = pneg %p127
      %s200 = smul.u32 8, %s15
      %p201 = scmp.lt.s32.totalorder %s200, 15
      %s202 = scalar_select %p201, %s200, 15
      %s203 = smul.addr %s202, 8
      %s204 = scalar_lea.vmem %s4, %s203
      %s205 = smul.u32 8, %s15
      %p206 = scmp.lt.s32.totalorder %s205, 15
      %s207 = scalar_select %p206, %s205, 15
      %s208 = smul.addr %s207, 4
      %s209 = scalar_lea.vmem %s0, %s208
      %s210 = smul.u32 8, %s15
      %s211 = smul.u32 8, %s15
      %p212 = scmp.lt.s32.totalorder %s211, 15
      %s213 = scalar_select %p212, %s211, 15
      %s214 = smul.addr %s213, 8
      %s215 = scalar_lea.vmem %s3, %s214
      %s216 = smul.u32 8, %s15
      %s217 = smul.u32 8, %s15
      %p218 = scmp.lt.s32.totalorder %s217, 15
      %s219 = scalar_select %p218, %s217, 15
      %s220 = smul.addr %s219, 8
      %s221 = scalar_lea.vmem %s4, %s220
      %s222 = smul.u32 8, %s15
      %v224 = vld [vmem:[%s209] sm:$0xf]
      %v225 = vld [vmem:[%s209 + $0x4] sm:$0xf]
      %v226 = vld [vmem:[%s209 + $0x8] sm:$0xf]
      %v227 = vld [vmem:[%s209 + $0xc] sm:$0xf]
      %v228 = vld [vmem:[%s209 + $0x10] sm:$0xf]
      %v229 = vld [vmem:[%s209 + $0x14] sm:$0xf]
      %v230 = vld [vmem:[%s209 + $0x18] sm:$0xf]
      %v231 = vld [vmem:[%s209 + $0x1c] sm:$0xf]
      %v232 = vld [vmem:[%s1] sm:$0xf]
      %v233 = vld [vmem:[%s1 + $0x4] sm:$0xf]
      %v234 = vld [vmem:[%s1 + $0x8] sm:$0xf]
      %v235 = vld [vmem:[%s1 + $0xc] sm:$0xf]
      %v236 = vld [vmem:[%s2] sm:$0x1]
      %v238 = vlaneseq
      %v239 = vshrl.u32 %v238, 7
      %v240 = vsub.s32 0, %v239
      %v241 = vrot.slane %v236, %v240
      %v251 = vunpack.c.l.b16 %v224
      %v252 = vunpack.c.l.b16 %v225
      %v253 = vunpack.c.l.b16 %v226
      %v254 = vunpack.c.l.b16 %v227
      %v255 = vunpack.c.l.b16 %v228
      %v256 = vunpack.c.l.b16 %v229
      %v257 = vunpack.c.l.b16 %v230
      %v258 = vunpack.c.l.b16 %v231
      %v259 = vpack.c.b16 %v252, %v251
      %v260 = vpack.c.b16 %v254, %v253
      %v261 = vpack.c.b16 %v256, %v255
      %v262 = vpack.c.b16 %v258, %v257
      %v267 = vunpack.c.l.b16 %v232
      %v268 = vunpack.c.l.b16 %v233
      %v269 = vunpack.c.l.b16 %v234
      %v270 = vunpack.c.l.b16 %v235
      %v271 = vpack.c.b16 %v268, %v267
      %v272 = vpack.c.b16 %v270, %v269
      %vm275 = vcmask 261120
      %v277 = vsel %vm275, %v259, 0
      %v280 = vsel %vm275, %v260, 0
      %v283 = vsel %vm275, %v261, 0
      %v286 = vsel %vm275, %v262, 0
      %288 = vmatprep.subr.bf16.mxu0 0
      %289 = vmatpush1.bf16.msra.mxu0 %v271
      %290 = vmatprep.subr.bf16.mxu0 0
      %291 = vmatpush1.bf16.msra.mxu0 %v272
      %292 = vmatprep.subr.bf16.mxu0 0
      %293 = vmatpush1.bf16.msra.mxu0 0
      %294 = vmatprep.subr.bf16.mxu0 0
      %295 = vmatpush1.bf16.msra.mxu0 0
      %296 = vmatprep.subr.bf16.mxu0 0
      %297 = vmatpush1.bf16.msra.mxu0 0
      %298 = vmatprep.subr.bf16.mxu0 0
      %299 = vmatpush1.bf16.msra.mxu0 0
      %300 = vmatprep.subr.bf16.mxu0 0
      %301 = vmatpush1.bf16.msra.mxu0 0
      %302 = vmatprep.subr.bf16.mxu0 0
      %303 = vmatpush1.bf16.msra.mxu0 0
      %304 = vmatprep.subr.bf16.mxu0 0
      %305 = vmatpush1.bf16.msra.mxu0 0
      %306 = vmatprep.subr.bf16.mxu0 0
      %307 = vmatpush1.bf16.msra.mxu0 0
      %308 = vmatprep.subr.bf16.mxu0 0
      %309 = vmatpush1.bf16.msra.mxu0 0
      %310 = vmatprep.subr.bf16.mxu0 0
      %311 = vmatpush1.bf16.msra.mxu0 0
      %312 = vmatprep.subr.bf16.mxu0 0
      %313 = vmatpush1.bf16.msra.mxu0 0
      %314 = vmatprep.subr.bf16.mxu0 0
      %315 = vmatpush1.bf16.msra.mxu0 0
      %316 = vmatprep.subr.bf16.mxu0 0
      %317 = vmatpush1.bf16.msra.mxu0 0
      %318 = vmatprep.subr.bf16.mxu0 0
      %319 = vmatpush1.bf16.msra.mxu0 0
      %320 = vmatprep.mubr.bf16.mxu0 0
      %321 = vmatmul.mubr.bf16.gmra.mrb[0].mxu0 %v277
      %v322 = vpop.f32.mrb[0].mxu0
      %v323 = vadd.f32 %v241, %v322
      %v324 = vpop.f32.mrb[0].mxu0
      %v325 = vpop.f32.mrb[0].mxu0
      %v326 = vadd.f32 %v241, %v325
      %v327 = vpop.f32.mrb[0].mxu0
      %328 = vmatprep.mubr.bf16.mxu0 0
      %329 = vmatmul.mubr.bf16.gmra.mrb[0].mxu0 %v280
      %v330 = vpop.f32.mrb[0].mxu0
      %v331 = vadd.f32 %v241, %v330
      %v332 = vpop.f32.mrb[0].mxu0
      %v333 = vpop.f32.mrb[0].mxu0
      %v334 = vadd.f32 %v241, %v333
      %v335 = vpop.f32.mrb[0].mxu0
      %336 = vmatprep.mubr.bf16.mxu0 0
      %337 = vmatmul.mubr.bf16.gmra.mrb[0].mxu0 %v283
      %v338 = vpop.f32.mrb[0].mxu0
      %v339 = vadd.f32 %v241, %v338
      %v340 = vpop.f32.mrb[0].mxu0
      %v341 = vpop.f32.mrb[0].mxu0
      %v342 = vadd.f32 %v241, %v341
      %v343 = vpop.f32.mrb[0].mxu0
      %344 = vmatprep.mubr.bf16.mxu0 0
      %345 = vmatmul.mubr.bf16.gmra.mrb[0].mxu0 %v286
      %v346 = vpop.f32.mrb[0].mxu0
      %v347 = vadd.f32 %v241, %v346
      %v348 = vpop.f32.mrb[0].mxu0
      %v349 = vpop.f32.mrb[0].mxu0
      %v350 = vadd.f32 %v241, %v349
      %v351 = vpop.f32.mrb[0].mxu0
      %352 = vdwg.mxu0
      %v353 = vld [vmem:[%s215] sm:$0xff]
      %v354 = vld [vmem:[%s215 + $0x8] sm:$0xff]
      %v355 = vld [vmem:[%s215 + $0x10] sm:$0xff]
      %v356 = vld [vmem:[%s215 + $0x18] sm:$0xff]
      %v357 = vld [vmem:[%s215 + $0x20] sm:$0xff]
      %v358 = vld [vmem:[%s215 + $0x28] sm:$0xff]
      %v359 = vld [vmem:[%s215 + $0x30] sm:$0xff]
      %v360 = vld [vmem:[%s215 + $0x38] sm:$0xff]
      %v361 = vadd.f32 %v323, %v353
      %v362 = vadd.f32 %v326, %v354
      %v363 = vadd.f32 %v331, %v355
      %v364 = vadd.f32 %v334, %v356
      %v365 = vadd.f32 %v339, %v357
      %v366 = vadd.f32 %v342, %v358
      %v367 = vadd.f32 %v347, %v359
      %v368 = vadd.f32 %v350, %v360
      %369 = vst.msk [vmem:[%s221] sm:$0xff] %vm275, %v361
      %370 = vst.msk [vmem:[%s221 + $0x8] sm:$0xff] %vm275, %v362
      %371 = vst.msk [vmem:[%s221 + $0x10] sm:$0xff] %vm275, %v363
      %372 = vst.msk [vmem:[%s221 + $0x18] sm:$0xff] %vm275, %v364
      %373 = vst.msk [vmem:[%s221 + $0x20] sm:$0xff] %vm275, %v365
      %374 = vst.msk [vmem:[%s221 + $0x28] sm:$0xff] %vm275, %v366
      %375 = vst.msk [vmem:[%s221 + $0x30] sm:$0xff] %vm275, %v367
      %376 = vst.msk [vmem:[%s221 + $0x38] sm:$0xff] %vm275, %v368
      %s377 = smul.u32 8, %s15
      %p378 = scmp.lt.s32.totalorder %s377, 15
      %s379 = scalar_select %p378, %s377, 15
      %s380 = smul.addr %s379, 8
      %s381 = scalar_lea.vmem %s4, %s380
      // Predicated region
      $region37: #{block_forward.8} parent=35 // pred_check
        %p382 = pneg %p127
      $region38: #{block_forward.8} parent=35 // pred_check_branch
        %384 = sbr.rel (%p382) target = $region40
      $region39: #{block_forward.8} parent=35 // pred_region
        %s385 = smul.u32 8, %s15
      $region40: #{block_forward.8} parent=35 // pred_fallthru
        _
    $region36: #{block_forward.8} parent=5 // pred_fallthru
      _
    %p386 = scmp.le.s32.totalorder 2, %s10
    // Predicated region
    $region41: #{block_forward.8} parent=5 // pred_check
      %p387 = pneg %p386
    $region42: #{block_forward.8} parent=5 // pred_check_branch
      %389 = sbr.rel (%p387) target = $region44
    $region43: #{block_forward.8} parent=5 // pred_region
      %s390 = ssub.s32 %s10, 2
      // Predicated region
      $region45: #{block_forward.8} parent=43 // pred_check
        %p391 = pneg %p133
      $region46: #{block_forward.8} parent=43 // pred_check_branch
        %393 = sbr.rel (%p391) target = $region48
      $region47: #{block_forward.8} parent=43 // pred_region
        %s394 = smul.u32 8, %s16
        %p395 = scmp.lt.s32.totalorder %s394, 15
        %s396 = scalar_select %p395, %s394, 15
        %s397 = smul.addr %s396, 8
        %s398 = scalar_lea.vmem %s4, %s397
      $region48: #{block_forward.8} parent=43 // pred_fallthru
        _
    $region44: #{block_forward.8} parent=5 // pred_fallthru
      _
  $region6: #{block_forward.8} parent=0 // loop_footer
    %s14 = sadd.s32 1, %s10
  $region7: #{block_forward.8} parent=0 // loop_footer_branch
    %9 = sbr.rel target = $region3
  $region8: #{block_forward.8} parent=0 // loop_exit
    _

// kernel: block_forward.9
$region0: #{block_forward.9}
  #allocation0 [shape = 'u32[]', space=smem, size = 0x4, offset = 0x4, fixed_abs, tag = 'smem constant byte address 0x4 - core index']
  #allocation1 [shape = 'u32[144,128]{1,0:T(1,128)}', space=vmem, size = 0x12000, scoped, tag = 'internal scratch']
  %s0 = inlined_call_operand.vmem [shape: f32[128,32], index: 0, kind: input, shape index: {}]
  %s1 = inlined_call_operand.vmem [shape: f32[1,32], index: 1, kind: input, shape index: {}]
  %s2 = inlined_call_operand.vmem [shape: f32[1,32], index: 2, kind: input, shape index: {}]
  %s3 = inlined_call_operand.vmem [shape: bf16[32,128], index: 3, kind: input, shape index: {}]
  %s4 = inlined_call_operand.vmem [shape: f32[1,128], index: 4, kind: input, shape index: {}]
  %s5 = inlined_call_operand.vmem [shape: bf16[128,128], index: 5, kind: output, shape index: {}]
  %s6 = sld [smem:[#allocation0]]
  $region53: #{block_forward.9} parent=0
    _
  %s8 = ssub.s32 1, %s6
  %s9 = scalar_select 0, %s8, %s6
  loop: start=0, step=1, limit=4
  $region2: #{block_forward.9} parent=0 // loop_pre_header
    _
  $region3: #{block_forward.9} parent=0 // loop_header
    %s11 = sphi 0, %s15
    %p12 = scmp.ge.s32.totalorder %s11, 4
    %s21 = sphi 0, %s23
    %s24 = sphi 0, %s21
    %s25 = sphi 0, %s24
    %s41 = sphi 0, %s25
    %s45 = sphi 0, %s45
    %s47 = sphi 0, %s45
    %s48 = sphi 0, %s47
    %s62 = sphi 0, %s48
    %s66 = sphi 0, %s66
    %s68 = sphi 0, %s66
    %s69 = sphi 0, %s68
    %s83 = sphi 0, %s69
    %s87 = sphi 0, %s87
    %s89 = sphi 0, %s87
    %s90 = sphi 0, %s89
    %s104 = sphi 0, %s90
    %s108 = sphi 0, %s108
    %s110 = sphi 0, %s108
    %s111 = sphi 0, %s110
    %s125 = sphi 0, %s111
    %s131 = sphi 0, %s133
    %s134 = sphi 0, %s131
    %s135 = sphi 0, %s134
    %s151 = sphi 0, %s135
  $region4: #{block_forward.9} parent=0 // loop_header_branch
    %14 = sbr.rel (%p12) target = $region8
  $region5: #{block_forward.9} parent=0 // loop_body
    %s16 = ssub.s32 %s11, 1
    %s17 = ssub.s32 %s11, 2
    %s18 = sadd.s32 %s11, 1
    %s19 = ssub.s32 %s11, %s18
    %p20 = scmp.eq.s32.totalorder %s19, 0
    %s22 = sadd.s32 %s21, 1
    %s23 = scalar_select %p20, %s21, %s22
    %p26 = pneg %p20
    %p27 = scmp.eq.s32.totalorder %s11, 1
    %p28 = por %p26, %p27
    %p29 = scmp.ne.s32.totalorder %s21, %s24
    %p30 = scmp.eq.s32.totalorder %s11, 0
    %p31 = por %p29, %p30
    %p32 = scmp.ne.s32.totalorder %s21, %s24
    %p33 = scmp.eq.s32.totalorder %s16, 1
    %p34 = por %p32, %p33
    %p35 = scmp.ne.s32.totalorder %s24, %s25
    %p36 = scmp.eq.s32.totalorder %s16, 0
    %p37 = por %p35, %p36
    %p38 = scmp.ne.s32.totalorder %s24, %s25
    %p39 = scmp.eq.s32.totalorder %s17, 1
    %p40 = por %p38, %p39
    %p42 = scmp.ne.s32.totalorder %s25, %s41
    %p43 = scmp.eq.s32.totalorder %s17, 0
    %p44 = por %p42, %p43
    %s46 = sadd.s32 %s45, 1
    %p49 = scmp.eq.s32.totalorder %s11, 1
    %p50 = scmp.ne.s32.totalorder %s45, %s47
    %p51 = scmp.eq.s32.totalorder %s11, 0
    %p52 = por %p50, %p51
    %p53 = scmp.ne.s32.totalorder %s45, %s47
    %p54 = scmp.eq.s32.totalorder %s16, 1
    %p55 = por %p53, %p54
    %p56 = scmp.ne.s32.totalorder %s47, %s48
    %p57 = scmp.eq.s32.totalorder %s16, 0
    %p58 = por %p56, %p57
    %p59 = scmp.ne.s32.totalorder %s47, %s48
    %p60 = scmp.eq.s32.totalorder %s17, 1
    %p61 = por %p59, %p60
    %p63 = scmp.ne.s32.totalorder %s48, %s62
    %p64 = scmp.eq.s32.totalorder %s17, 0
    %p65 = por %p63, %p64
    %s67 = sadd.s32 %s66, 1
    %p70 = scmp.eq.s32.totalorder %s11, 1
    %p71 = scmp.ne.s32.totalorder %s66, %s68
    %p72 = scmp.eq.s32.totalorder %s11, 0
    %p73 = por %p71, %p72
    %p74 = scmp.ne.s32.totalorder %s66, %s68
    %p75 = scmp.eq.s32.totalorder %s16, 1
    %p76 = por %p74, %p75
    %p77 = scmp.ne.s32.totalorder %s68, %s69
    %p78 = scmp.eq.s32.totalorder %s16, 0
    %p79 = por %p77, %p78
    %p80 = scmp.ne.s32.totalorder %s68, %s69
    %p81 = scmp.eq.s32.totalorder %s17, 1
    %p82 = por %p80, %p81
    %p84 = scmp.ne.s32.totalorder %s69, %s83
    %p85 = scmp.eq.s32.totalorder %s17, 0
    %p86 = por %p84, %p85
    %s88 = sadd.s32 %s87, 1
    %p91 = scmp.eq.s32.totalorder %s11, 1
    %p92 = scmp.ne.s32.totalorder %s87, %s89
    %p93 = scmp.eq.s32.totalorder %s11, 0
    %p94 = por %p92, %p93
    %p95 = scmp.ne.s32.totalorder %s87, %s89
    %p96 = scmp.eq.s32.totalorder %s16, 1
    %p97 = por %p95, %p96
    %p98 = scmp.ne.s32.totalorder %s89, %s90
    %p99 = scmp.eq.s32.totalorder %s16, 0
    %p100 = por %p98, %p99
    %p101 = scmp.ne.s32.totalorder %s89, %s90
    %p102 = scmp.eq.s32.totalorder %s17, 1
    %p103 = por %p101, %p102
    %p105 = scmp.ne.s32.totalorder %s90, %s104
    %p106 = scmp.eq.s32.totalorder %s17, 0
    %p107 = por %p105, %p106
    %s109 = sadd.s32 %s108, 1
    %p112 = scmp.eq.s32.totalorder %s11, 1
    %p113 = scmp.ne.s32.totalorder %s108, %s110
    %p114 = scmp.eq.s32.totalorder %s11, 0
    %p115 = por %p113, %p114
    %p116 = scmp.ne.s32.totalorder %s108, %s110
    %p117 = scmp.eq.s32.totalorder %s16, 1
    %p118 = por %p116, %p117
    %p119 = scmp.ne.s32.totalorder %s110, %s111
    %p120 = scmp.eq.s32.totalorder %s16, 0
    %p121 = por %p119, %p120
    %p122 = scmp.ne.s32.totalorder %s110, %s111
    %p123 = scmp.eq.s32.totalorder %s17, 1
    %p124 = por %p122, %p123
    %p126 = scmp.ne.s32.totalorder %s111, %s125
    %p127 = scmp.eq.s32.totalorder %s17, 0
    %p128 = por %p126, %p127
    %s129 = ssub.s32 %s11, %s18
    %p130 = scmp.eq.s32.totalorder %s129, 0
    %s132 = sadd.s32 %s131, 1
    %s133 = scalar_select %p130, %s131, %s132
    %p136 = pneg %p130
    %p137 = scmp.eq.s32.totalorder %s11, 1
    %p138 = por %p136, %p137
    %p139 = scmp.ne.s32.totalorder %s131, %s134
    %p140 = scmp.eq.s32.totalorder %s11, 0
    %p141 = por %p139, %p140
    %p142 = scmp.ne.s32.totalorder %s131, %s134
    %p143 = scmp.eq.s32.totalorder %s16, 1
    %p144 = por %p142, %p143
    %p145 = scmp.ne.s32.totalorder %s134, %s135
    %p146 = scmp.eq.s32.totalorder %s16, 0
    %p147 = por %p145, %p146
    %p148 = scmp.ne.s32.totalorder %s134, %s135
    %p149 = scmp.eq.s32.totalorder %s17, 1
    %p150 = por %p148, %p149
    %p152 = scmp.ne.s32.totalorder %s135, %s151
    %p153 = scmp.eq.s32.totalorder %s17, 0
    %p154 = por %p152, %p153
    %p155 = scmp.le.s32.totalorder 1, %s11
    %p156 = scmp.lt.s32.totalorder %s11, 3
    %p157 = pnand %p155, %p156
    %p158 = pneg %p157
    // Predicated region
    $region9: #{block_forward.9} parent=5 // pred_check
      _
    $region10: #{block_forward.9} parent=5 // pred_check_branch
      %160 = sbr.rel (%p157) target = $region12
    $region11: #{block_forward.9} parent=5 // pred_region
      %s161 = ssub.s32 %s11, 1
      // Predicated region
      $region13: #{block_forward.9} parent=11 // pred_check
        %p162 = pneg %p58
      $region14: #{block_forward.9} parent=11 // pred_check_branch
        %164 = sbr.rel (%p162) target = $region16
      $region15: #{block_forward.9} parent=11 // pred_region
        _
      $region16: #{block_forward.9} parent=11 // pred_fallthru
        _
      // Predicated region
      $region17: #{block_forward.9} parent=11 // pred_check
        %p165 = pneg %p79
      $region18: #{block_forward.9} parent=11 // pred_check_branch
        %167 = sbr.rel (%p165) target = $region20
      $region19: #{block_forward.9} parent=11 // pred_region
        _
      $region20: #{block_forward.9} parent=11 // pred_fallthru
        _
      // Predicated region
      $region21: #{block_forward.9} parent=11 // pred_check
        %p168 = pneg %p100
      $region22: #{block_forward.9} parent=11 // pred_check_branch
        %170 = sbr.rel (%p168) target = $region24
      $region23: #{block_forward.9} parent=11 // pred_region
        _
      $region24: #{block_forward.9} parent=11 // pred_fallthru
        _
      // Predicated region
      $region25: #{block_forward.9} parent=11 // pred_check
        %p171 = pneg %p121
      $region26: #{block_forward.9} parent=11 // pred_check_branch
        %173 = sbr.rel (%p171) target = $region28
      $region27: #{block_forward.9} parent=11 // pred_region
        _
      $region28: #{block_forward.9} parent=11 // pred_fallthru
        _
    $region12: #{block_forward.9} parent=5 // pred_fallthru
      _
    %p174 = scmp.lt.s32.totalorder %s11, 2
    // Predicated region
    $region29: #{block_forward.9} parent=5 // pred_check
      %p175 = pneg %p174
    $region30: #{block_forward.9} parent=5 // pred_check_branch
      %177 = sbr.rel (%p175) target = $region32
    $region31: #{block_forward.9} parent=5 // pred_region
      // Predicated region
      $region33: #{block_forward.9} parent=31 // pred_check
        %p178 = pneg %p31
      $region34: #{block_forward.9} parent=31 // pred_check_branch
        %180 = sbr.rel (%p178) target = $region36
      $region35: #{block_forward.9} parent=31 // pred_region
        %s181 = smul.u32 8, %s11
        %p182 = scmp.lt.s32.totalorder %s181, 15
        %s183 = scalar_select %p182, %s181, 15
        %s184 = smul.addr %s183, 8
        %s185 = scalar_lea.vmem %s0, %s184
        %s186 = smul.u32 8, %s11
      $region36: #{block_forward.9} parent=31 // pred_fallthru
        _
    $region32: #{block_forward.9} parent=5 // pred_fallthru
      _
    %p187 = scmp.le.s32.totalorder 1, %s11
    %p188 = scmp.lt.s32.totalorder %s11, 3
    %p189 = pnand %p187, %p188
    %p190 = pneg %p189
    // Predicated region
    $region37: #{block_forward.9} parent=5 // pred_check
      _
    $region38: #{block_forward.9} parent=5 // pred_check_branch
      %192 = sbr.rel (%p189) target = $region40
    $region39: #{block_forward.9} parent=5 // pred_region
      %s193 = ssub.s32 %s11, 1
      %s194 = smul.u32 8, %s16
      %p195 = scmp.lt.s32.totalorder %s194, 15
      %s196 = scalar_select %p195, %s194, 15
      %s197 = smul.addr %s196, 8
      %s198 = scalar_lea.vmem %s0, %s197
      %p199 = pneg %p37
      %p200 = pneg %p34
      %p201 = pneg %p58
      %p202 = pneg %p55
      %p203 = pneg %p79
      %p204 = pneg %p76
      %p205 = pneg %p100
      %p206 = pneg %p97
      %p207 = pneg %p121
      %p208 = pneg %p118
      %p209 = pneg %p147
      %p210 = pneg %p144
      %s211 = smul.u32 8, %s16
      %p212 = scmp.lt.s32.totalorder %s211, 15
      %s213 = scalar_select %p212, %s211, 15
      %s214 = smul.addr %s213, 4
      %s215 = scalar_lea.vmem %s5, %s214
      %s216 = smul.u32 8, %s16
      %p217 = scmp.lt.s32.totalorder %s216, 15
      %s218 = scalar_select %p217, %s216, 15
      %s219 = smul.addr %s218, 8
      %s220 = scalar_lea.vmem %s0, %s219
      %s221 = smul.u32 8, %s16
      %s222 = smul.u32 8, %s16
      %p223 = scmp.lt.s32.totalorder %s222, 15
      %s224 = scalar_select %p223, %s222, 15
      %s225 = smul.addr %s224, 4
      %s226 = scalar_lea.vmem %s5, %s225
      %s227 = smul.u32 8, %s16
      %v229 = vld [vmem:[%s220] sm:$0xff]
      %v230 = vld [vmem:[%s220 + $0x8] sm:$0xff]
      %v231 = vld [vmem:[%s220 + $0x10] sm:$0xff]
      %v232 = vld [vmem:[%s220 + $0x18] sm:$0xff]
      %v233 = vld [vmem:[%s220 + $0x20] sm:$0xff]
      %v234 = vld [vmem:[%s220 + $0x28] sm:$0xff]
      %v235 = vld [vmem:[%s220 + $0x30] sm:$0xff]
      %v236 = vld [vmem:[%s220 + $0x38] sm:$0xff]
      %v237 = vld [vmem:[%s1] sm:$0x1]
      %v238 = vld [vmem:[%s2] sm:$0x1]
      %vm239 = vcmask 261120
      %v240 = vsel %vm239, %v229, 0.0
      %241 = vadd.xlane.f32.xlu0 %v240
      %v242 = vpop.xlane.xlu0 %241
      %v243 = vsel %vm239, %v230, 0.0
      %244 = vadd.xlane.f32.xlu0 %v243
      %v245 = vpop.xlane.xlu0 %244
      %v246 = vsel %vm239, %v231, 0.0
      %247 = vadd.xlane.f32.xlu0 %v246
      %v248 = vpop.xlane.xlu0 %247
      %v249 = vsel %vm239, %v232, 0.0
      %250 = vadd.xlane.f32.xlu0 %v249
      %v251 = vpop.xlane.xlu0 %250
      %v252 = vsel %vm239, %v233, 0.0
      %253 = vadd.xlane.f32.xlu0 %v252
      %v254 = vpop.xlane.xlu0 %253
      %v255 = vsel %vm239, %v234, 0.0
      %256 = vadd.xlane.f32.xlu0 %v255
      %v257 = vpop.xlane.xlu0 %256
      %v258 = vsel %vm239, %v235, 0.0
      %259 = vadd.xlane.f32.xlu0 %v258
      %v260 = vpop.xlane.xlu0 %259
      %v261 = vsel %vm239, %v236, 0.0
      %262 = vadd.xlane.f32.xlu0 %v261
      %v263 = vpop.xlane.xlu0 %262
      %v264 = vrcp.pop 32.0
      %v265 = vmul.f32 %v242, %v264
      %v266 = vmul.f32 %v245, %v264
      %v267 = vmul.f32 %v248, %v264
      %v268 = vmul.f32 %v251, %v264
      %v269 = vmul.f32 %v254, %v264
      %v270 = vmul.f32 %v257, %v264
      %v271 = vmul.f32 %v260, %v264
      %v272 = vmul.f32 %v263, %v264
      %v273 = vsub.f32 %v229, %v265
      %v274 = vsub.f32 %v230, %v266
      %v275 = vsub.f32 %v231, %v267
      %v276 = vsub.f32 %v232, %v268
      %v277 = vsub.f32 %v233, %v269
      %v278 = vsub.f32 %v234, %v270
      %v279 = vsub.f32 %v235, %v271
      %v280 = vsub.f32 %v236, %v272
      %v281 = vmul.f32 %v273, %v273
      %v282 = vmul.f32 %v274, %v274
      %v283 = vmul.f32 %v275, %v275
      %v284 = vmul.f32 %v276, %v276
      %v285 = vmul.f32 %v277, %v277
      %v286 = vmul.f32 %v278, %v278
      %v287 = vmul.f32 %v279, %v279
      %v288 = vmul.f32 %v280, %v280
      %v289 = vsel %vm239, %v281, 0.0
      %290 = vadd.xlane.f32.xlu0 %v289
      %v291 = vpop.xlane.xlu0 %290
      %v292 = vsel %vm239, %v282, 0.0
      %293 = vadd.xlane.f32.xlu0 %v292
      %v294 = vpop.xlane.xlu0 %293
      %v295 = vsel %vm239, %v283, 0.0
      %296 = vadd.xlane.f32.xlu0 %v295
      %v297 = vpop.xlane.xlu0 %296
      %v298 = vsel %vm239, %v284, 0.0
      %299 = vadd.xlane.f32.xlu0 %v298
      %v300 = vpop.xlane.xlu0 %299
      %v301 = vsel %vm239, %v285, 0.0
      %302 = vadd.xlane.f32.xlu0 %v301
      %v303 = vpop.xlane.xlu0 %302
      %v304 = vsel %vm239, %v286, 0.0
      %305 = vadd.xlane.f32.xlu0 %v304
      %v306 = vpop.xlane.xlu0 %305
      %v307 = vsel %vm239, %v287, 0.0
      %308 = vadd.xlane.f32.xlu0 %v307
      %v309 = vpop.xlane.xlu0 %308
      %v310 = vsel %vm239, %v288, 0.0
      %311 = vadd.xlane.f32.xlu0 %v310
      %v312 = vpop.xlane.xlu0 %311
      %v313 = vmul.f32 %v291, %v264
      %v314 = vmul.f32 %v294, %v264
      %v315 = vmul.f32 %v297, %v264
      %v316 = vmul.f32 %v300, %v264
      %v317 = vmul.f32 %v303, %v264
      %v318 = vmul.f32 %v306, %v264
      %v319 = vmul.f32 %v309, %v264
      %v320 = vmul.f32 %v312, %v264
      %v321 = vadd.f32 %v313, 1e-05
      %v322 = vadd.f32 %v314, 1e-05
      %v323 = vadd.f32 %v315, 1e-05
      %v324 = vadd.f32 %v316, 1e-05
      %v325 = vadd.f32 %v317, 1e-05
      %v326 = vadd.f32 %v318, 1e-05
      %v327 = vadd.f32 %v319, 1e-05
      %v328 = vadd.f32 %v320, 1e-05
      %v329 = vrsqrt.pop %v321
      %v330 = vrsqrt.pop %v322
      %v331 = vrsqrt.pop %v323
      %v332 = vrsqrt.pop %v324
      %v333 = vrsqrt.pop %v325
      %v334 = vrsqrt.pop %v326
      %v335 = vrsqrt.pop %v327
      %v336 = vrsqrt.pop %v328
      %v337 = vmul.f32 %v273, %v329
      %v338 = vmul.f32 %v274, %v330
      %v339 = vmul.f32 %v275, %v331
      %v340 = vmul.f32 %v276, %v332
      %v341 = vmul.f32 %v277, %v333
      %v342 = vmul.f32 %v278, %v334
      %v343 = vmul.f32 %v279, %v335
      %v344 = vmul.f32 %v280, %v336
      %v346 = vlaneseq
      %v347 = vshrl.u32 %v346, 7
      %v348 = vsub.s32 0, %v347
      %v349 = vrot.slane %v237, %v348
      %v351 = vmul.f32 %v337, %v349
      %v352 = vmul.f32 %v338, %v349
      %v353 = vmul.f32 %v339, %v349
      %v354 = vmul.f32 %v340, %v349
      %v355 = vmul.f32 %v341, %v349
      %v356 = vmul.f32 %v342, %v349
      %v357 = vmul.f32 %v343, %v349
      %v358 = vmul.f32 %v344, %v349
      %v360 = vlaneseq
      %v361 = vshrl.u32 %v360, 7
      %v362 = vsub.s32 0, %v361
      %v363 = vrot.slane %v238, %v362
      %v365 = vadd.f32 %v351, %v363
      %v366 = vadd.f32 %v352, %v363
      %v367 = vadd.f32 %v353, %v363
      %v368 = vadd.f32 %v354, %v363
      %v369 = vadd.f32 %v355, %v363
      %v370 = vadd.f32 %v356, %v363
      %v371 = vadd.f32 %v357, %v363
      %v372 = vadd.f32 %v358, %v363
      %v373 = vpack.c.bf16 %v366, %v365
      %v374 = vpack.c.bf16 %v368, %v367
      %v375 = vpack.c.bf16 %v370, %v369
      %v376 = vpack.c.bf16 %v372, %v371
      %v377 = vld [vmem:[%s3] sm:$0xf]
      %v378 = vld [vmem:[%s3 + $0x4] sm:$0xf]
      %v379 = vld [vmem:[%s3 + $0x8] sm:$0xf]
      %v380 = vld [vmem:[%s3 + $0xc] sm:$0xf]
      %v381 = vld [vmem:[%s4] sm:$0x1]
      %v383 = vlaneseq
      %v384 = vshrl.u32 %v383, 7
      %v385 = vsub.s32 0, %v384
      %v386 = vrot.slane %v381, %v385
      %v392 = vunpack.c.l.b16 %v377
      %v393 = vunpack.c.l.b16 %v378
      %v394 = vunpack.c.l.b16 %v379
      %v395 = vunpack.c.l.b16 %v380
      %v396 = vpack.c.b16 %v393, %v392
      %v397 = vpack.c.b16 %v395, %v394
      %v401 = vsel %vm239, %v373, 0
      %v404 = vsel %vm239, %v374, 0
      %v407 = vsel %vm239, %v375, 0
      %v410 = vsel %vm239, %v376, 0
      %412 = vmatprep.subr.bf16.mxu0 0
      %413 = vmatpush1.bf16.msra.mxu0 %v396
      %414 = vmatprep.subr.bf16.mxu0 0
      %415 = vmatpush1.bf16.msra.mxu0 %v397
      %416 = vmatprep.subr.bf16.mxu0 0
      %417 = vmatpush1.bf16.msra.mxu0 0
      %418 = vmatprep.subr.bf16.mxu0 0
      %419 = vmatpush1.bf16.msra.mxu0 0
      %420 = vmatprep.subr.bf16.mxu0 0
      %421 = vmatpush1.bf16.msra.mxu0 0
      %422 = vmatprep.subr.bf16.mxu0 0
      %423 = vmatpush1.bf16.msra.mxu0 0
      %424 = vmatprep.subr.bf16.mxu0 0
      %425 = vmatpush1.bf16.msra.mxu0 0
      %426 = vmatprep.subr.bf16.mxu0 0
      %427 = vmatpush1.bf16.msra.mxu0 0
      %428 = vmatprep.subr.bf16.mxu0 0
      %429 = vmatpush1.bf16.msra.mxu0 0
      %430 = vmatprep.subr.bf16.mxu0 0
      %431 = vmatpush1.bf16.msra.mxu0 0
      %432 = vmatprep.subr.bf16.mxu0 0
      %433 = vmatpush1.bf16.msra.mxu0 0
      %434 = vmatprep.subr.bf16.mxu0 0
      %435 = vmatpush1.bf16.msra.mxu0 0
      %436 = vmatprep.subr.bf16.mxu0 0
      %437 = vmatpush1.bf16.msra.mxu0 0
      %438 = vmatprep.subr.bf16.mxu0 0
      %439 = vmatpush1.bf16.msra.mxu0 0
      %440 = vmatprep.subr.bf16.mxu0 0
      %441 = vmatpush1.bf16.msra.mxu0 0
      %442 = vmatprep.subr.bf16.mxu0 0
      %443 = vmatpush1.bf16.msra.mxu0 0
      %444 = vmatprep.mubr.bf16.mxu0 0
      %445 = vmatmul.mubr.bf16.gmra.mrb[0].mxu0 %v401
      %v446 = vpop.f32.mrb[0].mxu0
      %v447 = vadd.f32 %v386, %v446
      %v448 = vpop.f32.mrb[0].mxu0
      %v449 = vpop.f32.mrb[0].mxu0
      %v450 = vadd.f32 %v386, %v449
      %v451 = vpop.f32.mrb[0].mxu0
      %452 = vmatprep.mubr.bf16.mxu0 0
      %453 = vmatmul.mubr.bf16.gmra.mrb[0].mxu0 %v404
      %v454 = vpop.f32.mrb[0].mxu0
      %v455 = vadd.f32 %v386, %v454
      %v456 = vpop.f32.mrb[0].mxu0
      %v457 = vpop.f32.mrb[0].mxu0
      %v458 = vadd.f32 %v386, %v457
      %v459 = vpop.f32.mrb[0].mxu0
      %460 = vmatprep.mubr.bf16.mxu0 0
      %461 = vmatmul.mubr.bf16.gmra.mrb[0].mxu0 %v407
      %v462 = vpop.f32.mrb[0].mxu0
      %v463 = vadd.f32 %v386, %v462
      %v464 = vpop.f32.mrb[0].mxu0
      %v465 = vpop.f32.mrb[0].mxu0
      %v466 = vadd.f32 %v386, %v465
      %v467 = vpop.f32.mrb[0].mxu0
      %468 = vmatprep.mubr.bf16.mxu0 0
      %469 = vmatmul.mubr.bf16.gmra.mrb[0].mxu0 %v410
      %v470 = vpop.f32.mrb[0].mxu0
      %v471 = vadd.f32 %v386, %v470
      %v472 = vpop.f32.mrb[0].mxu0
      %v473 = vpop.f32.mrb[0].mxu0
      %v474 = vadd.f32 %v386, %v473
      %v475 = vpop.f32.mrb[0].mxu0
      %476 = vdwg.mxu0
      %v477 = vpack.c.bf16 %v450, %v447
      %v478 = vpack.c.bf16 %v458, %v455
      %v479 = vpack.c.bf16 %v466, %v463
      %v480 = vpack.c.bf16 %v474, %v471
      %v485 = vunpack.c.l.b16 %v477
      %v486 = vunpack.c.h.b16 %v477
      %v487 = vunpack.c.l.b16 %v478
      %v488 = vunpack.c.h.b16 %v478
      %v489 = vunpack.c.l.b16 %v479
      %v490 = vunpack.c.h.b16 %v479
      %v491 = vunpack.c.l.b16 %v480
      %v492 = vunpack.c.h.b16 %v480
      %v493 = vpack.c.b16 %v485, %v485
      %v494 = vpack.c.b16 %v486, %v486
      %v495 = vpack.c.b16 %v487, %v487
      %v496 = vpack.c.b16 %v488, %v488
      %v497 = vpack.c.b16 %v489, %v489
      %v498 = vpack.c.b16 %v490, %v490
      %v499 = vpack.c.b16 %v491, %v491
      %v500 = vpack.c.b16 %v492, %v492
      %509 = vst [vmem:[%s226] sm:$0xf] %v493
      %510 = vst [vmem:[%s226 + $0x4] sm:$0xf] %v494
      %511 = vst [vmem:[%s226 + $0x8] sm:$0xf] %v495
      %512 = vst [vmem:[%s226 + $0xc] sm:$0xf] %v496
      %513 = vst [vmem:[%s226 + $0x10] sm:$0xf] %v497
      %514 = vst [vmem:[%s226 + $0x14] sm:$0xf] %v498
      %515 = vst [vmem:[%s226 + $0x18] sm:$0xf] %v499
      %516 = vst [vmem:[%s226 + $0x1c] sm:$0xf] %v500
      %s517 = smul.u32 8, %s16
      %p518 = scmp.lt.s32.totalorder %s517, 15
      %s519 = scalar_select %p518, %s517, 15
      %s520 = smul.addr %s519, 4
      %s521 = scalar_lea.vmem %s5, %s520
      // Predicated region
      $region41: #{block_forward.9} parent=39 // pred_check
        %p522 = pneg %p144
      $region42: #{block_forward.9} parent=39 // pred_check_branch
        %524 = sbr.rel (%p522) target = $region44
      $region43: #{block_forward.9} parent=39 // pred_region
        %s525 = smul.u32 8, %s16
      $region44: #{block_forward.9} parent=39 // pred_fallthru
        _
    $region40: #{block_forward.9} parent=5 // pred_fallthru
      _
    %p526 = scmp.le.s32.totalorder 2, %s11
    // Predicated region
    $region45: #{block_forward.9} parent=5 // pred_check
      %p527 = pneg %p526
    $region46: #{block_forward.9} parent=5 // pred_check_branch
      %529 = sbr.rel (%p527) target = $region48
    $region47: #{block_forward.9} parent=5 // pred_region
      %s530 = ssub.s32 %s11, 2
      // Predicated region
      $region49: #{block_forward.9} parent=47 // pred_check
        %p531 = pneg %p150
      $region50: #{block_forward.9} parent=47 // pred_check_branch
        %533 = sbr.rel (%p531) target = $region52
      $region51: #{block_forward.9} parent=47 // pred_region
        %s534 = smul.u32 8, %s17
        %p535 = scmp.lt.s32.totalorder %s534, 15
        %s536 = scalar_select %p535, %s534, 15
        %s537 = smul.addr %s536, 4
        %s538 = scalar_lea.vmem %s5, %s537
      $region52: #{block_forward.9} parent=47 // pred_fallthru
        _
    $region48: #{block_forward.9} parent=5 // pred_fallthru
      _
  $region6: #{block_forward.9} parent=0 // loop_footer
    %s15 = sadd.s32 1, %s11
  $region7: #{block_forward.9} parent=0 // loop_footer_branch
    %10 = sbr.rel target = $region3
  $region8: #{block_forward.9} parent=0 // loop_exit
    _

// kernel: block_forward.11
$region0: #{block_forward.11}
  #allocation0 [shape = 'u32[]', space=smem, size = 0x4, offset = 0x4, fixed_abs, tag = 'smem constant byte address 0x4 - core index']
  #allocation1 [shape = 'u32[144,128]{1,0:T(1,128)}', space=vmem, size = 0x12000, scoped, tag = 'internal scratch']
  %s0 = inlined_call_operand.vmem [shape: bf16[128,128], index: 0, kind: input, shape index: {}]
  %s1 = inlined_call_operand.vmem [shape: bf16[128,32], index: 1, kind: input, shape index: {}]
  %s2 = inlined_call_operand.vmem [shape: f32[1,32], index: 2, kind: input, shape index: {}]
  %s3 = inlined_call_operand.vmem [shape: f32[128,32], index: 3, kind: input, shape index: {}, may-alias: {3,4}]
  %s4 = inlined_call_operand.vmem [shape: f32[128,32], index: 4, kind: output, shape index: {}, may-alias: {3,4}]
  %s5 = sld [smem:[#allocation0]]
  $region49: #{block_forward.11} parent=0
    _
  %s7 = ssub.s32 1, %s5
  %s8 = scalar_select 0, %s7, %s5
  loop: start=0, step=1, limit=4
  $region2: #{block_forward.11} parent=0 // loop_pre_header
    _
  $region3: #{block_forward.11} parent=0 // loop_header
    %s10 = sphi 0, %s14
    %p11 = scmp.ge.s32.totalorder %s10, 4
    %s20 = sphi 0, %s22
    %s23 = sphi 0, %s20
    %s24 = sphi 0, %s23
    %s40 = sphi 0, %s24
    %s44 = sphi 0, %s44
    %s46 = sphi 0, %s44
    %s47 = sphi 0, %s46
    %s61 = sphi 0, %s47
    %s65 = sphi 0, %s65
    %s67 = sphi 0, %s65
    %s68 = sphi 0, %s67
    %s82 = sphi 0, %s68
    %s88 = sphi 0, %s90
    %s91 = sphi 0, %s88
    %s92 = sphi 0, %s91
    %s108 = sphi 0, %s92
    %s114 = sphi 0, %s116
    %s117 = sphi 0, %s114
    %s118 = sphi 0, %s117
    %s134 = sphi 0, %s118
  $region4: #{block_forward.11} parent=0 // loop_header_branch
    %13 = sbr.rel (%p11) target = $region8
  $region5: #{block_forward.11} parent=0 // loop_body
    %s15 = ssub.s32 %s10, 1
    %s16 = ssub.s32 %s10, 2
    %s17 = sadd.s32 %s10, 1
    %s18 = ssub.s32 %s10, %s17
    %p19 = scmp.eq.s32.totalorder %s18, 0
    %s21 = sadd.s32 %s20, 1
    %s22 = scalar_select %p19, %s20, %s21
    %p25 = pneg %p19
    %p26 = scmp.eq.s32.totalorder %s10, 1
    %p27 = por %p25, %p26
    %p28 = scmp.ne.s32.totalorder %s20, %s23
    %p29 = scmp.eq.s32.totalorder %s10, 0
    %p30 = por %p28, %p29
    %p31 = scmp.ne.s32.totalorder %s20, %s23
    %p32 = scmp.eq.s32.totalorder %s15, 1
    %p33 = por %p31, %p32
    %p34 = scmp.ne.s32.totalorder %s23, %s24
    %p35 = scmp.eq.s32.totalorder %s15, 0
    %p36 = por %p34, %p35
    %p37 = scmp.ne.s32.totalorder %s23, %s24
    %p38 = scmp.eq.s32.totalorder %s16, 1
    %p39 = por %p37, %p38
    %p41 = scmp.ne.s32.totalorder %s24, %s40
    %p42 = scmp.eq.s32.totalorder %s16, 0
    %p43 = por %p41, %p42
    %s45 = sadd.s32 %s44, 1
    %p48 = scmp.eq.s32.totalorder %s10, 1
    %p49 = scmp.ne.s32.totalorder %s44, %s46
    %p50 = scmp.eq.s32.totalorder %s10, 0
    %p51 = por %p49, %p50
    %p52 = scmp.ne.s32.totalorder %s44, %s46
    %p53 = scmp.eq.s32.totalorder %s15, 1
    %p54 = por %p52, %p53
    %p55 = scmp.ne.s32.totalorder %s46, %s47
    %p56 = scmp.eq.s32.totalorder %s15, 0
    %p57 = por %p55, %p56
    %p58 = scmp.ne.s32.totalorder %s46, %s47
    %p59 = scmp.eq.s32.totalorder %s16, 1
    %p60 = por %p58, %p59
    %p62 = scmp.ne.s32.totalorder %s47, %s61
    %p63 = scmp.eq.s32.totalorder %s16, 0
    %p64 = por %p62, %p63
    %s66 = sadd.s32 %s65, 1
    %p69 = scmp.eq.s32.totalorder %s10, 1
    %p70 = scmp.ne.s32.totalorder %s65, %s67
    %p71 = scmp.eq.s32.totalorder %s10, 0
    %p72 = por %p70, %p71
    %p73 = scmp.ne.s32.totalorder %s65, %s67
    %p74 = scmp.eq.s32.totalorder %s15, 1
    %p75 = por %p73, %p74
    %p76 = scmp.ne.s32.totalorder %s67, %s68
    %p77 = scmp.eq.s32.totalorder %s15, 0
    %p78 = por %p76, %p77
    %p79 = scmp.ne.s32.totalorder %s67, %s68
    %p80 = scmp.eq.s32.totalorder %s16, 1
    %p81 = por %p79, %p80
    %p83 = scmp.ne.s32.totalorder %s68, %s82
    %p84 = scmp.eq.s32.totalorder %s16, 0
    %p85 = por %p83, %p84
    %s86 = ssub.s32 %s10, %s17
    %p87 = scmp.eq.s32.totalorder %s86, 0
    %s89 = sadd.s32 %s88, 1
    %s90 = scalar_select %p87, %s88, %s89
    %p93 = pneg %p87
    %p94 = scmp.eq.s32.totalorder %s10, 1
    %p95 = por %p93, %p94
    %p96 = scmp.ne.s32.totalorder %s88, %s91
    %p97 = scmp.eq.s32.totalorder %s10, 0
    %p98 = por %p96, %p97
    %p99 = scmp.ne.s32.totalorder %s88, %s91
    %p100 = scmp.eq.s32.totalorder %s15, 1
    %p101 = por %p99, %p100
    %p102 = scmp.ne.s32.totalorder %s91, %s92
    %p103 = scmp.eq.s32.totalorder %s15, 0
    %p104 = por %p102, %p103
    %p105 = scmp.ne.s32.totalorder %s91, %s92
    %p106 = scmp.eq.s32.totalorder %s16, 1
    %p107 = por %p105, %p106
    %p109 = scmp.ne.s32.totalorder %s92, %s108
    %p110 = scmp.eq.s32.totalorder %s16, 0
    %p111 = por %p109, %p110
    %s112 = ssub.s32 %s10, %s17
    %p113 = scmp.eq.s32.totalorder %s112, 0
    %s115 = sadd.s32 %s114, 1
    %s116 = scalar_select %p113, %s114, %s115
    %p119 = pneg %p113
    %p120 = scmp.eq.s32.totalorder %s10, 1
    %p121 = por %p119, %p120
    %p122 = scmp.ne.s32.totalorder %s114, %s117
    %p123 = scmp.eq.s32.totalorder %s10, 0
    %p124 = por %p122, %p123
    %p125 = scmp.ne.s32.totalorder %s114, %s117
    %p126 = scmp.eq.s32.totalorder %s15, 1
    %p127 = por %p125, %p126
    %p128 = scmp.ne.s32.totalorder %s117, %s118
    %p129 = scmp.eq.s32.totalorder %s15, 0
    %p130 = por %p128, %p129
    %p131 = scmp.ne.s32.totalorder %s117, %s118
    %p132 = scmp.eq.s32.totalorder %s16, 1
    %p133 = por %p131, %p132
    %p135 = scmp.ne.s32.totalorder %s118, %s134
    %p136 = scmp.eq.s32.totalorder %s16, 0
    %p137 = por %p135, %p136
    %p138 = scmp.le.s32.totalorder 1, %s10
    %p139 = scmp.lt.s32.totalorder %s10, 3
    %p140 = pnand %p138, %p139
    %p141 = pneg %p140
    // Predicated region
    $region9: #{block_forward.11} parent=5 // pred_check
      _
    $region10: #{block_forward.11} parent=5 // pred_check_branch
      %143 = sbr.rel (%p140) target = $region12
    $region11: #{block_forward.11} parent=5 // pred_region
      %s144 = ssub.s32 %s10, 1
      // Predicated region
      $region13: #{block_forward.11} parent=11 // pred_check
        %p145 = pneg %p57
      $region14: #{block_forward.11} parent=11 // pred_check_branch
        %147 = sbr.rel (%p145) target = $region16
      $region15: #{block_forward.11} parent=11 // pred_region
        _
      $region16: #{block_forward.11} parent=11 // pred_fallthru
        _
      // Predicated region
      $region17: #{block_forward.11} parent=11 // pred_check
        %p148 = pneg %p78
      $region18: #{block_forward.11} parent=11 // pred_check_branch
        %150 = sbr.rel (%p148) target = $region20
      $region19: #{block_forward.11} parent=11 // pred_region
        _
      $region20: #{block_forward.11} parent=11 // pred_fallthru
        _
    $region12: #{block_forward.11} parent=5 // pred_fallthru
      _
    %p151 = scmp.lt.s32.totalorder %s10, 2
    // Predicated region
    $region21: #{block_forward.11} parent=5 // pred_check
      %p152 = pneg %p151
    $region22: #{block_forward.11} parent=5 // pred_check_branch
      %154 = sbr.rel (%p152) target = $region24
    $region23: #{block_forward.11} parent=5 // pred_region
      // Predicated region
      $region25: #{block_forward.11} parent=23 // pred_check
        %p155 = pneg %p30
      $region26: #{block_forward.11} parent=23 // pred_check_branch
        %157 = sbr.rel (%p155) target = $region28
      $region27: #{block_forward.11} parent=23 // pred_region
        %s158 = smul.u32 8, %s10
        %p159 = scmp.lt.s32.totalorder %s158, 15
        %s160 = scalar_select %p159, %s158, 15
        %s161 = smul.addr %s160, 4
        %s162 = scalar_lea.vmem %s0, %s161
        %s163 = smul.u32 8, %s10
      $region28: #{block_forward.11} parent=23 // pred_fallthru
        _
      // Predicated region
      $region29: #{block_forward.11} parent=23 // pred_check
        %p164 = pneg %p98
      $region30: #{block_forward.11} parent=23 // pred_check_branch
        %166 = sbr.rel (%p164) target = $region32
      $region31: #{block_forward.11} parent=23 // pred_region
        %s167 = smul.u32 8, %s10
        %p168 = scmp.lt.s32.totalorder %s167, 15
        %s169 = scalar_select %p168, %s167, 15
        %s170 = smul.addr %s169, 8
        %s171 = scalar_lea.vmem %s3, %s170
        %s172 = smul.u32 8, %s10
      $region32: #{block_forward.11} parent=23 // pred_fallthru
        _
    $region24: #{block_forward.11} parent=5 // pred_fallthru
      _
    %p173 = scmp.le.s32.totalorder 1, %s10
    %p174 = scmp.lt.s32.totalorder %s10, 3
    %p175 = pnand %p173, %p174
    %p176 = pneg %p175
    // Predicated region
    $region33: #{block_forward.11} parent=5 // pred_check
      _
    $region34: #{block_forward.11} parent=5 // pred_check_branch
      %178 = sbr.rel (%p175) target = $region36
    $region35: #{block_forward.11} parent=5 // pred_region
      %s179 = ssub.s32 %s10, 1
      %s180 = smul.u32 8, %s15
      %p181 = scmp.lt.s32.totalorder %s180, 15
      %s182 = scalar_select %p181, %s180, 15
      %s183 = smul.addr %s182, 4
      %s184 = scalar_lea.vmem %s0, %s183
      %p185 = pneg %p36
      %p186 = pneg %p33
      %p187 = pneg %p57
      %p188 = pneg %p54
      %p189 = pneg %p78
      %p190 = pneg %p75
      %s191 = smul.u32 8, %s15
      %p192 = scmp.lt.s32.totalorder %s191, 15
      %s193 = scalar_select %p192, %s191, 15
      %s194 = smul.addr %s193, 8
      %s195 = scalar_lea.vmem %s3, %s194
      %p196 = pneg %p104
      %p197 = pneg %p101
      %p198 = pneg %p130
      %p199 = pneg %p127
      %s200 = smul.u32 8, %s15
      %p201 = scmp.lt.s32.totalorder %s200, 15
      %s202 = scalar_select %p201, %s200, 15
      %s203 = smul.addr %s202, 8
      %s204 = scalar_lea.vmem %s4, %s203
      %s205 = smul.u32 8, %s15
      %p206 = scmp.lt.s32.totalorder %s205, 15
      %s207 = scalar_select %p206, %s205, 15
      %s208 = smul.addr %s207, 4
      %s209 = scalar_lea.vmem %s0, %s208
      %s210 = smul.u32 8, %s15
      %s211 = smul.u32 8, %s15
      %p212 = scmp.lt.s32.totalorder %s211, 15
      %s213 = scalar_select %p212, %s211, 15
      %s214 = smul.addr %s213, 8
      %s215 = scalar_lea.vmem %s3, %s214
      %s216 = smul.u32 8, %s15
      %s217 = smul.u32 8, %s15
      %p218 = scmp.lt.s32.totalorder %s217, 15
      %s219 = scalar_select %p218, %s217, 15
      %s220 = smul.addr %s219, 8
      %s221 = scalar_lea.vmem %s4, %s220
      %s222 = smul.u32 8, %s15
      %v224 = vld [vmem:[%s209] sm:$0xf]
      %v225 = vld [vmem:[%s209 + $0x4] sm:$0xf]
      %v226 = vld [vmem:[%s209 + $0x8] sm:$0xf]
      %v227 = vld [vmem:[%s209 + $0xc] sm:$0xf]
      %v228 = vld [vmem:[%s209 + $0x10] sm:$0xf]
      %v229 = vld [vmem:[%s209 + $0x14] sm:$0xf]
      %v230 = vld [vmem:[%s209 + $0x18] sm:$0xf]
      %v231 = vld [vmem:[%s209 + $0x1c] sm:$0xf]
      %v232 = vld [vmem:[%s1] sm:$0xf]
      %v233 = vld [vmem:[%s1 + $0x4] sm:$0xf]
      %v234 = vld [vmem:[%s1 + $0x8] sm:$0xf]
      %v235 = vld [vmem:[%s1 + $0xc] sm:$0xf]
      %v236 = vld [vmem:[%s1 + $0x10] sm:$0xf]
      %v237 = vld [vmem:[%s1 + $0x14] sm:$0xf]
      %v238 = vld [vmem:[%s1 + $0x18] sm:$0xf]
      %v239 = vld [vmem:[%s1 + $0x1c] sm:$0xf]
      %v240 = vld [vmem:[%s1 + $0x20] sm:$0xf]
      %v241 = vld [vmem:[%s1 + $0x24] sm:$0xf]
      %v242 = vld [vmem:[%s1 + $0x28] sm:$0xf]
      %v243 = vld [vmem:[%s1 + $0x2c] sm:$0xf]
      %v244 = vld [vmem:[%s1 + $0x30] sm:$0xf]
      %v245 = vld [vmem:[%s1 + $0x34] sm:$0xf]
      %v246 = vld [vmem:[%s1 + $0x38] sm:$0xf]
      %v247 = vld [vmem:[%s1 + $0x3c] sm:$0xf]
      %v248 = vld [vmem:[%s2] sm:$0x1]
      %v250 = vlaneseq
      %v251 = vshrl.u32 %v250, 7
      %v252 = vsub.s32 0, %v251
      %v253 = vrot.slane %v248, %v252
      %v263 = vunpack.c.l.b16 %v224
      %v264 = vunpack.c.l.b16 %v225
      %v265 = vunpack.c.l.b16 %v226
      %v266 = vunpack.c.l.b16 %v227
      %v267 = vunpack.c.l.b16 %v228
      %v268 = vunpack.c.l.b16 %v229
      %v269 = vunpack.c.l.b16 %v230
      %v270 = vunpack.c.l.b16 %v231
      %v271 = vpack.c.b16 %v264, %v263
      %v272 = vpack.c.b16 %v266, %v265
      %v273 = vpack.c.b16 %v268, %v267
      %v274 = vpack.c.b16 %v270, %v269
      %v295 = vunpack.c.l.b16 %v232
      %v296 = vunpack.c.l.b16 %v233
      %v297 = vunpack.c.l.b16 %v234
      %v298 = vunpack.c.l.b16 %v235
      %v299 = vunpack.c.l.b16 %v236
      %v300 = vunpack.c.l.b16 %v237
      %v301 = vunpack.c.l.b16 %v238
      %v302 = vunpack.c.l.b16 %v239
      %v303 = vunpack.c.l.b16 %v240
      %v304 = vunpack.c.l.b16 %v241
      %v305 = vunpack.c.l.b16 %v242
      %v306 = vunpack.c.l.b16 %v243
      %v307 = vunpack.c.l.b16 %v244
      %v308 = vunpack.c.l.b16 %v245
      %v309 = vunpack.c.l.b16 %v246
      %v310 = vunpack.c.l.b16 %v247
      %v311 = vpack.c.b16 %v296, %v295
      %v312 = vpack.c.b16 %v298, %v297
      %v313 = vpack.c.b16 %v300, %v299
      %v314 = vpack.c.b16 %v302, %v301
      %v315 = vpack.c.b16 %v304, %v303
      %v316 = vpack.c.b16 %v306, %v305
      %v317 = vpack.c.b16 %v308, %v307
      %v318 = vpack.c.b16 %v310, %v309
      %327 = vmatprep.subr.bf16.mxu0 0
      %328 = vmatpush1.bf16.msra.mxu0 %v311
      %329 = vmatprep.subr.bf16.mxu0 0
      %330 = vmatpush1.bf16.msra.mxu0 %v312
      %331 = vmatprep.subr.bf16.mxu0 0
      %332 = vmatpush1.bf16.msra.mxu0 %v313
      %333 = vmatprep.subr.bf16.mxu0 0
      %334 = vmatpush1.bf16.msra.mxu0 %v314
      %335 = vmatprep.subr.bf16.mxu0 0
      %336 = vmatpush1.bf16.msra.mxu0 %v315
      %337 = vmatprep.subr.bf16.mxu0 0
      %338 = vmatpush1.bf16.msra.mxu0 %v316
      %339 = vmatprep.subr.bf16.mxu0 0
      %340 = vmatpush1.bf16.msra.mxu0 %v317
      %341 = vmatprep.subr.bf16.mxu0 0
      %342 = vmatpush1.bf16.msra.mxu0 %v318
      %343 = vmatprep.subr.bf16.mxu0 0
      %344 = vmatpush1.bf16.msra.mxu0 0
      %345 = vmatprep.subr.bf16.mxu0 0
      %346 = vmatpush1.bf16.msra.mxu0 0
      %347 = vmatprep.subr.bf16.mxu0 0
      %348 = vmatpush1.bf16.msra.mxu0 0
      %349 = vmatprep.subr.bf16.mxu0 0
      %350 = vmatpush1.bf16.msra.mxu0 0
      %351 = vmatprep.subr.bf16.mxu0 0
      %352 = vmatpush1.bf16.msra.mxu0 0
      %353 = vmatprep.subr.bf16.mxu0 0
      %354 = vmatpush1.bf16.msra.mxu0 0
      %355 = vmatprep.subr.bf16.mxu0 0
      %356 = vmatpush1.bf16.msra.mxu0 0
      %357 = vmatprep.subr.bf16.mxu0 0
      %358 = vmatpush1.bf16.msra.mxu0 0
      %359 = vmatprep.mubr.bf16.mxu0 0
      %360 = vmatmul.mubr.bf16.gmra.mrb[0].mxu0 %v271
      %v361 = vpop.f32.mrb[0].mxu0
      %v362 = vadd.f32 %v253, %v361
      %v363 = vpop.f32.mrb[0].mxu0
      %v364 = vpop.f32.mrb[0].mxu0
      %v365 = vadd.f32 %v253, %v364
      %v366 = vpop.f32.mrb[0].mxu0
      %367 = vmatprep.mubr.bf16.mxu0 0
      %368 = vmatmul.mubr.bf16.gmra.mrb[0].mxu0 %v272
      %v369 = vpop.f32.mrb[0].mxu0
      %v370 = vadd.f32 %v253, %v369
      %v371 = vpop.f32.mrb[0].mxu0
      %v372 = vpop.f32.mrb[0].mxu0
      %v373 = vadd.f32 %v253, %v372
      %v374 = vpop.f32.mrb[0].mxu0
      %375 = vmatprep.mubr.bf16.mxu0 0
      %376 = vmatmul.mubr.bf16.gmra.mrb[0].mxu0 %v273
      %v377 = vpop.f32.mrb[0].mxu0
      %v378 = vadd.f32 %v253, %v377
      %v379 = vpop.f32.mrb[0].mxu0
      %v380 = vpop.f32.mrb[0].mxu0
      %v381 = vadd.f32 %v253, %v380
      %v382 = vpop.f32.mrb[0].mxu0
      %383 = vmatprep.mubr.bf16.mxu0 0
      %384 = vmatmul.mubr.bf16.gmra.mrb[0].mxu0 %v274
      %v385 = vpop.f32.mrb[0].mxu0
      %v386 = vadd.f32 %v253, %v385
      %v387 = vpop.f32.mrb[0].mxu0
      %v388 = vpop.f32.mrb[0].mxu0
      %v389 = vadd.f32 %v253, %v388
      %v390 = vpop.f32.mrb[0].mxu0
      %391 = vdwg.mxu0
      %v392 = vld [vmem:[%s215] sm:$0xff]
      %v393 = vld [vmem:[%s215 + $0x8] sm:$0xff]
      %v394 = vld [vmem:[%s215 + $0x10] sm:$0xff]
      %v395 = vld [vmem:[%s215 + $0x18] sm:$0xff]
      %v396 = vld [vmem:[%s215 + $0x20] sm:$0xff]
      %v397 = vld [vmem:[%s215 + $0x28] sm:$0xff]
      %v398 = vld [vmem:[%s215 + $0x30] sm:$0xff]
      %v399 = vld [vmem:[%s215 + $0x38] sm:$0xff]
      %v400 = vadd.f32 %v362, %v392
      %v401 = vadd.f32 %v365, %v393
      %v402 = vadd.f32 %v370, %v394
      %v403 = vadd.f32 %v373, %v395
      %v404 = vadd.f32 %v378, %v396
      %v405 = vadd.f32 %v381, %v397
      %v406 = vadd.f32 %v386, %v398
      %v407 = vadd.f32 %v389, %v399
      %vm408 = vcmask 261120
      %409 = vst.msk [vmem:[%s221] sm:$0xff] %vm408, %v400
      %410 = vst.msk [vmem:[%s221 + $0x8] sm:$0xff] %vm408, %v401
      %411 = vst.msk [vmem:[%s221 + $0x10] sm:$0xff] %vm408, %v402
      %412 = vst.msk [vmem:[%s221 + $0x18] sm:$0xff] %vm408, %v403
      %413 = vst.msk [vmem:[%s221 + $0x20] sm:$0xff] %vm408, %v404
      %414 = vst.msk [vmem:[%s221 + $0x28] sm:$0xff] %vm408, %v405
      %415 = vst.msk [vmem:[%s221 + $0x30] sm:$0xff] %vm408, %v406
      %416 = vst.msk [vmem:[%s221 + $0x38] sm:$0xff] %vm408, %v407
      %s417 = smul.u32 8, %s15
      %p418 = scmp.lt.s32.totalorder %s417, 15
      %s419 = scalar_select %p418, %s417, 15
      %s420 = smul.addr %s419, 8
      %s421 = scalar_lea.vmem %s4, %s420
      // Predicated region
      $region37: #{block_forward.11} parent=35 // pred_check
        %p422 = pneg %p127
      $region38: #{block_forward.11} parent=35 // pred_check_branch
        %424 = sbr.rel (%p422) target = $region40
      $region39: #{block_forward.11} parent=35 // pred_region
        %s425 = smul.u32 8, %s15
      $region40: #{block_forward.11} parent=35 // pred_fallthru
        _
    $region36: #{block_forward.11} parent=5 // pred_fallthru
      _
    %p426 = scmp.le.s32.totalorder 2, %s10
    // Predicated region
    $region41: #{block_forward.11} parent=5 // pred_check
      %p427 = pneg %p426
    $region42: #{block_forward.11} parent=5 // pred_check_branch
      %429 = sbr.rel (%p427) target = $region44
    $region43: #{block_forward.11} parent=5 // pred_region
      %s430 = ssub.s32 %s10, 2
      // Predicated region
      $region45: #{block_forward.11} parent=43 // pred_check
        %p431 = pneg %p133
      $region46: #{block_forward.11} parent=43 // pred_check_branch
        %433 = sbr.rel (%p431) target = $region48
      $region47: #{block_forward.11} parent=43 // pred_region
        %s434 = smul.u32 8, %s16
        %p435 = scmp.lt.s32.totalorder %s434, 15
        %s436 = scalar_select %p435, %s434, 15
        %s437 = smul.addr %s436, 8
        %s438 = scalar_lea.vmem %s4, %s437
      $region48: #{block_forward.11} parent=43 // pred_fallthru
        _
    $region44: #{block_forward.11} parent=5 // pred_fallthru
      _
  $region6: #{block_forward.11} parent=0 // loop_footer
    %s14 = sadd.s32 1, %s10
  $region7: #{block_forward.11} parent=0 // loop_footer_branch
    %9 = sbr.rel target = $region3
  $region8: #{block_forward.11} parent=0 // loop_exit
    _

// kernel: block_forward.10
$region0: #{block_forward.10}
  #allocation0 [shape = 'u32[]', space=smem, size = 0x4, offset = 0x4, fixed_abs, tag = 'smem constant byte address 0x4 - core index']
  #allocation1 [shape = 'u32[144,128]{1,0:T(1,128)}', space=vmem, size = 0x12000, scoped, tag = 'internal scratch']
  %s0 = inlined_call_operand.vmem [shape: bf16[2,10,10,128], index: 0, kind: input, shape index: {}]
  %s1 = inlined_call_operand.vmem [shape: f32[3,3,128], index: 1, kind: input, shape index: {}]
  %s2 = inlined_call_operand.vmem [shape: f32[1,128], index: 2, kind: input, shape index: {}]
  %s3 = inlined_call_operand.vmem [shape: bf16[2,8,8,128], index: 3, kind: output, shape index: {}]
  %s4 = sld [smem:[#allocation0]]
  $region45: #{block_forward.10} parent=0
    _
  %s6 = ssub.s32 1, %s4
  %s7 = scalar_select 0, %s6, %s4
  loop: start=0, step=1, limit=4
  $region2: #{block_forward.10} parent=0 // loop_pre_header
    _
  $region3: #{block_forward.10} parent=0 // loop_header
    %s9 = sphi 0, %s13
    %p10 = scmp.ge.s32.totalorder %s9, 4
    %s19 = sphi 0, %s21
    %s22 = sphi 0, %s19
    %s23 = sphi 0, %s22
    %s39 = sphi 0, %s23
    %s43 = sphi 0, %s43
    %s45 = sphi 0, %s43
    %s46 = sphi 0, %s45
    %s60 = sphi 0, %s46
    %s64 = sphi 0, %s64
    %s66 = sphi 0, %s64
    %s67 = sphi 0, %s66
    %s81 = sphi 0, %s67
    %s87 = sphi 0, %s89
    %s90 = sphi 0, %s87
    %s91 = sphi 0, %s90
    %s107 = sphi 0, %s91
  $region4: #{block_forward.10} parent=0 // loop_header_branch
    %12 = sbr.rel (%p10) target = $region8
  $region5: #{block_forward.10} parent=0 // loop_body
    %s14 = ssub.s32 %s9, 1
    %s15 = ssub.s32 %s9, 2
    %s16 = sadd.s32 %s9, 1
    %s17 = ssub.s32 %s9, %s16
    %p18 = scmp.eq.s32.totalorder %s17, 0
    %s20 = sadd.s32 %s19, 1
    %s21 = scalar_select %p18, %s19, %s20
    %p24 = pneg %p18
    %p25 = scmp.eq.s32.totalorder %s9, 1
    %p26 = por %p24, %p25
    %p27 = scmp.ne.s32.totalorder %s19, %s22
    %p28 = scmp.eq.s32.totalorder %s9, 0
    %p29 = por %p27, %p28
    %p30 = scmp.ne.s32.totalorder %s19, %s22
    %p31 = scmp.eq.s32.totalorder %s14, 1
    %p32 = por %p30, %p31
    %p33 = scmp.ne.s32.totalorder %s22, %s23
    %p34 = scmp.eq.s32.totalorder %s14, 0
    %p35 = por %p33, %p34
    %p36 = scmp.ne.s32.totalorder %s22, %s23
    %p37 = scmp.eq.s32.totalorder %s15, 1
    %p38 = por %p36, %p37
    %p40 = scmp.ne.s32.totalorder %s23, %s39
    %p41 = scmp.eq.s32.totalorder %s15, 0
    %p42 = por %p40, %p41
    %s44 = sadd.s32 %s43, 1
    %p47 = scmp.eq.s32.totalorder %s9, 1
    %p48 = scmp.ne.s32.totalorder %s43, %s45
    %p49 = scmp.eq.s32.totalorder %s9, 0
    %p50 = por %p48, %p49
    %p51 = scmp.ne.s32.totalorder %s43, %s45
    %p52 = scmp.eq.s32.totalorder %s14, 1
    %p53 = por %p51, %p52
    %p54 = scmp.ne.s32.totalorder %s45, %s46
    %p55 = scmp.eq.s32.totalorder %s14, 0
    %p56 = por %p54, %p55
    %p57 = scmp.ne.s32.totalorder %s45, %s46
    %p58 = scmp.eq.s32.totalorder %s15, 1
    %p59 = por %p57, %p58
    %p61 = scmp.ne.s32.totalorder %s46, %s60
    %p62 = scmp.eq.s32.totalorder %s15, 0
    %p63 = por %p61, %p62
    %s65 = sadd.s32 %s64, 1
    %p68 = scmp.eq.s32.totalorder %s9, 1
    %p69 = scmp.ne.s32.totalorder %s64, %s66
    %p70 = scmp.eq.s32.totalorder %s9, 0
    %p71 = por %p69, %p70
    %p72 = scmp.ne.s32.totalorder %s64, %s66
    %p73 = scmp.eq.s32.totalorder %s14, 1
    %p74 = por %p72, %p73
    %p75 = scmp.ne.s32.totalorder %s66, %s67
    %p76 = scmp.eq.s32.totalorder %s14, 0
    %p77 = por %p75, %p76
    %p78 = scmp.ne.s32.totalorder %s66, %s67
    %p79 = scmp.eq.s32.totalorder %s15, 1
    %p80 = por %p78, %p79
    %p82 = scmp.ne.s32.totalorder %s67, %s81
    %p83 = scmp.eq.s32.totalorder %s15, 0
    %p84 = por %p82, %p83
    %s85 = ssub.s32 %s9, %s16
    %p86 = scmp.eq.s32.totalorder %s85, 0
    %s88 = sadd.s32 %s87, 1
    %s89 = scalar_select %p86, %s87, %s88
    %p92 = pneg %p86
    %p93 = scmp.eq.s32.totalorder %s9, 1
    %p94 = por %p92, %p93
    %p95 = scmp.ne.s32.totalorder %s87, %s90
    %p96 = scmp.eq.s32.totalorder %s9, 0
    %p97 = por %p95, %p96
    %p98 = scmp.ne.s32.totalorder %s87, %s90
    %p99 = scmp.eq.s32.totalorder %s14, 1
    %p100 = por %p98, %p99
    %p101 = scmp.ne.s32.totalorder %s90, %s91
    %p102 = scmp.eq.s32.totalorder %s14, 0
    %p103 = por %p101, %p102
    %p104 = scmp.ne.s32.totalorder %s90, %s91
    %p105 = scmp.eq.s32.totalorder %s15, 1
    %p106 = por %p104, %p105
    %p108 = scmp.ne.s32.totalorder %s91, %s107
    %p109 = scmp.eq.s32.totalorder %s15, 0
    %p110 = por %p108, %p109
    %p111 = scmp.le.s32.totalorder 1, %s9
    %p112 = scmp.lt.s32.totalorder %s9, 3
    %p113 = pnand %p111, %p112
    %p114 = pneg %p113
    // Predicated region
    $region9: #{block_forward.10} parent=5 // pred_check
      _
    $region10: #{block_forward.10} parent=5 // pred_check_branch
      %116 = sbr.rel (%p113) target = $region12
    $region11: #{block_forward.10} parent=5 // pred_region
      %s117 = ssub.s32 %s9, 1
      // Predicated region
      $region13: #{block_forward.10} parent=11 // pred_check
        %p118 = pneg %p56
      $region14: #{block_forward.10} parent=11 // pred_check_branch
        %120 = sbr.rel (%p118) target = $region16
      $region15: #{block_forward.10} parent=11 // pred_region
        _
      $region16: #{block_forward.10} parent=11 // pred_fallthru
        _
      // Predicated region
      $region17: #{block_forward.10} parent=11 // pred_check
        %p121 = pneg %p77
      $region18: #{block_forward.10} parent=11 // pred_check_branch
        %123 = sbr.rel (%p121) target = $region20
      $region19: #{block_forward.10} parent=11 // pred_region
        _
      $region20: #{block_forward.10} parent=11 // pred_fallthru
        _
    $region12: #{block_forward.10} parent=5 // pred_fallthru
      _
    %p124 = scmp.lt.s32.totalorder %s9, 2
    // Predicated region
    $region21: #{block_forward.10} parent=5 // pred_check
      %p125 = pneg %p124
    $region22: #{block_forward.10} parent=5 // pred_check_branch
      %127 = sbr.rel (%p125) target = $region24
    $region23: #{block_forward.10} parent=5 // pred_region
      // Predicated region
      $region25: #{block_forward.10} parent=23 // pred_check
        %p128 = pneg %p29
      $region26: #{block_forward.10} parent=23 // pred_check_branch
        %130 = sbr.rel (%p128) target = $region28
      $region27: #{block_forward.10} parent=23 // pred_region
        %p131 = scmp.lt.s32.totalorder %s9, 1
        %s132 = scalar_select %p131, %s9, 1
        %s133 = smul.addr %s132, 20
        %s134 = smul.addr %s133, 4
        %s135 = scalar_lea.vmem %s0, %s134
      $region28: #{block_forward.10} parent=23 // pred_fallthru
        _
    $region24: #{block_forward.10} parent=5 // pred_fallthru
      _
    %p136 = scmp.le.s32.totalorder 1, %s9
    %p137 = scmp.lt.s32.totalorder %s9, 3
    %p138 = pnand %p136, %p137
    %p139 = pneg %p138
    // Predicated region
    $region29: #{block_forward.10} parent=5 // pred_check
      _
    $region30: #{block_forward.10} parent=5 // pred_check_branch
      %141 = sbr.rel (%p138) target = $region32
    $region31: #{block_forward.10} parent=5 // pred_region
      %s142 = ssub.s32 %s9, 1
      %p143 = scmp.lt.s32.totalorder %s14, 1
      %s144 = scalar_select %p143, %s14, 1
      %s145 = smul.addr %s144, 20
      %s146 = smul.addr %s145, 4
      %s147 = scalar_lea.vmem %s0, %s146
      %p148 = pneg %p35
      %p149 = pneg %p32
      %p150 = pneg %p56
      %p151 = pneg %p53
      %p152 = pneg %p77
      %p153 = pneg %p74
      %p154 = pneg %p103
      %p155 = pneg %p100
      %p156 = scmp.lt.s32.totalorder %s14, 1
      %s157 = scalar_select %p156, %s14, 1
      %s158 = smul.addr %s157, 8
      %s159 = smul.addr %s158, 4
      %s160 = scalar_lea.vmem %s3, %s159
      %p161 = scmp.lt.s32.totalorder %s14, 1
      %s162 = scalar_select %p161, %s14, 1
      %s163 = smul.addr %s162, 20
      %s164 = smul.addr %s163, 4
      %s165 = scalar_lea.vmem %s0, %s164
      %p166 = scmp.lt.s32.totalorder %s14, 1
      %s167 = scalar_select %p166, %s14, 1
      %s168 = smul.addr %s167, 8
      %s169 = smul.addr %s168, 4
      %s170 = scalar_lea.vmem %s3, %s169
      %v171 = vld [vmem:[%s165] sm:$0xf]
      %v172 = vld [vmem:[%s165 + $0x4] sm:$0x1]
      %v173 = vld [vmem:[%s165 + $0x8] sm:$0xf]
      %v174 = vld [vmem:[%s165 + $0xc] sm:$0x1]
      %v175 = vld [vmem:[%s165 + $0x10] sm:$0xf]
      %v176 = vld [vmem:[%s165 + $0x14] sm:$0x1]
      %v177 = vld [vmem:[%s165 + $0x18] sm:$0xf]
      %v178 = vld [vmem:[%s165 + $0x1c] sm:$0x1]
      %v179 = vld [vmem:[%s165 + $0x20] sm:$0xf]
      %v180 = vld [vmem:[%s165 + $0x24] sm:$0x1]
      %v181 = vld [vmem:[%s165 + $0x28] sm:$0xf]
      %v182 = vld [vmem:[%s165 + $0x2c] sm:$0x1]
      %v183 = vld [vmem:[%s165 + $0x30] sm:$0xf]
      %v184 = vld [vmem:[%s165 + $0x34] sm:$0x1]
      %v185 = vld [vmem:[%s165 + $0x38] sm:$0xf]
      %v186 = vld [vmem:[%s165 + $0x3c] sm:$0x1]
      %v187 = vld [vmem:[%s165 + $0x40] sm:$0xf]
      %v188 = vld [vmem:[%s165 + $0x44] sm:$0x1]
      %v189 = vld [vmem:[%s165 + $0x48] sm:$0xf]
      %v190 = vld [vmem:[%s165 + $0x4c] sm:$0x1]
      %v191 = vunpack.c.l.bf16 %v171
      %v192 = vunpack.c.l.bf16 %v172
      %v193 = vunpack.c.l.bf16 %v173
      %v194 = vunpack.c.l.bf16 %v174
      %v195 = vunpack.c.l.bf16 %v175
      %v196 = vunpack.c.l.bf16 %v176
      %v197 = vunpack.c.l.bf16 %v177
      %v198 = vunpack.c.l.bf16 %v178
      %v199 = vunpack.c.l.bf16 %v179
      %v200 = vunpack.c.l.bf16 %v180
      %v201 = vunpack.c.l.bf16 %v181
      %v202 = vunpack.c.l.bf16 %v182
      %v203 = vunpack.c.l.bf16 %v183
      %v204 = vunpack.c.l.bf16 %v184
      %v205 = vunpack.c.l.bf16 %v185
      %v206 = vunpack.c.l.bf16 %v186
      %v207 = vunpack.c.l.bf16 %v187
      %v208 = vunpack.c.l.bf16 %v188
      %v209 = vunpack.c.l.bf16 %v189
      %v210 = vunpack.c.l.bf16 %v190
      %v211 = vld [vmem:[%s2] sm:$0x1]
      %v213 = vlaneseq
      %v214 = vshrl.u32 %v213, 7
      %v215 = vsub.s32 0, %v214
      %v216 = vrot.slane %v211, %v215
      %v218 = vadd.f32 %v216, 0.0
      %v219 = vld [vmem:[%s1] sm:$0x1]
      %v220 = vlaneseq
      %v221 = vshrl.u32 %v220, 7
      %v222 = vsub.s32 0, %v221
      %v223 = vrot.slane %v219, %v222
      %v224 = vmul.f32 %v223, %v191
      %v225 = vmul.f32 %v223, %v193
      %v226 = vmul.f32 %v223, %v195
      %v227 = vmul.f32 %v223, %v197
      %v228 = vmul.f32 %v223, %v199
      %v229 = vmul.f32 %v223, %v201
      %v230 = vmul.f32 %v223, %v203
      %v231 = vmul.f32 %v223, %v205
      %v232 = vadd.f32 %v218, %v224
      %v233 = vadd.f32 %v218, %v225
      %v234 = vadd.f32 %v218, %v226
      %v235 = vadd.f32 %v218, %v227
      %v236 = vadd.f32 %v218, %v228
      %v237 = vadd.f32 %v218, %v229
      %v238 = vadd.f32 %v218, %v230
      %v239 = vadd.f32 %v218, %v231
      %v240 = vld [vmem:[%s1 + $0x1] sm:$0x1]
      %v241 = vlaneseq
      %v242 = vshrl.u32 %v241, 7
      %v243 = vsub.s32 0, %v242
      %v244 = vrot.slane %v240, %v243
      %v245 = vmul.f32 %v244, %v191
      %v246 = vmul.f32 %v244, %v192
      %v247 = vmul.f32 %v244, %v193
      %v248 = vmul.f32 %v244, %v194
      %v249 = vmul.f32 %v244, %v195
      %v250 = vmul.f32 %v244, %v196
      %v251 = vmul.f32 %v244, %v197
      %v252 = vmul.f32 %v244, %v198
      %v253 = vmul.f32 %v244, %v199
      %v254 = vmul.f32 %v244, %v200
      %v255 = vmul.f32 %v244, %v201
      %v256 = vmul.f32 %v244, %v202
      %v257 = vmul.f32 %v244, %v203
      %v258 = vmul.f32 %v244, %v204
      %v259 = vmul.f32 %v244, %v205
      %v260 = vmul.f32 %v244, %v206
      %vm277 = vcmask 1046528
      %v278 = vrot.slane %v245, 1
      %v279 = vrot.slane %v246, 1
      %v280 = vsel %vm277, %v278, %v279
      %v281 = vrot.slane %v247, 1
      %v282 = vrot.slane %v248, 1
      %v283 = vsel %vm277, %v281, %v282
      %v284 = vrot.slane %v249, 1
      %v285 = vrot.slane %v250, 1
      %v286 = vsel %vm277, %v284, %v285
      %v287 = vrot.slane %v251, 1
      %v288 = vrot.slane %v252, 1
      %v289 = vsel %vm277, %v287, %v288
      %v290 = vrot.slane %v253, 1
      %v291 = vrot.slane %v254, 1
      %v292 = vsel %vm277, %v290, %v291
      %v293 = vrot.slane %v255, 1
      %v294 = vrot.slane %v256, 1
      %v295 = vsel %vm277, %v293, %v294
      %v296 = vrot.slane %v257, 1
      %v297 = vrot.slane %v258, 1
      %v298 = vsel %vm277, %v296, %v297
      %v299 = vrot.slane %v259, 1
      %v300 = vrot.slane %v260, 1
      %v301 = vsel %vm277, %v299, %v300
      %v310 = vadd.f32 %v232, %v280
      %v311 = vadd.f32 %v233, %v283
      %v312 = vadd.f32 %v234, %v286
      %v313 = vadd.f32 %v235, %v289
      %v314 = vadd.f32 %v236, %v292
      %v315 = vadd.f32 %v237, %v295
      %v316 = vadd.f32 %v238, %v298
      %v317 = vadd.f32 %v239, %v301
      %v318 = vld [vmem:[%s1 + $0x2] sm:$0x1]
      %v319 = vlaneseq
      %v320 = vshrl.u32 %v319, 7
      %v321 = vsub.s32 0, %v320
      %v322 = vrot.slane %v318, %v321
      %v323 = vmul.f32 %v322, %v191
      %v324 = vmul.f32 %v322, %v192
      %v325 = vmul.f32 %v322, %v193
      %v326 = vmul.f32 %v322, %v194
      %v327 = vmul.f32 %v322, %v195
      %v328 = vmul.f32 %v322, %v196
      %v329 = vmul.f32 %v322, %v197
      %v330 = vmul.f32 %v322, %v198
      %v331 = vmul.f32 %v322, %v199
      %v332 = vmul.f32 %v322, %v200
      %v333 = vmul.f32 %v322, %v201
      %v334 = vmul.f32 %v322, %v202
      %v335 = vmul.f32 %v322, %v203
      %v336 = vmul.f32 %v322, %v204
      %v337 = vmul.f32 %v322, %v205
      %v338 = vmul.f32 %v322, %v206
      %vm355 = vcmask 1045504
      %v356 = vrot.slane %v323, 2
      %v357 = vrot.slane %v324, 2
      %v358 = vsel %vm355, %v356, %v357
      %v359 = vrot.slane %v325, 2
      %v360 = vrot.slane %v326, 2
      %v361 = vsel %vm355, %v359, %v360
      %v362 = vrot.slane %v327, 2
      %v363 = vrot.slane %v328, 2
      %v364 = vsel %vm355, %v362, %v363
      %v365 = vrot.slane %v329, 2
      %v366 = vrot.slane %v330, 2
      %v367 = vsel %vm355, %v365, %v366
      %v368 = vrot.slane %v331, 2
      %v369 = vrot.slane %v332, 2
      %v370 = vsel %vm355, %v368, %v369
      %v371 = vrot.slane %v333, 2
      %v372 = vrot.slane %v334, 2
      %v373 = vsel %vm355, %v371, %v372
      %v374 = vrot.slane %v335, 2
      %v375 = vrot.slane %v336, 2
      %v376 = vsel %vm355, %v374, %v375
      %v377 = vrot.slane %v337, 2
      %v378 = vrot.slane %v338, 2
      %v379 = vsel %vm355, %v377, %v378
      %v388 = vadd.f32 %v310, %v358
      %v389 = vadd.f32 %v311, %v361
      %v390 = vadd.f32 %v312, %v364
      %v391 = vadd.f32 %v313, %v367
      %v392 = vadd.f32 %v314, %v370
      %v393 = vadd.f32 %v315, %v373
      %v394 = vadd.f32 %v316, %v376
      %v395 = vadd.f32 %v317, %v379
      %s396 = scalar_lea.vmem %s1, 4
      %v397 = vld [vmem:[%s396] sm:$0x1]
      %v398 = vlaneseq
      %v399 = vshrl.u32 %v398, 7
      %v400 = vsub.s32 0, %v399
      %v401 = vrot.slane %v397, %v400
      %v402 = vmul.f32 %v401, %v193
      %v403 = vmul.f32 %v401, %v195
      %v404 = vmul.f32 %v401, %v197
      %v405 = vmul.f32 %v401, %v199
      %v406 = vmul.f32 %v401, %v201
      %v407 = vmul.f32 %v401, %v203
      %v408 = vmul.f32 %v401, %v205
      %v409 = vmul.f32 %v401, %v207
      %v410 = vadd.f32 %v388, %v402
      %v411 = vadd.f32 %v389, %v403
      %v412 = vadd.f32 %v390, %v404
      %v413 = vadd.f32 %v391, %v405
      %v414 = vadd.f32 %v392, %v406
      %v415 = vadd.f32 %v393, %v407
      %v416 = vadd.f32 %v394, %v408
      %v417 = vadd.f32 %v395, %v409
      %v418 = vld [vmem:[%s396 + $0x1] sm:$0x1]
      %v419 = vlaneseq
      %v420 = vshrl.u32 %v419, 7
      %v421 = vsub.s32 0, %v420
      %v422 = vrot.slane %v418, %v421
      %v423 = vmul.f32 %v422, %v193
      %v424 = vmul.f32 %v422, %v194
      %v425 = vmul.f32 %v422, %v195
      %v426 = vmul.f32 %v422, %v196
      %v427 = vmul.f32 %v422, %v197
      %v428 = vmul.f32 %v422, %v198
      %v429 = vmul.f32 %v422, %v199
      %v430 = vmul.f32 %v422, %v200
      %v431 = vmul.f32 %v422, %v201
      %v432 = vmul.f32 %v422, %v202
      %v433 = vmul.f32 %v422, %v203
      %v434 = vmul.f32 %v422, %v204
      %v435 = vmul.f32 %v422, %v205
      %v436 = vmul.f32 %v422, %v206
      %v437 = vmul.f32 %v422, %v207
      %v438 = vmul.f32 %v422, %v208
      %v455 = vrot.slane %v423, 1
      %v456 = vrot.slane %v424, 1
      %v457 = vsel %vm277, %v455, %v456
      %v458 = vrot.slane %v425, 1
      %v459 = vrot.slane %v426, 1
      %v460 = vsel %vm277, %v458, %v459
      %v461 = vrot.slane %v427, 1
      %v462 = vrot.slane %v428, 1
      %v463 = vsel %vm277, %v461, %v462
      %v464 = vrot.slane %v429, 1
      %v465 = vrot.slane %v430, 1
      %v466 = vsel %vm277, %v464, %v465
      %v467 = vrot.slane %v431, 1
      %v468 = vrot.slane %v432, 1
      %v469 = vsel %vm277, %v467, %v468
      %v470 = vrot.slane %v433, 1
      %v471 = vrot.slane %v434, 1
      %v472 = vsel %vm277, %v470, %v471
      %v473 = vrot.slane %v435, 1
      %v474 = vrot.slane %v436, 1
      %v475 = vsel %vm277, %v473, %v474
      %v476 = vrot.slane %v437, 1
      %v477 = vrot.slane %v438, 1
      %v478 = vsel %vm277, %v476, %v477
      %v487 = vadd.f32 %v410, %v457
      %v488 = vadd.f32 %v411, %v460
      %v489 = vadd.f32 %v412, %v463
      %v490 = vadd.f32 %v413, %v466
      %v491 = vadd.f32 %v414, %v469
      %v492 = vadd.f32 %v415, %v472
      %v493 = vadd.f32 %v416, %v475
      %v494 = vadd.f32 %v417, %v478
      %v495 = vld [vmem:[%s396 + $0x2] sm:$0x1]
      %v496 = vlaneseq
      %v497 = vshrl.u32 %v496, 7
      %v498 = vsub.s32 0, %v497
      %v499 = vrot.slane %v495, %v498
      %v500 = vmul.f32 %v499, %v193
      %v501 = vmul.f32 %v499, %v194
      %v502 = vmul.f32 %v499, %v195
      %v503 = vmul.f32 %v499, %v196
      %v504 = vmul.f32 %v499, %v197
      %v505 = vmul.f32 %v499, %v198
      %v506 = vmul.f32 %v499, %v199
      %v507 = vmul.f32 %v499, %v200
      %v508 = vmul.f32 %v499, %v201
      %v509 = vmul.f32 %v499, %v202
      %v510 = vmul.f32 %v499, %v203
      %v511 = vmul.f32 %v499, %v204
      %v512 = vmul.f32 %v499, %v205
      %v513 = vmul.f32 %v499, %v206
      %v514 = vmul.f32 %v499, %v207
      %v515 = vmul.f32 %v499, %v208
      %v532 = vrot.slane %v500, 2
      %v533 = vrot.slane %v501, 2
      %v534 = vsel %vm355, %v532, %v533
      %v535 = vrot.slane %v502, 2
      %v536 = vrot.slane %v503, 2
      %v537 = vsel %vm355, %v535, %v536
      %v538 = vrot.slane %v504, 2
      %v539 = vrot.slane %v505, 2
      %v540 = vsel %vm355, %v538, %v539
      %v541 = vrot.slane %v506, 2
      %v542 = vrot.slane %v507, 2
      %v543 = vsel %vm355, %v541, %v542
      %v544 = vrot.slane %v508, 2
      %v545 = vrot.slane %v509, 2
      %v546 = vsel %vm355, %v544, %v545
      %v547 = vrot.slane %v510, 2
      %v548 = vrot.slane %v511, 2
      %v549 = vsel %vm355, %v547, %v548
      %v550 = vrot.slane %v512, 2
      %v551 = vrot.slane %v513, 2
      %v552 = vsel %vm355, %v550, %v551
      %v553 = vrot.slane %v514, 2
      %v554 = vrot.slane %v515, 2
      %v555 = vsel %vm355, %v553, %v554
      %v564 = vadd.f32 %v487, %v534
      %v565 = vadd.f32 %v488, %v537
      %v566 = vadd.f32 %v489, %v540
      %v567 = vadd.f32 %v490, %v543
      %v568 = vadd.f32 %v491, %v546
      %v569 = vadd.f32 %v492, %v549
      %v570 = vadd.f32 %v493, %v552
      %v571 = vadd.f32 %v494, %v555
      %s572 = scalar_lea.vmem %s1, 8
      %v573 = vld [vmem:[%s572] sm:$0x1]
      %v574 = vlaneseq
      %v575 = vshrl.u32 %v574, 7
      %v576 = vsub.s32 0, %v575
      %v577 = vrot.slane %v573, %v576
      %v578 = vmul.f32 %v577, %v195
      %v579 = vmul.f32 %v577, %v197
      %v580 = vmul.f32 %v577, %v199
      %v581 = vmul.f32 %v577, %v201
      %v582 = vmul.f32 %v577, %v203
      %v583 = vmul.f32 %v577, %v205
      %v584 = vmul.f32 %v577, %v207
      %v585 = vmul.f32 %v577, %v209
      %v586 = vadd.f32 %v564, %v578
      %v587 = vadd.f32 %v565, %v579
      %v588 = vadd.f32 %v566, %v580
      %v589 = vadd.f32 %v567, %v581
      %v590 = vadd.f32 %v568, %v582
      %v591 = vadd.f32 %v569, %v583
      %v592 = vadd.f32 %v570, %v584
      %v593 = vadd.f32 %v571, %v585
      %v594 = vld [vmem:[%s572 + $0x1] sm:$0x1]
      %v595 = vlaneseq
      %v596 = vshrl.u32 %v595, 7
      %v597 = vsub.s32 0, %v596
      %v598 = vrot.slane %v594, %v597
      %v599 = vmul.f32 %v598, %v195
      %v600 = vmul.f32 %v598, %v196
      %v601 = vmul.f32 %v598, %v197
      %v602 = vmul.f32 %v598, %v198
      %v603 = vmul.f32 %v598, %v199
      %v604 = vmul.f32 %v598, %v200
      %v605 = vmul.f32 %v598, %v201
      %v606 = vmul.f32 %v598, %v202
      %v607 = vmul.f32 %v598, %v203
      %v608 = vmul.f32 %v598, %v204
      %v609 = vmul.f32 %v598, %v205
      %v610 = vmul.f32 %v598, %v206
      %v611 = vmul.f32 %v598, %v207
      %v612 = vmul.f32 %v598, %v208
      %v613 = vmul.f32 %v598, %v209
      %v614 = vmul.f32 %v598, %v210
      %v631 = vrot.slane %v599, 1
      %v632 = vrot.slane %v600, 1
      %v633 = vsel %vm277, %v631, %v632
      %v634 = vrot.slane %v601, 1
      %v635 = vrot.slane %v602, 1
      %v636 = vsel %vm277, %v634, %v635
      %v637 = vrot.slane %v603, 1
      %v638 = vrot.slane %v604, 1
      %v639 = vsel %vm277, %v637, %v638
      %v640 = vrot.slane %v605, 1
      %v641 = vrot.slane %v606, 1
      %v642 = vsel %vm277, %v640, %v641
      %v643 = vrot.slane %v607, 1
      %v644 = vrot.slane %v608, 1
      %v645 = vsel %vm277, %v643, %v644
      %v646 = vrot.slane %v609, 1
      %v647 = vrot.slane %v610, 1
      %v648 = vsel %vm277, %v646, %v647
      %v649 = vrot.slane %v611, 1
      %v650 = vrot.slane %v612, 1
      %v651 = vsel %vm277, %v649, %v650
      %v652 = vrot.slane %v613, 1
      %v653 = vrot.slane %v614, 1
      %v654 = vsel %vm277, %v652, %v653
      %v663 = vadd.f32 %v586, %v633
      %v664 = vadd.f32 %v587, %v636
      %v665 = vadd.f32 %v588, %v639
      %v666 = vadd.f32 %v589, %v642
      %v667 = vadd.f32 %v590, %v645
      %v668 = vadd.f32 %v591, %v648
      %v669 = vadd.f32 %v592, %v651
      %v670 = vadd.f32 %v593, %v654
      %v671 = vld [vmem:[%s572 + $0x2] sm:$0x1]
      %v672 = vlaneseq
      %v673 = vshrl.u32 %v672, 7
      %v674 = vsub.s32 0, %v673
      %v675 = vrot.slane %v671, %v674
      %v676 = vmul.f32 %v675, %v195
      %v677 = vmul.f32 %v675, %v196
      %v678 = vmul.f32 %v675, %v197
      %v679 = vmul.f32 %v675, %v198
      %v680 = vmul.f32 %v675, %v199
      %v681 = vmul.f32 %v675, %v200
      %v682 = vmul.f32 %v675, %v201
      %v683 = vmul.f32 %v675, %v202
      %v684 = vmul.f32 %v675, %v203
      %v685 = vmul.f32 %v675, %v204
      %v686 = vmul.f32 %v675, %v205
      %v687 = vmul.f32 %v675, %v206
      %v688 = vmul.f32 %v675, %v207
      %v689 = vmul.f32 %v675, %v208
      %v690 = vmul.f32 %v675, %v209
      %v691 = vmul.f32 %v675, %v210
      %v708 = vrot.slane %v676, 2
      %v709 = vrot.slane %v677, 2
      %v710 = vsel %vm355, %v708, %v709
      %v711 = vrot.slane %v678, 2
      %v712 = vrot.slane %v679, 2
      %v713 = vsel %vm355, %v711, %v712
      %v714 = vrot.slane %v680, 2
      %v715 = vrot.slane %v681, 2
      %v716 = vsel %vm355, %v714, %v715
      %v717 = vrot.slane %v682, 2
      %v718 = vrot.slane %v683, 2
      %v719 = vsel %vm355, %v717, %v718
      %v720 = vrot.slane %v684, 2
      %v721 = vrot.slane %v685, 2
      %v722 = vsel %vm355, %v720, %v721
      %v723 = vrot.slane %v686, 2
      %v724 = vrot.slane %v687, 2
      %v725 = vsel %vm355, %v723, %v724
      %v726 = vrot.slane %v688, 2
      %v727 = vrot.slane %v689, 2
      %v728 = vsel %vm355, %v726, %v727
      %v729 = vrot.slane %v690, 2
      %v730 = vrot.slane %v691, 2
      %v731 = vsel %vm355, %v729, %v730
      %v740 = vadd.f32 %v663, %v710
      %v741 = vadd.f32 %v664, %v713
      %v742 = vadd.f32 %v665, %v716
      %v743 = vadd.f32 %v666, %v719
      %v744 = vadd.f32 %v667, %v722
      %v745 = vadd.f32 %v668, %v725
      %v746 = vadd.f32 %v669, %v728
      %v747 = vadd.f32 %v670, %v731
      %v748 = vmul.f32 %v740, 0.5
      %v749 = vmul.f32 %v741, 0.5
      %v750 = vmul.f32 %v742, 0.5
      %v751 = vmul.f32 %v743, 0.5
      %v752 = vmul.f32 %v744, 0.5
      %v753 = vmul.f32 %v745, 0.5
      %v754 = vmul.f32 %v746, 0.5
      %v755 = vmul.f32 %v747, 0.5
      %v756 = vmul.f32 %v740, 0.70710677
      %v757 = vmul.f32 %v741, 0.70710677
      %v758 = vmul.f32 %v742, 0.70710677
      %v759 = vmul.f32 %v743, 0.70710677
      %v760 = vmul.f32 %v744, 0.70710677
      %v761 = vmul.f32 %v745, 0.70710677
      %v762 = vmul.f32 %v746, 0.70710677
      %v763 = vmul.f32 %v747, 0.70710677
      %vm764 = vcmp.ge.f32.partialorder %v756, 0.0
      %vm765 = vcmp.ge.f32.partialorder %v757, 0.0
      %vm766 = vcmp.ge.f32.partialorder %v758, 0.0
      %vm767 = vcmp.ge.f32.partialorder %v759, 0.0
      %vm768 = vcmp.ge.f32.partialorder %v760, 0.0
      %vm769 = vcmp.ge.f32.partialorder %v761, 0.0
      %vm770 = vcmp.ge.f32.partialorder %v762, 0.0
      %vm771 = vcmp.ge.f32.partialorder %v763, 0.0
      %v772 = vsel %vm764, 1.0, -1.0
      %v773 = vsel %vm765, 1.0, -1.0
      %v774 = vsel %vm766, 1.0, -1.0
      %v775 = vsel %vm767, 1.0, -1.0
      %v776 = vsel %vm768, 1.0, -1.0
      %v777 = vsel %vm769, 1.0, -1.0
      %v778 = vsel %vm770, 1.0, -1.0
      %v779 = vsel %vm771, 1.0, -1.0
      %v780 = vand.u32 2147483647, %v756
      %v781 = vand.u32 2147483647, %v757
      %v782 = vand.u32 2147483647, %v758
      %v783 = vand.u32 2147483647, %v759
      %v784 = vand.u32 2147483647, %v760
      %v785 = vand.u32 2147483647, %v761
      %v786 = vand.u32 2147483647, %v762
      %v787 = vand.u32 2147483647, %v763
      %v788 = vmul.f32 %v780, 0.3275911
      %v789 = vmul.f32 %v781, 0.3275911
      %v790 = vmul.f32 %v782, 0.3275911
      %v791 = vmul.f32 %v783, 0.3275911
      %v792 = vmul.f32 %v784, 0.3275911
      %v793 = vmul.f32 %v785, 0.3275911
      %v794 = vmul.f32 %v786, 0.3275911
      %v795 = vmul.f32 %v787, 0.3275911
      %v796 = vadd.f32 %v788, 1.0
      %v797 = vadd.f32 %v789, 1.0
      %v798 = vadd.f32 %v790, 1.0
      %v799 = vadd.f32 %v791, 1.0
      %v800 = vadd.f32 %v792, 1.0
      %v801 = vadd.f32 %v793, 1.0
      %v802 = vadd.f32 %v794, 1.0
      %v803 = vadd.f32 %v795, 1.0
      %v804 = vrcp.pop %v796
      %v805 = vmul.f32 1.0, %v804
      %v806 = vrcp.pop %v797
      %v807 = vmul.f32 1.0, %v806
      %v808 = vrcp.pop %v798
      %v809 = vmul.f32 1.0, %v808
      %v810 = vrcp.pop %v799
      %v811 = vmul.f32 1.0, %v810
      %v812 = vrcp.pop %v800
      %v813 = vmul.f32 1.0, %v812
      %v814 = vrcp.pop %v801
      %v815 = vmul.f32 1.0, %v814
      %v816 = vrcp.pop %v802
      %v817 = vmul.f32 1.0, %v816
      %v818 = vrcp.pop %v803
      %v819 = vmul.f32 1.0, %v818
      %v820 = vmul.f32 %v805, 1.0614054
      %v821 = vmul.f32 %v807, 1.0614054
      %v822 = vmul.f32 %v809, 1.0614054
      %v823 = vmul.f32 %v811, 1.0614054
      %v824 = vmul.f32 %v813, 1.0614054
      %v825 = vmul.f32 %v815, 1.0614054
      %v826 = vmul.f32 %v817, 1.0614054
      %v827 = vmul.f32 %v819, 1.0614054
      %v828 = vadd.f32 %v820, -1.4531521
      %v829 = vadd.f32 %v821, -1.4531521
      %v830 = vadd.f32 %v822, -1.4531521
      %v831 = vadd.f32 %v823, -1.4531521
      %v832 = vadd.f32 %v824, -1.4531521
      %v833 = vadd.f32 %v825, -1.4531521
      %v834 = vadd.f32 %v826, -1.4531521
      %v835 = vadd.f32 %v827, -1.4531521
      %v836 = vmul.f32 %v805, %v828
      %v837 = vmul.f32 %v807, %v829
      %v838 = vmul.f32 %v809, %v830
      %v839 = vmul.f32 %v811, %v831
      %v840 = vmul.f32 %v813, %v832
      %v841 = vmul.f32 %v815, %v833
      %v842 = vmul.f32 %v817, %v834
      %v843 = vmul.f32 %v819, %v835
      %v844 = vadd.f32 %v836, 1.4214138
      %v845 = vadd.f32 %v837, 1.4214138
      %v846 = vadd.f32 %v838, 1.4214138
      %v847 = vadd.f32 %v839, 1.4214138
      %v848 = vadd.f32 %v840, 1.4214138
      %v849 = vadd.f32 %v841, 1.4214138
      %v850 = vadd.f32 %v842, 1.4214138
      %v851 = vadd.f32 %v843, 1.4214138
      %v852 = vmul.f32 %v805, %v844
      %v853 = vmul.f32 %v807, %v845
      %v854 = vmul.f32 %v809, %v846
      %v855 = vmul.f32 %v811, %v847
      %v856 = vmul.f32 %v813, %v848
      %v857 = vmul.f32 %v815, %v849
      %v858 = vmul.f32 %v817, %v850
      %v859 = vmul.f32 %v819, %v851
      %v860 = vadd.f32 %v852, -0.28449672
      %v861 = vadd.f32 %v853, -0.28449672
      %v862 = vadd.f32 %v854, -0.28449672
      %v863 = vadd.f32 %v855, -0.28449672
      %v864 = vadd.f32 %v856, -0.28449672
      %v865 = vadd.f32 %v857, -0.28449672
      %v866 = vadd.f32 %v858, -0.28449672
      %v867 = vadd.f32 %v859, -0.28449672
      %v868 = vmul.f32 %v805, %v860
      %v869 = vmul.f32 %v807, %v861
      %v870 = vmul.f32 %v809, %v862
      %v871 = vmul.f32 %v811, %v863
      %v872 = vmul.f32 %v813, %v864
      %v873 = vmul.f32 %v815, %v865
      %v874 = vmul.f32 %v817, %v866
      %v875 = vmul.f32 %v819, %v867
      %v876 = vadd.f32 %v868, 0.2548296
      %v877 = vadd.f32 %v869, 0.2548296
      %v878 = vadd.f32 %v870, 0.2548296
      %v879 = vadd.f32 %v871, 0.2548296
      %v880 = vadd.f32 %v872, 0.2548296
      %v881 = vadd.f32 %v873, 0.2548296
      %v882 = vadd.f32 %v874, 0.2548296
      %v883 = vadd.f32 %v875, 0.2548296
      %v884 = vmul.f32 %v805, %v876
      %v885 = vmul.f32 %v807, %v877
      %v886 = vmul.f32 %v809, %v878
      %v887 = vmul.f32 %v811, %v879
      %v888 = vmul.f32 %v813, %v880
      %v889 = vmul.f32 %v815, %v881
      %v890 = vmul.f32 %v817, %v882
      %v891 = vmul.f32 %v819, %v883
      %v892 = vsub.f32 0.0, %v780
      %v893 = vsub.f32 0.0, %v781
      %v894 = vsub.f32 0.0, %v782
      %v895 = vsub.f32 0.0, %v783
      %v896 = vsub.f32 0.0, %v784
      %v897 = vsub.f32 0.0, %v785
      %v898 = vsub.f32 0.0, %v786
      %v899 = vsub.f32 0.0, %v787
      %v900 = vmul.f32 %v892, %v780
      %v901 = vmul.f32 %v893, %v781
      %v902 = vmul.f32 %v894, %v782
      %v903 = vmul.f32 %v895, %v783
      %v904 = vmul.f32 %v896, %v784
      %v905 = vmul.f32 %v897, %v785
      %v906 = vmul.f32 %v898, %v786
      %v907 = vmul.f32 %v899, %v787
      %v908 = vmul.f32 %v900, 1.442695
      %v909 = vpow.pop %v908
      %v910 = vmul.f32 %v901, 1.442695
      %v911 = vpow.pop %v910
      %v912 = vmul.f32 %v902, 1.442695
      %v913 = vpow.pop %v912
      %v914 = vmul.f32 %v903, 1.442695
      %v915 = vpow.pop %v914
      %v916 = vmul.f32 %v904, 1.442695
      %v917 = vpow.pop %v916
      %v918 = vmul.f32 %v905, 1.442695
      %v919 = vpow.pop %v918
      %v920 = vmul.f32 %v906, 1.442695
      %v921 = vpow.pop %v920
      %v922 = vmul.f32 %v907, 1.442695
      %v923 = vpow.pop %v922
      %v924 = vmul.f32 %v884, %v909
      %v925 = vmul.f32 %v885, %v911
      %v926 = vmul.f32 %v886, %v913
      %v927 = vmul.f32 %v887, %v915
      %v928 = vmul.f32 %v888, %v917
      %v929 = vmul.f32 %v889, %v919
      %v930 = vmul.f32 %v890, %v921
      %v931 = vmul.f32 %v891, %v923
      %v932 = vsub.f32 1.0, %v924
      %v933 = vsub.f32 1.0, %v925
      %v934 = vsub.f32 1.0, %v926
      %v935 = vsub.f32 1.0, %v927
      %v936 = vsub.f32 1.0, %v928
      %v937 = vsub.f32 1.0, %v929
      %v938 = vsub.f32 1.0, %v930
      %v939 = vsub.f32 1.0, %v931
      %v940 = vmul.f32 %v772, %v932
      %v941 = vmul.f32 %v773, %v933
      %v942 = vmul.f32 %v774, %v934
      %v943 = vmul.f32 %v775, %v935
      %v944 = vmul.f32 %v776, %v936
      %v945 = vmul.f32 %v777, %v937
      %v946 = vmul.f32 %v778, %v938
      %v947 = vmul.f32 %v779, %v939
      %v948 = vadd.f32 %v940, 1.0
      %v949 = vadd.f32 %v941, 1.0
      %v950 = vadd.f32 %v942, 1.0
      %v951 = vadd.f32 %v943, 1.0
      %v952 = vadd.f32 %v944, 1.0
      %v953 = vadd.f32 %v945, 1.0
      %v954 = vadd.f32 %v946, 1.0
      %v955 = vadd.f32 %v947, 1.0
      %v956 = vmul.f32 %v748, %v948
      %v957 = vmul.f32 %v749, %v949
      %v958 = vmul.f32 %v750, %v950
      %v959 = vmul.f32 %v751, %v951
      %v960 = vmul.f32 %v752, %v952
      %v961 = vmul.f32 %v753, %v953
      %v962 = vmul.f32 %v754, %v954
      %v963 = vmul.f32 %v755, %v955
      %v964 = vpack.c.bf16 %v956, %v956
      %v965 = vpack.c.bf16 %v957, %v957
      %v966 = vpack.c.bf16 %v958, %v958
      %v967 = vpack.c.bf16 %v959, %v959
      %v968 = vpack.c.bf16 %v960, %v960
      %v969 = vpack.c.bf16 %v961, %v961
      %v970 = vpack.c.bf16 %v962, %v962
      %v971 = vpack.c.bf16 %v963, %v963
      %972 = vst [vmem:[%s170] sm:$0xf] %v964
      %973 = vst [vmem:[%s170 + $0x4] sm:$0xf] %v965
      %974 = vst [vmem:[%s170 + $0x8] sm:$0xf] %v966
      %975 = vst [vmem:[%s170 + $0xc] sm:$0xf] %v967
      %976 = vst [vmem:[%s170 + $0x10] sm:$0xf] %v968
      %977 = vst [vmem:[%s170 + $0x14] sm:$0xf] %v969
      %978 = vst [vmem:[%s170 + $0x18] sm:$0xf] %v970
      %979 = vst [vmem:[%s170 + $0x1c] sm:$0xf] %v971
      %p980 = scmp.lt.s32.totalorder %s14, 1
      %s981 = scalar_select %p980, %s14, 1
      %s982 = smul.addr %s981, 8
      %s983 = smul.addr %s982, 4
      %s984 = scalar_lea.vmem %s3, %s983
      // Predicated region
      $region33: #{block_forward.10} parent=31 // pred_check
        %p985 = pneg %p100
      $region34: #{block_forward.10} parent=31 // pred_check_branch
        %987 = sbr.rel (%p985) target = $region36
      $region35: #{block_forward.10} parent=31 // pred_region
        _
      $region36: #{block_forward.10} parent=31 // pred_fallthru
        _
    $region32: #{block_forward.10} parent=5 // pred_fallthru
      _
    %p988 = scmp.le.s32.totalorder 2, %s9
    // Predicated region
    $region37: #{block_forward.10} parent=5 // pred_check
      %p989 = pneg %p988
    $region38: #{block_forward.10} parent=5 // pred_check_branch
      %991 = sbr.rel (%p989) target = $region40
    $region39: #{block_forward.10} parent=5 // pred_region
      %s992 = ssub.s32 %s9, 2
      // Predicated region
      $region41: #{block_forward.10} parent=39 // pred_check
        %p993 = pneg %p106
      $region42: #{block_forward.10} parent=39 // pred_check_branch
        %995 = sbr.rel (%p993) target = $region44
      $region43: #{block_forward.10} parent=39 // pred_region
        %p996 = scmp.lt.s32.totalorder %s15, 1
        %s997 = scalar_select %p996, %s15, 1
        %s998 = smul.addr %s997, 8
        %s999 = smul.addr %s998, 4
        %s1000 = scalar_lea.vmem %s3, %s999
      $region44: #{block_forward.10} parent=39 // pred_fallthru
        _
    $region40: #{block_forward.10} parent=5 // pred_fallthru
      _
  $region6: #{block_forward.10} parent=0 // loop_footer
    %s13 = sadd.s32 1, %s9
  $region7: #{block_forward.10} parent=0 // loop_footer_branch
    %8 = sbr.rel target = $region3
  $region8: #{block_forward.10} parent=0 // loop_exit
    _

</llo_original>
